<compile_context>
chip_gen: v6e
topology: v6e:2x2x1
jax: 0.10.0
libtpu: 0.0.40
codegen_flags: <defaults>
</compile_context>

<pallas_src>
import functools

import jax
import jax.numpy as jnp
from jax.experimental import pallas as pl
from jax.experimental.pallas import tpu as pltpu


# ---------------------------------------------------------------------------
# Fused kernel: all encoder blocks, one batch tile per grid step.
# ---------------------------------------------------------------------------
def encoder_kernel(h_ref, gamma_ref, beta_ref, lnw_ref, lnb_ref,
                   wq_ref, bq_ref, wk_ref, bk_ref, wv_ref, bv_ref,
                   wp_ref, bp_ref, out_ref, *, num_heads, compute_dtype):
    d = pl.program_id(1)            # depth (trailing, "arbitrary") grid axis

    @pl.when(d == 0)
    def _init():
        # First block of this batch tile: load the activations from HBM once.
        out_ref[...] = h_ref[...]

    Bt, N, E = out_ref.shape
    D = E // num_heads

    h3 = out_ref[...]               # resident activations (Bt, N, E), f32
    h2d = h3.reshape(Bt * N, E)
    gamma = gamma_ref[0]            # (Bt, 1, E) — precomputed in XLA
    beta = beta_ref[0]              # (Bt, 1, E)
    lnw = lnw_ref[...]              # (1, 1, E)
    lnb = lnb_ref[...]              # (1, 1, E)

    def sln(x3):                    # LayerNorm + self-modulation, all f32
        mu = jnp.mean(x3, axis=-1, keepdims=True)
        var = jnp.mean(jnp.square(x3 - mu), axis=-1, keepdims=True)
        xn = (x3 - mu) * jax.lax.rsqrt(var + 1e-5)
        return gamma * (xn * lnw + lnb) + beta

    # ---- first half: SLN -> MSA -> residual --------------------------------
    x2d = sln(h3).reshape(Bt * N, E).astype(compute_dtype)    # M = Bt*N rows

    # Weights are (in, out) with weight_gain (and 1/sqrt(E) for q) pre-folded.
    q = jnp.dot(x2d, wq_ref[0], preferred_element_type=jnp.float32) + bq_ref[0]
    k = jnp.dot(x2d, wk_ref[0], preferred_element_type=jnp.float32) + bk_ref[0]
    v = jnp.dot(x2d, wv_ref[0], preferred_element_type=jnp.float32) + bv_ref[0]
    qc = q.reshape(Bt, N, E).astype(compute_dtype)
    kc = k.reshape(Bt, N, E).astype(compute_dtype)
    vc = v.reshape(Bt, N, E).astype(compute_dtype)

    # Heads: static loop, batched over Bt; fold each head's output directly
    # into its slice of the output projection (no lane-axis concatenate).
    msa = jnp.zeros((Bt * N, E), jnp.float32)
    for hi in range(num_heads):
        sl = slice(hi * D, (hi + 1) * D)
        energy = jnp.einsum("bqd,bkd->bqk", qc[:, :, sl], kc[:, :, sl],
                            preferred_element_type=jnp.float32)
        att = jax.nn.softmax(energy, axis=-1).astype(compute_dtype)
        oh = jnp.einsum("bqk,bkd->bqd", att, vc[:, :, sl],
                        preferred_element_type=jnp.float32)
        msa = msa + jnp.dot(oh.reshape(Bt * N, D).astype(compute_dtype),
                            wp_ref[0, sl, :],
                            preferred_element_type=jnp.float32)
    msa = msa + bp_ref[0]

    h1 = (msa + h2d).reshape(Bt, N, E)       # dropout(p=0) is identity

    # ---- second half: SLN -> (feed_forward discarded in reference) -> res --
    # TODO(synk): the reference calls self.feed_forward(hidden) and discards
    # the result, so the FFN never contributes; the dead compute is skipped.
    out_ref[...] = sln(h1) + h1


# ---------------------------------------------------------------------------
# Parameter prep: stack per-block params on a depth axis, pre-transpose and
# fold the static gains (done ONCE, outside the forward path).
# ---------------------------------------------------------------------------
def prepare_stacked_params(blocks_params, E, compute_dtype=jnp.float32):
    gain = 1.0 / (E ** 0.5)        # FullyConnectedLayer weight_gain (lr_mult=1)
    att_scale = 1.0 / (E ** 0.5)   # attention energy / sqrt(emb_size)

    def stack(name):
        return jnp.stack([p[name] for p in blocks_params], axis=0)

    return {
        # q/k/v/proj: (depth, E_in, E_out), gains folded, no in-kernel .T
        "wq_t": (jnp.transpose(stack("wq"), (0, 2, 1)) * (gain * att_scale)
                 ).astype(compute_dtype),
        "wk_t": (jnp.transpose(stack("wk"), (0, 2, 1)) * gain).astype(compute_dtype),
        "wv_t": (jnp.transpose(stack("wv"), (0, 2, 1)) * gain).astype(compute_dtype),
        "wp_t": (jnp.transpose(stack("wp"), (0, 2, 1)) * gain).astype(compute_dtype),
        "bq": (stack("bq") * att_scale).astype(jnp.float32),   # (depth, 1, E)
        "bk": stack("bk").astype(jnp.float32),
        "bv": stack("bv").astype(jnp.float32),
        "bp": stack("bp").astype(jnp.float32),
        "ln_w": stack("ln_w").astype(jnp.float32),              # (depth, 1, E)
        "ln_b": stack("ln_b").astype(jnp.float32),
        # SLN gamma/beta weights with gain folded (used in XLA, not in-kernel)
        "wg_s": (stack("wg") * gain).astype(jnp.float32),       # (depth, E, E)
        "wb_s": (stack("wb") * gain).astype(jnp.float32),
    }


def _pick_block_batch(B, N, target_rows=256, max_rows=1024):
    """Largest divisor Bt of B with Bt*N <= max_rows (aiming for ~256 MXU rows)."""
    best = 1
    for bt in range(1, B + 1):
        if B % bt != 0:
            continue
        if bt * N > max_rows and best > 1:
            break
        best = bt
        if bt * N >= target_rows:
            break
    return best


# ---------------------------------------------------------------------------
# Wrapper: one fused pallas_call for the whole encoder.
# ---------------------------------------------------------------------------
def generator_transformer_encoder_pallas(hidden, w, stacked, num_heads,
                                         *, block_batch=None):
    hidden = hidden.astype(jnp.float32)
    w = w.astype(jnp.float32)
    B, N, E = hidden.shape
    depth = stacked["wq_t"].shape[0]
    compute_dtype = stacked["wq_t"].dtype
    Bt = block_batch if block_batch is not None else _pick_block_batch(B, N)
    assert B % Bt == 0, "block_batch must divide the batch size"
    # NOTE: block last-two dims (N, E) are full-extent here; if they stop being
    # full-extent they must be multiples of (8, 128).

    # gamma/beta hoisted out of the kernel: one batched matmul per block.
    gamma = jnp.einsum("be,doe->dbo", w, stacked["wg_s"]).reshape(depth, B, 1, E)
    beta = jnp.einsum("be,doe->dbo", w, stacked["wb_s"]).reshape(depth, B, 1, E)

    grid = (B // Bt, depth)                        # depth trailing => resident acc

    act = pl.BlockSpec((Bt, N, E), lambda b, d: (b, 0, 0))
    gb = pl.BlockSpec((1, Bt, 1, E), lambda b, d: (d, b, 0, 0))
    vec = pl.BlockSpec((1, 1, E), lambda b, d: (d, 0, 0))
    mat = pl.BlockSpec((1, E, E), lambda b, d: (d, 0, 0))

    # Rough VMEM budget; raise the scoped limit only when needed (keep headroom
    # below v7x's 64 MiB physical VMEM).
    itemsize = jnp.dtype(compute_dtype).itemsize
    est_bytes = (2 * 4 * E * E * itemsize          # q/k/v/proj weights, 2-buffered
                 + 2 * 2 * (2 * Bt * E) * 4        # gamma/beta blocks
                 + 4 * Bt * N * E * 4              # hidden in + out blocks
                 + 16 * Bt * N * E * 4)            # temporaries headroom
    cparams = {"dimension_semantics": ("parallel", "arbitrary")}
    if est_bytes > 16 * 1024 * 1024:
        cparams["vmem_limit_bytes"] = int(min(est_bytes, 56 * 1024 * 1024))

    kernel = functools.partial(encoder_kernel, num_heads=num_heads,
                               compute_dtype=compute_dtype)
    return pl.pallas_call(
        kernel,
        out_shape=jax.ShapeDtypeStruct((B, N, E), jnp.float32),
        grid=grid,
        in_specs=[act, gb, gb, vec, vec, mat, vec, mat, vec, mat, vec, mat, vec],
        out_specs=act,
        compiler_params=pltpu.CompilerParams(**cparams),
    )(hidden, gamma, beta,
      stacked["ln_w"], stacked["ln_b"],
      stacked["wq_t"], stacked["bq"],
      stacked["wk_t"], stacked["bk"],
      stacked["wv_t"], stacked["bv"],
      stacked["wp_t"], stacked["bp"])


# ---------------------------------------------------------------------------
# Deterministic parameter init (mirrors the PyTorch module __init__ shapes).
# ---------------------------------------------------------------------------
def init_block_params(key, E, expansion=4):
    ks = jax.random.split(key, 8)
    f32 = jnp.float32
    return {
        # SLN: LayerNorm(E) + two bias-free FullyConnectedLayers (E -> E)
        "ln_w": jnp.ones((1, E), f32),
        "ln_b": jnp.zeros((1, E), f32),
        "wg": jax.random.normal(ks[0], (E, E), f32),
        "wb": jax.random.normal(ks[1], (E, E), f32),
        # MultiHeadAttention: q/k/v/projection (bias=True, bias_init=0)
        "wq": jax.random.normal(ks[2], (E, E), f32),
        "bq": jnp.zeros((1, E), f32),
        "wk": jax.random.normal(ks[3], (E, E), f32),
        "bk": jnp.zeros((1, E), f32),
        "wv": jax.random.normal(ks[4], (E, E), f32),
        "bv": jnp.zeros((1, E), f32),
        "wp": jax.random.normal(ks[5], (E, E), f32),
        "bp": jnp.zeros((1, E), f32),
        # FeedForwardBlock weights (exist in __init__, output discarded in forward)
        "w1": jax.random.normal(ks[6], (expansion * E, E), f32),
        "w2": jax.random.normal(ks[7], (E, expansion * E), f32),
    }


# ---------------------------------------------------------------------------
# Pure-JAX reference (mirrors the PyTorch forward exactly) for verification.
# ---------------------------------------------------------------------------
def encoder_block_ref(hidden, w, p, num_heads):
    B, N, E = hidden.shape
    gain = 1.0 / (E ** 0.5)
    D = E // num_heads

    gamma = (w @ p["wg"].T * gain)[:, None, :]
    beta = (w @ p["wb"].T * gain)[:, None, :]

    def ln(x):
        mu = x.mean(-1, keepdims=True)
        var = ((x - mu) ** 2).mean(-1, keepdims=True)
        return (x - mu) / jnp.sqrt(var + 1e-5) * p["ln_w"][0] + p["ln_b"][0]

    x = gamma * ln(hidden) + beta
    q = x @ p["wq"].T * gain + p["bq"][0]
    k = x @ p["wk"].T * gain + p["bk"][0]
    v = x @ p["wv"].T * gain + p["bv"][0]
    qh = q.reshape(B, N, num_heads, D).transpose(0, 2, 1, 3)
    kh = k.reshape(B, N, num_heads, D).transpose(0, 2, 1, 3)
    vh = v.reshape(B, N, num_heads, D).transpose(0, 2, 1, 3)
    energy = jnp.einsum("bhqd,bhkd->bhqk", qh, kh) / (E ** 0.5)
    att = jax.nn.softmax(energy, axis=-1)
    out = jnp.einsum("bhqk,bhkd->bhqd", att, vh)
    out = out.transpose(0, 2, 1, 3).reshape(B, N, E)
    msa = out @ p["wp"].T * gain + p["bp"][0]
    h1 = msa + hidden
    x2 = gamma * ln(h1) + beta
    # feed_forward result discarded in the reference code
    return x2 + h1


def encoder_ref(hidden, w, blocks_params, num_heads):
    for p in blocks_params:
        hidden = encoder_block_ref(hidden, w, p, num_heads)
    return hidden


# ---------------------------------------------------------------------------
if __name__ == "__main__":
    B, N, E = 2, 8, 32       # batch, tokens, hidden_size
    num_heads = 4
    depth = 4

    root = jax.random.PRNGKey(0)
    k_h, k_w, k_p = jax.random.split(root, 3)
    hidden = jax.random.normal(k_h, (B, N, E), jnp.float32)
    w = jax.random.normal(k_w, (B, E), jnp.float32)
    blocks_params = [init_block_params(k, E) for k in jax.random.split(k_p, depth)]

    ref = encoder_ref(hidden, w, blocks_params, num_heads)

    # f32 path (tight check)
    stacked_f32 = prepare_stacked_params(blocks_params, E, compute_dtype=jnp.float32)
    out = generator_transformer_encoder_pallas(hidden, w, stacked_f32, num_heads)
    out = jax.block_until_ready(out)
    assert out.shape == (B, N, E)
    max_err = float(jnp.max(jnp.abs(out - ref)))
    assert jnp.allclose(out, ref, rtol=1e-4, atol=1e-4), max_err

    # bf16-MXU path (v6e/v7x recommendation): f32 LN / softmax / accumulation.
    stacked_bf16 = prepare_stacked_params(blocks_params, E, compute_dtype=jnp.bfloat16)
    out16 = generator_transformer_encoder_pallas(hidden, w, stacked_bf16, num_heads)
    out16 = jax.block_until_ready(out16)
    assert jnp.all(jnp.isfinite(out16))
    assert float(jnp.max(jnp.abs(out16 - ref))) < 2.0   # loose: bf16 matmul inputs

    print("KERNEL_OK")
</pallas_src>

<mosaic_0001>
module attributes {stable_mosaic.version = 11 : i64} {
  func.func @encoder_kernel(%arg0: i32, %arg1: i32, %arg2: memref<2x8x32xf32, #tpu.memory_space<vmem>>, %arg3: memref<1x2x1x32xf32, #tpu.memory_space<vmem>>, %arg4: memref<1x2x1x32xf32, #tpu.memory_space<vmem>>, %arg5: memref<1x1x32xf32, #tpu.memory_space<vmem>>, %arg6: memref<1x1x32xf32, #tpu.memory_space<vmem>>, %arg7: memref<1x32x32xf32, #tpu.memory_space<vmem>>, %arg8: memref<1x1x32xf32, #tpu.memory_space<vmem>>, %arg9: memref<1x32x32xf32, #tpu.memory_space<vmem>>, %arg10: memref<1x1x32xf32, #tpu.memory_space<vmem>>, %arg11: memref<1x32x32xf32, #tpu.memory_space<vmem>>, %arg12: memref<1x1x32xf32, #tpu.memory_space<vmem>>, %arg13: memref<1x32x32xf32, #tpu.memory_space<vmem>>, %arg14: memref<1x1x32xf32, #tpu.memory_space<vmem>>, %arg15: memref<2x8x32xf32, #tpu.memory_space<vmem>>) attributes {dimension_semantics = [#tpu.dimension_semantics<parallel>, #tpu.dimension_semantics<arbitrary>], iteration_bounds = array<i64: 1, 4>, scalar_prefetch = 0 : i64, scratch_operands = 0 : i64, tpu.core_type = #tpu.core_type<tc>, window_params = [{transform_indices = @transform_0, window_bounds = array<i64: 2, 8, 32>}, {transform_indices = @transform_1, window_bounds = array<i64: 1, 2, 1, 32>}, {transform_indices = @transform_2, window_bounds = array<i64: 1, 2, 1, 32>}, {transform_indices = @transform_3, window_bounds = array<i64: 1, 1, 32>}, {transform_indices = @transform_4, window_bounds = array<i64: 1, 1, 32>}, {transform_indices = @transform_5, window_bounds = array<i64: 1, 32, 32>}, {transform_indices = @transform_6, window_bounds = array<i64: 1, 1, 32>}, {transform_indices = @transform_7, window_bounds = array<i64: 1, 32, 32>}, {transform_indices = @transform_8, window_bounds = array<i64: 1, 1, 32>}, {transform_indices = @transform_9, window_bounds = array<i64: 1, 32, 32>}, {transform_indices = @transform_10, window_bounds = array<i64: 1, 1, 32>}, {transform_indices = @transform_11, window_bounds = array<i64: 1, 32, 32>}, {transform_indices = @transform_12, window_bounds = array<i64: 1, 1, 32>}, {transform_indices = @transform_13, window_bounds = array<i64: 2, 8, 32>}]} {
    %c0_i32 = arith.constant 0 : i32
    %0 = arith.cmpi eq, %arg1, %c0_i32 : i32
    %1 = arith.extui %0 : i1 to i32
    %c0_i32_0 = arith.constant 0 : i32
    %2 = arith.cmpi ne, %1, %c0_i32_0 : i32
    scf.if %2 {
      %c0_87 = arith.constant 0 : index
      %c0_88 = arith.constant 0 : index
      %c0_89 = arith.constant 0 : index
      %181 = vector.load %arg2[%c0_87, %c0_88, %c0_89] : memref<2x8x32xf32, #tpu.memory_space<vmem>>, vector<2x8x32xf32>
      %c0_90 = arith.constant 0 : index
      %c0_91 = arith.constant 0 : index
      %c0_92 = arith.constant 0 : index
      %182 = vector.load %arg15[%c0_90, %c0_91, %c0_92] : memref<2x8x32xf32, #tpu.memory_space<vmem>>, vector<2x8x32xf32>
      tpu.vector_store %arg15[%c0_90, %c0_91, %c0_92], %181 {strides = array<i32>} : memref<2x8x32xf32, #tpu.memory_space<vmem>>, vector<2x8x32xf32>,
    } else {
    }
    %c0 = arith.constant 0 : index
    %c0_1 = arith.constant 0 : index
    %c0_2 = arith.constant 0 : index
    %3 = vector.load %arg15[%c0, %c0_1, %c0_2] : memref<2x8x32xf32, #tpu.memory_space<vmem>>, vector<2x8x32xf32>
    %4 = vector.shape_cast %3 : vector<2x8x32xf32> to vector<16x32xf32>
    %c0_3 = arith.constant 0 : index
    %c0_4 = arith.constant 0 : index
    %c0_5 = arith.constant 0 : index
    %c0_6 = arith.constant 0 : index
    %5 = vector.load %arg3[%c0_3, %c0_4, %c0_5, %c0_6] : memref<1x2x1x32xf32, #tpu.memory_space<vmem>>, vector<1x2x1x32xf32>
    %6 = vector.shape_cast %5 : vector<1x2x1x32xf32> to vector<2x1x32xf32>
    %c0_7 = arith.constant 0 : index
    %c0_8 = arith.constant 0 : index
    %c0_9 = arith.constant 0 : index
    %c0_10 = arith.constant 0 : index
    %7 = vector.load %arg4[%c0_7, %c0_8, %c0_9, %c0_10] : memref<1x2x1x32xf32, #tpu.memory_space<vmem>>, vector<1x2x1x32xf32>
    %8 = vector.shape_cast %7 : vector<1x2x1x32xf32> to vector<2x1x32xf32>
    %c0_11 = arith.constant 0 : index
    %c0_12 = arith.constant 0 : index
    %c0_13 = arith.constant 0 : index
    %9 = vector.load %arg5[%c0_11, %c0_12, %c0_13] : memref<1x1x32xf32, #tpu.memory_space<vmem>>, vector<1x1x32xf32>
    %c0_14 = arith.constant 0 : index
    %c0_15 = arith.constant 0 : index
    %c0_16 = arith.constant 0 : index
    %10 = vector.load %arg6[%c0_14, %c0_15, %c0_16] : memref<1x1x32xf32, #tpu.memory_space<vmem>>, vector<1x1x32xf32>
    %cst = arith.constant dense<0.000000e+00> : vector<2x8xf32>
    %11 = vector.multi_reduction <add>, %3, %cst [2] : vector<2x8x32xf32> to vector<2x8xf32>
    %12 = vector.shape_cast %11 : vector<2x8xf32> to vector<2x8x1xf32>
    %cst_17 = arith.constant 3.200000e+01 : f32
    %13 = vector.broadcast %cst_17 : f32 to vector<2x8x1xf32>
    %14 = arith.divf %12, %13 : vector<2x8x1xf32>
    %15 = vector.broadcast %14 : vector<2x8x1xf32> to vector<2x8x32xf32>
    %16 = arith.subf %3, %15 : vector<2x8x32xf32>
    %17 = arith.mulf %16, %16 : vector<2x8x32xf32>
    %cst_18 = arith.constant dense<0.000000e+00> : vector<2x8xf32>
    %18 = vector.multi_reduction <add>, %17, %cst_18 [2] : vector<2x8x32xf32> to vector<2x8xf32>
    %19 = vector.shape_cast %18 : vector<2x8xf32> to vector<2x8x1xf32>
    %cst_19 = arith.constant 3.200000e+01 : f32
    %20 = vector.broadcast %cst_19 : f32 to vector<2x8x1xf32>
    %21 = arith.divf %19, %20 : vector<2x8x1xf32>
    %22 = vector.broadcast %14 : vector<2x8x1xf32> to vector<2x8x32xf32>
    %23 = arith.subf %3, %22 : vector<2x8x32xf32>
    %cst_20 = arith.constant 9.99999974E-6 : f32
    %24 = vector.broadcast %cst_20 : f32 to vector<2x8x1xf32>
    %25 = arith.addf %21, %24 : vector<2x8x1xf32>
    %26 = math.rsqrt %25 : vector<2x8x1xf32>
    %27 = vector.broadcast %26 : vector<2x8x1xf32> to vector<2x8x32xf32>
    %28 = arith.mulf %23, %27 : vector<2x8x32xf32>
    %29 = vector.broadcast %9 : vector<1x1x32xf32> to vector<2x8x32xf32>
    %30 = arith.mulf %28, %29 : vector<2x8x32xf32>
    %31 = vector.broadcast %10 : vector<1x1x32xf32> to vector<2x8x32xf32>
    %32 = arith.addf %30, %31 : vector<2x8x32xf32>
    %33 = vector.broadcast %6 : vector<2x1x32xf32> to vector<2x8x32xf32>
    %34 = arith.mulf %33, %32 : vector<2x8x32xf32>
    %35 = vector.broadcast %8 : vector<2x1x32xf32> to vector<2x8x32xf32>
    %36 = arith.addf %34, %35 : vector<2x8x32xf32>
    %37 = vector.shape_cast %36 : vector<2x8x32xf32> to vector<16x32xf32>
    %c0_21 = arith.constant 0 : index
    %c0_22 = arith.constant 0 : index
    %c0_23 = arith.constant 0 : index
    %38 = vector.load %arg7[%c0_21, %c0_22, %c0_23] : memref<1x32x32xf32, #tpu.memory_space<vmem>>, vector<1x32x32xf32>
    %39 = vector.shape_cast %38 : vector<1x32x32xf32> to vector<32x32xf32>
    %cst_24 = arith.constant dense<0.000000e+00> : vector<16x32xf32>
    %40 = tpu.matmul %37, %39, %cst_24 {dimension_numbers = #tpu.dot_dimension_numbers<[1], [0], [0], [1], [0, 0, 1, 1], [], []>} : vector<16x32xf32>, vector<32x32xf32>, vector<16x32xf32> -> vector<16x32xf32>
    %c0_25 = arith.constant 0 : index
    %c0_26 = arith.constant 0 : index
    %c0_27 = arith.constant 0 : index
    %41 = vector.load %arg8[%c0_25, %c0_26, %c0_27] : memref<1x1x32xf32, #tpu.memory_space<vmem>>, vector<1x1x32xf32>
    %42 = vector.shape_cast %41 : vector<1x1x32xf32> to vector<1x32xf32>
    %43 = vector.broadcast %42 : vector<1x32xf32> to vector<16x32xf32>
    %44 = arith.addf %40, %43 : vector<16x32xf32>
    %c0_28 = arith.constant 0 : index
    %c0_29 = arith.constant 0 : index
    %c0_30 = arith.constant 0 : index
    %45 = vector.load %arg9[%c0_28, %c0_29, %c0_30] : memref<1x32x32xf32, #tpu.memory_space<vmem>>, vector<1x32x32xf32>
    %46 = vector.shape_cast %45 : vector<1x32x32xf32> to vector<32x32xf32>
    %cst_31 = arith.constant dense<0.000000e+00> : vector<16x32xf32>
    %47 = tpu.matmul %37, %46, %cst_31 {dimension_numbers = #tpu.dot_dimension_numbers<[1], [0], [0], [1], [0, 0, 1, 1], [], []>} : vector<16x32xf32>, vector<32x32xf32>, vector<16x32xf32> -> vector<16x32xf32>
    %c0_32 = arith.constant 0 : index
    %c0_33 = arith.constant 0 : index
    %c0_34 = arith.constant 0 : index
    %48 = vector.load %arg10[%c0_32, %c0_33, %c0_34] : memref<1x1x32xf32, #tpu.memory_space<vmem>>, vector<1x1x32xf32>
    %49 = vector.shape_cast %48 : vector<1x1x32xf32> to vector<1x32xf32>
    %50 = vector.broadcast %49 : vector<1x32xf32> to vector<16x32xf32>
    %51 = arith.addf %47, %50 : vector<16x32xf32>
    %c0_35 = arith.constant 0 : index
    %c0_36 = arith.constant 0 : index
    %c0_37 = arith.constant 0 : index
    %52 = vector.load %arg11[%c0_35, %c0_36, %c0_37] : memref<1x32x32xf32, #tpu.memory_space<vmem>>, vector<1x32x32xf32>
    %53 = vector.shape_cast %52 : vector<1x32x32xf32> to vector<32x32xf32>
    %cst_38 = arith.constant dense<0.000000e+00> : vector<16x32xf32>
    %54 = tpu.matmul %37, %53, %cst_38 {dimension_numbers = #tpu.dot_dimension_numbers<[1], [0], [0], [1], [0, 0, 1, 1], [], []>} : vector<16x32xf32>, vector<32x32xf32>, vector<16x32xf32> -> vector<16x32xf32>
    %c0_39 = arith.constant 0 : index
    %c0_40 = arith.constant 0 : index
    %c0_41 = arith.constant 0 : index
    %55 = vector.load %arg12[%c0_39, %c0_40, %c0_41] : memref<1x1x32xf32, #tpu.memory_space<vmem>>, vector<1x1x32xf32>
    %56 = vector.shape_cast %55 : vector<1x1x32xf32> to vector<1x32xf32>
    %57 = vector.broadcast %56 : vector<1x32xf32> to vector<16x32xf32>
    %58 = arith.addf %54, %57 : vector<16x32xf32>
    %59 = vector.shape_cast %44 : vector<16x32xf32> to vector<2x8x32xf32>
    %60 = vector.shape_cast %51 : vector<16x32xf32> to vector<2x8x32xf32>
    %61 = vector.shape_cast %58 : vector<16x32xf32> to vector<2x8x32xf32>
    %cst_42 = arith.constant 0.000000e+00 : f32
    %62 = vector.broadcast %cst_42 : f32 to vector<16x32xf32>
    %63 = vector.extract_strided_slice %59 {offsets = [0, 0, 0], sizes = [2, 8, 8], strides = [1, 1, 1]} : vector<2x8x32xf32> to vector<2x8x8xf32>
    %64 = vector.extract_strided_slice %60 {offsets = [0, 0, 0], sizes = [2, 8, 8], strides = [1, 1, 1]} : vector<2x8x32xf32> to vector<2x8x8xf32>
    "tpu.trace_start"() <{level = 10 : i32, message = "bqd,bkd->bqk"}> : () -> ()
    %cst_43 = arith.constant dense<0.000000e+00> : vector<2x8x8xf32>
    %65 = tpu.matmul %63, %64, %cst_43 {dimension_numbers = #tpu.dot_dimension_numbers<[2], [2], [1], [1], [0, 0, 0, 1, 1, 1], [0], [0]>} : vector<2x8x8xf32>, vector<2x8x8xf32>, vector<2x8x8xf32> -> vector<2x8x8xf32>
    "tpu.trace_stop"() : () -> ()
    %cst_44 = arith.constant dense<0xFF800000> : vector<2x8xf32>
    %66 = vector.multi_reduction <maximumf>, %65, %cst_44 [2] : vector<2x8x8xf32> to vector<2x8xf32>
    %cst_45 = arith.constant 0xFF800000 : f32
    %67 = vector.broadcast %cst_45 : f32 to vector<2x8xf32>
    %68 = arith.maximumf %67, %66 : vector<2x8xf32>
    %69 = vector.shape_cast %68 : vector<2x8xf32> to vector<2x8x1xf32>
    %70 = vector.broadcast %69 : vector<2x8x1xf32> to vector<2x8x8xf32>
    %71 = arith.subf %65, %70 : vector<2x8x8xf32>
    %72 = math.exp %71 : vector<2x8x8xf32>
    %cst_46 = arith.constant dense<0.000000e+00> : vector<2x8xf32>
    %73 = vector.multi_reduction <add>, %72, %cst_46 [2] : vector<2x8x8xf32> to vector<2x8xf32>
    %74 = vector.shape_cast %73 : vector<2x8xf32> to vector<2x8x1xf32>
    %75 = vector.broadcast %74 : vector<2x8x1xf32> to vector<2x8x8xf32>
    %76 = arith.divf %72, %75 : vector<2x8x8xf32>
    %77 = vector.extract_strided_slice %61 {offsets = [0, 0, 0], sizes = [2, 8, 8], strides = [1, 1, 1]} : vector<2x8x32xf32> to vector<2x8x8xf32>
    "tpu.trace_start"() <{level = 10 : i32, message = "bqk,bkd->bqd"}> : () -> ()
    %cst_47 = arith.constant dense<0.000000e+00> : vector<2x8x8xf32>
    %78 = tpu.matmul %76, %77, %cst_47 {dimension_numbers = #tpu.dot_dimension_numbers<[2], [1], [1], [2], [0, 0, 0, 1, 1, 2], [0], [0]>} : vector<2x8x8xf32>, vector<2x8x8xf32>, vector<2x8x8xf32> -> vector<2x8x8xf32>
    "tpu.trace_stop"() : () -> ()
    %79 = vector.shape_cast %78 : vector<2x8x8xf32> to vector<16x8xf32>
    %c0_48 = arith.constant 0 : index
    %c0_49 = arith.constant 0 : index
    %c0_50 = arith.constant 0 : index
    %80 = vector.load %arg13[%c0_48, %c0_49, %c0_50] : memref<1x32x32xf32, #tpu.memory_space<vmem>>, vector<1x8x32xf32>
    %81 = vector.shape_cast %80 : vector<1x8x32xf32> to vector<8x32xf32>
    %cst_51 = arith.constant dense<0.000000e+00> : vector<16x32xf32>
    %82 = tpu.matmul %79, %81, %cst_51 {dimension_numbers = #tpu.dot_dimension_numbers<[1], [0], [0], [1], [0, 0, 1, 1], [], []>} : vector<16x8xf32>, vector<8x32xf32>, vector<16x32xf32> -> vector<16x32xf32>
    %83 = arith.addf %62, %82 : vector<16x32xf32>
    %84 = vector.extract_strided_slice %59 {offsets = [0, 0, 8], sizes = [2, 8, 8], strides = [1, 1, 1]} : vector<2x8x32xf32> to vector<2x8x8xf32>
    %85 = vector.extract_strided_slice %60 {offsets = [0, 0, 8], sizes = [2, 8, 8], strides = [1, 1, 1]} : vector<2x8x32xf32> to vector<2x8x8xf32>
    "tpu.trace_start"() <{level = 10 : i32, message = "bqd,bkd->bqk"}> : () -> ()
    %cst_52 = arith.constant dense<0.000000e+00> : vector<2x8x8xf32>
    %86 = tpu.matmul %84, %85, %cst_52 {dimension_numbers = #tpu.dot_dimension_numbers<[2], [2], [1], [1], [0, 0, 0, 1, 1, 1], [0], [0]>} : vector<2x8x8xf32>, vector<2x8x8xf32>, vector<2x8x8xf32> -> vector<2x8x8xf32>
    "tpu.trace_stop"() : () -> ()
    %cst_53 = arith.constant dense<0xFF800000> : vector<2x8xf32>
    %87 = vector.multi_reduction <maximumf>, %86, %cst_53 [2] : vector<2x8x8xf32> to vector<2x8xf32>
    %cst_54 = arith.constant 0xFF800000 : f32
    %88 = vector.broadcast %cst_54 : f32 to vector<2x8xf32>
    %89 = arith.maximumf %88, %87 : vector<2x8xf32>
    %90 = vector.shape_cast %89 : vector<2x8xf32> to vector<2x8x1xf32>
    %91 = vector.broadcast %90 : vector<2x8x1xf32> to vector<2x8x8xf32>
    %92 = arith.subf %86, %91 : vector<2x8x8xf32>
    %93 = math.exp %92 : vector<2x8x8xf32>
    %cst_55 = arith.constant dense<0.000000e+00> : vector<2x8xf32>
    %94 = vector.multi_reduction <add>, %93, %cst_55 [2] : vector<2x8x8xf32> to vector<2x8xf32>
    %95 = vector.shape_cast %94 : vector<2x8xf32> to vector<2x8x1xf32>
    %96 = vector.broadcast %95 : vector<2x8x1xf32> to vector<2x8x8xf32>
    %97 = arith.divf %93, %96 : vector<2x8x8xf32>
    %98 = vector.extract_strided_slice %61 {offsets = [0, 0, 8], sizes = [2, 8, 8], strides = [1, 1, 1]} : vector<2x8x32xf32> to vector<2x8x8xf32>
    "tpu.trace_start"() <{level = 10 : i32, message = "bqk,bkd->bqd"}> : () -> ()
    %cst_56 = arith.constant dense<0.000000e+00> : vector<2x8x8xf32>
    %99 = tpu.matmul %97, %98, %cst_56 {dimension_numbers = #tpu.dot_dimension_numbers<[2], [1], [1], [2], [0, 0, 0, 1, 1, 2], [0], [0]>} : vector<2x8x8xf32>, vector<2x8x8xf32>, vector<2x8x8xf32> -> vector<2x8x8xf32>
    "tpu.trace_stop"() : () -> ()
    %100 = vector.shape_cast %99 : vector<2x8x8xf32> to vector<16x8xf32>
    %c0_57 = arith.constant 0 : index
    %c8 = arith.constant 8 : index
    %c0_58 = arith.constant 0 : index
    %101 = vector.load %arg13[%c0_57, %c8, %c0_58] : memref<1x32x32xf32, #tpu.memory_space<vmem>>, vector<1x8x32xf32>
    %102 = vector.shape_cast %101 : vector<1x8x32xf32> to vector<8x32xf32>
    %cst_59 = arith.constant dense<0.000000e+00> : vector<16x32xf32>
    %103 = tpu.matmul %100, %102, %cst_59 {dimension_numbers = #tpu.dot_dimension_numbers<[1], [0], [0], [1], [0, 0, 1, 1], [], []>} : vector<16x8xf32>, vector<8x32xf32>, vector<16x32xf32> -> vector<16x32xf32>
    %104 = arith.addf %83, %103 : vector<16x32xf32>
    %105 = vector.extract_strided_slice %59 {offsets = [0, 0, 16], sizes = [2, 8, 8], strides = [1, 1, 1]} : vector<2x8x32xf32> to vector<2x8x8xf32>
    %106 = vector.extract_strided_slice %60 {offsets = [0, 0, 16], sizes = [2, 8, 8], strides = [1, 1, 1]} : vector<2x8x32xf32> to vector<2x8x8xf32>
    "tpu.trace_start"() <{level = 10 : i32, message = "bqd,bkd->bqk"}> : () -> ()
    %cst_60 = arith.constant dense<0.000000e+00> : vector<2x8x8xf32>
    %107 = tpu.matmul %105, %106, %cst_60 {dimension_numbers = #tpu.dot_dimension_numbers<[2], [2], [1], [1], [0, 0, 0, 1, 1, 1], [0], [0]>} : vector<2x8x8xf32>, vector<2x8x8xf32>, vector<2x8x8xf32> -> vector<2x8x8xf32>
    "tpu.trace_stop"() : () -> ()
    %cst_61 = arith.constant dense<0xFF800000> : vector<2x8xf32>
    %108 = vector.multi_reduction <maximumf>, %107, %cst_61 [2] : vector<2x8x8xf32> to vector<2x8xf32>
    %cst_62 = arith.constant 0xFF800000 : f32
    %109 = vector.broadcast %cst_62 : f32 to vector<2x8xf32>
    %110 = arith.maximumf %109, %108 : vector<2x8xf32>
    %111 = vector.shape_cast %110 : vector<2x8xf32> to vector<2x8x1xf32>
    %112 = vector.broadcast %111 : vector<2x8x1xf32> to vector<2x8x8xf32>
    %113 = arith.subf %107, %112 : vector<2x8x8xf32>
    %114 = math.exp %113 : vector<2x8x8xf32>
    %cst_63 = arith.constant dense<0.000000e+00> : vector<2x8xf32>
    %115 = vector.multi_reduction <add>, %114, %cst_63 [2] : vector<2x8x8xf32> to vector<2x8xf32>
    %116 = vector.shape_cast %115 : vector<2x8xf32> to vector<2x8x1xf32>
    %117 = vector.broadcast %116 : vector<2x8x1xf32> to vector<2x8x8xf32>
    %118 = arith.divf %114, %117 : vector<2x8x8xf32>
    %119 = vector.extract_strided_slice %61 {offsets = [0, 0, 16], sizes = [2, 8, 8], strides = [1, 1, 1]} : vector<2x8x32xf32> to vector<2x8x8xf32>
    "tpu.trace_start"() <{level = 10 : i32, message = "bqk,bkd->bqd"}> : () -> ()
    %cst_64 = arith.constant dense<0.000000e+00> : vector<2x8x8xf32>
    %120 = tpu.matmul %118, %119, %cst_64 {dimension_numbers = #tpu.dot_dimension_numbers<[2], [1], [1], [2], [0, 0, 0, 1, 1, 2], [0], [0]>} : vector<2x8x8xf32>, vector<2x8x8xf32>, vector<2x8x8xf32> -> vector<2x8x8xf32>
    "tpu.trace_stop"() : () -> ()
    %121 = vector.shape_cast %120 : vector<2x8x8xf32> to vector<16x8xf32>
    %c0_65 = arith.constant 0 : index
    %c16 = arith.constant 16 : index
    %c0_66 = arith.constant 0 : index
    %122 = vector.load %arg13[%c0_65, %c16, %c0_66] : memref<1x32x32xf32, #tpu.memory_space<vmem>>, vector<1x8x32xf32>
    %123 = vector.shape_cast %122 : vector<1x8x32xf32> to vector<8x32xf32>
    %cst_67 = arith.constant dense<0.000000e+00> : vector<16x32xf32>
    %124 = tpu.matmul %121, %123, %cst_67 {dimension_numbers = #tpu.dot_dimension_numbers<[1], [0], [0], [1], [0, 0, 1, 1], [], []>} : vector<16x8xf32>, vector<8x32xf32>, vector<16x32xf32> -> vector<16x32xf32>
    %125 = arith.addf %104, %124 : vector<16x32xf32>
    %126 = vector.extract_strided_slice %59 {offsets = [0, 0, 24], sizes = [2, 8, 8], strides = [1, 1, 1]} : vector<2x8x32xf32> to vector<2x8x8xf32>
    %127 = vector.extract_strided_slice %60 {offsets = [0, 0, 24], sizes = [2, 8, 8], strides = [1, 1, 1]} : vector<2x8x32xf32> to vector<2x8x8xf32>
    "tpu.trace_start"() <{level = 10 : i32, message = "bqd,bkd->bqk"}> : () -> ()
    %cst_68 = arith.constant dense<0.000000e+00> : vector<2x8x8xf32>
    %128 = tpu.matmul %126, %127, %cst_68 {dimension_numbers = #tpu.dot_dimension_numbers<[2], [2], [1], [1], [0, 0, 0, 1, 1, 1], [0], [0]>} : vector<2x8x8xf32>, vector<2x8x8xf32>, vector<2x8x8xf32> -> vector<2x8x8xf32>
    "tpu.trace_stop"() : () -> ()
    %cst_69 = arith.constant dense<0xFF800000> : vector<2x8xf32>
    %129 = vector.multi_reduction <maximumf>, %128, %cst_69 [2] : vector<2x8x8xf32> to vector<2x8xf32>
    %cst_70 = arith.constant 0xFF800000 : f32
    %130 = vector.broadcast %cst_70 : f32 to vector<2x8xf32>
    %131 = arith.maximumf %130, %129 : vector<2x8xf32>
    %132 = vector.shape_cast %131 : vector<2x8xf32> to vector<2x8x1xf32>
    %133 = vector.broadcast %132 : vector<2x8x1xf32> to vector<2x8x8xf32>
    %134 = arith.subf %128, %133 : vector<2x8x8xf32>
    %135 = math.exp %134 : vector<2x8x8xf32>
    %cst_71 = arith.constant dense<0.000000e+00> : vector<2x8xf32>
    %136 = vector.multi_reduction <add>, %135, %cst_71 [2] : vector<2x8x8xf32> to vector<2x8xf32>
    %137 = vector.shape_cast %136 : vector<2x8xf32> to vector<2x8x1xf32>
    %138 = vector.broadcast %137 : vector<2x8x1xf32> to vector<2x8x8xf32>
    %139 = arith.divf %135, %138 : vector<2x8x8xf32>
    %140 = vector.extract_strided_slice %61 {offsets = [0, 0, 24], sizes = [2, 8, 8], strides = [1, 1, 1]} : vector<2x8x32xf32> to vector<2x8x8xf32>
    "tpu.trace_start"() <{level = 10 : i32, message = "bqk,bkd->bqd"}> : () -> ()
    %cst_72 = arith.constant dense<0.000000e+00> : vector<2x8x8xf32>
    %141 = tpu.matmul %139, %140, %cst_72 {dimension_numbers = #tpu.dot_dimension_numbers<[2], [1], [1], [2], [0, 0, 0, 1, 1, 2], [0], [0]>} : vector<2x8x8xf32>, vector<2x8x8xf32>, vector<2x8x8xf32> -> vector<2x8x8xf32>
    "tpu.trace_stop"() : () -> ()
    %142 = vector.shape_cast %141 : vector<2x8x8xf32> to vector<16x8xf32>
    %c0_73 = arith.constant 0 : index
    %c24 = arith.constant 24 : index
    %c0_74 = arith.constant 0 : index
    %143 = vector.load %arg13[%c0_73, %c24, %c0_74] : memref<1x32x32xf32, #tpu.memory_space<vmem>>, vector<1x8x32xf32>
    %144 = vector.shape_cast %143 : vector<1x8x32xf32> to vector<8x32xf32>
    %cst_75 = arith.constant dense<0.000000e+00> : vector<16x32xf32>
    %145 = tpu.matmul %142, %144, %cst_75 {dimension_numbers = #tpu.dot_dimension_numbers<[1], [0], [0], [1], [0, 0, 1, 1], [], []>} : vector<16x8xf32>, vector<8x32xf32>, vector<16x32xf32> -> vector<16x32xf32>
    %146 = arith.addf %125, %145 : vector<16x32xf32>
    %c0_76 = arith.constant 0 : index
    %c0_77 = arith.constant 0 : index
    %c0_78 = arith.constant 0 : index
    %147 = vector.load %arg14[%c0_76, %c0_77, %c0_78] : memref<1x1x32xf32, #tpu.memory_space<vmem>>, vector<1x1x32xf32>
    %148 = vector.shape_cast %147 : vector<1x1x32xf32> to vector<1x32xf32>
    %149 = vector.broadcast %148 : vector<1x32xf32> to vector<16x32xf32>
    %150 = arith.addf %146, %149 : vector<16x32xf32>
    %151 = arith.addf %150, %4 : vector<16x32xf32>
    %152 = vector.shape_cast %151 : vector<16x32xf32> to vector<2x8x32xf32>
    %cst_79 = arith.constant dense<0.000000e+00> : vector<2x8xf32>
    %153 = vector.multi_reduction <add>, %152, %cst_79 [2] : vector<2x8x32xf32> to vector<2x8xf32>
    %154 = vector.shape_cast %153 : vector<2x8xf32> to vector<2x8x1xf32>
    %cst_80 = arith.constant 3.200000e+01 : f32
    %155 = vector.broadcast %cst_80 : f32 to vector<2x8x1xf32>
    %156 = arith.divf %154, %155 : vector<2x8x1xf32>
    %157 = vector.broadcast %156 : vector<2x8x1xf32> to vector<2x8x32xf32>
    %158 = arith.subf %152, %157 : vector<2x8x32xf32>
    %159 = arith.mulf %158, %158 : vector<2x8x32xf32>
    %cst_81 = arith.constant dense<0.000000e+00> : vector<2x8xf32>
    %160 = vector.multi_reduction <add>, %159, %cst_81 [2] : vector<2x8x32xf32> to vector<2x8xf32>
    %161 = vector.shape_cast %160 : vector<2x8xf32> to vector<2x8x1xf32>
    %cst_82 = arith.constant 3.200000e+01 : f32
    %162 = vector.broadcast %cst_82 : f32 to vector<2x8x1xf32>
    %163 = arith.divf %161, %162 : vector<2x8x1xf32>
    %164 = vector.broadcast %156 : vector<2x8x1xf32> to vector<2x8x32xf32>
    %165 = arith.subf %152, %164 : vector<2x8x32xf32>
    %cst_83 = arith.constant 9.99999974E-6 : f32
    %166 = vector.broadcast %cst_83 : f32 to vector<2x8x1xf32>
    %167 = arith.addf %163, %166 : vector<2x8x1xf32>
    %168 = math.rsqrt %167 : vector<2x8x1xf32>
    %169 = vector.broadcast %168 : vector<2x8x1xf32> to vector<2x8x32xf32>
    %170 = arith.mulf %165, %169 : vector<2x8x32xf32>
    %171 = vector.broadcast %9 : vector<1x1x32xf32> to vector<2x8x32xf32>
    %172 = arith.mulf %170, %171 : vector<2x8x32xf32>
    %173 = vector.broadcast %10 : vector<1x1x32xf32> to vector<2x8x32xf32>
    %174 = arith.addf %172, %173 : vector<2x8x32xf32>
    %175 = vector.broadcast %6 : vector<2x1x32xf32> to vector<2x8x32xf32>
    %176 = arith.mulf %175, %174 : vector<2x8x32xf32>
    %177 = vector.broadcast %8 : vector<2x1x32xf32> to vector<2x8x32xf32>
    %178 = arith.addf %176, %177 : vector<2x8x32xf32>
    %179 = arith.addf %178, %152 : vector<2x8x32xf32>
    %c0_84 = arith.constant 0 : index
    %c0_85 = arith.constant 0 : index
    %c0_86 = arith.constant 0 : index
    %180 = vector.load %arg15[%c0_84, %c0_85, %c0_86] : memref<2x8x32xf32, #tpu.memory_space<vmem>>, vector<2x8x32xf32>
    tpu.vector_store %arg15[%c0_84, %c0_85, %c0_86], %179 {strides = array<i32>} : memref<2x8x32xf32, #tpu.memory_space<vmem>>, vector<2x8x32xf32>,
    return
  }
  func.func @transform_0(%arg0: i32, %arg1: i32) -> (i32, i32, i32) {
    %c0_i32 = arith.constant 0 : i32
    %c0_i32_0 = arith.constant 0 : i32
    %c0_i32_1 = arith.constant 0 : i32
    return %arg0, %c0_i32, %c0_i32_0 : i32, i32, i32
  }
  func.func @transform_1(%arg0: i32, %arg1: i32) -> (i32, i32, i32, i32) {
    %c0_i32 = arith.constant 0 : i32
    %c0_i32_0 = arith.constant 0 : i32
    %c0_i32_1 = arith.constant 0 : i32
    return %arg1, %arg0, %c0_i32, %c0_i32_0 : i32, i32, i32, i32
  }
  func.func @transform_2(%arg0: i32, %arg1: i32) -> (i32, i32, i32, i32) {
    %c0_i32 = arith.constant 0 : i32
    %c0_i32_0 = arith.constant 0 : i32
    %c0_i32_1 = arith.constant 0 : i32
    return %arg1, %arg0, %c0_i32, %c0_i32_0 : i32, i32, i32, i32
  }
  func.func @transform_3(%arg0: i32, %arg1: i32) -> (i32, i32, i32) {
    %c0_i32 = arith.constant 0 : i32
    %c0_i32_0 = arith.constant 0 : i32
    %c0_i32_1 = arith.constant 0 : i32
    return %arg1, %c0_i32, %c0_i32_0 : i32, i32, i32
  }
  func.func @transform_4(%arg0: i32, %arg1: i32) -> (i32, i32, i32) {
    %c0_i32 = arith.constant 0 : i32
    %c0_i32_0 = arith.constant 0 : i32
    %c0_i32_1 = arith.constant 0 : i32
    return %arg1, %c0_i32, %c0_i32_0 : i32, i32, i32
  }
  func.func @transform_5(%arg0: i32, %arg1: i32) -> (i32, i32, i32) {
    %c0_i32 = arith.constant 0 : i32
    %c0_i32_0 = arith.constant 0 : i32
    %c0_i32_1 = arith.constant 0 : i32
    return %arg1, %c0_i32, %c0_i32_0 : i32, i32, i32
  }
  func.func @transform_6(%arg0: i32, %arg1: i32) -> (i32, i32, i32) {
    %c0_i32 = arith.constant 0 : i32
    %c0_i32_0 = arith.constant 0 : i32
    %c0_i32_1 = arith.constant 0 : i32
    return %arg1, %c0_i32, %c0_i32_0 : i32, i32, i32
  }
  func.func @transform_7(%arg0: i32, %arg1: i32) -> (i32, i32, i32) {
    %c0_i32 = arith.constant 0 : i32
    %c0_i32_0 = arith.constant 0 : i32
    %c0_i32_1 = arith.constant 0 : i32
    return %arg1, %c0_i32, %c0_i32_0 : i32, i32, i32
  }
  func.func @transform_8(%arg0: i32, %arg1: i32) -> (i32, i32, i32) {
    %c0_i32 = arith.constant 0 : i32
    %c0_i32_0 = arith.constant 0 : i32
    %c0_i32_1 = arith.constant 0 : i32
    return %arg1, %c0_i32, %c0_i32_0 : i32, i32, i32
  }
  func.func @transform_9(%arg0: i32, %arg1: i32) -> (i32, i32, i32) {
    %c0_i32 = arith.constant 0 : i32
    %c0_i32_0 = arith.constant 0 : i32
    %c0_i32_1 = arith.constant 0 : i32
    return %arg1, %c0_i32, %c0_i32_0 : i32, i32, i32
  }
  func.func @transform_10(%arg0: i32, %arg1: i32) -> (i32, i32, i32) {
    %c0_i32 = arith.constant 0 : i32
    %c0_i32_0 = arith.constant 0 : i32
    %c0_i32_1 = arith.constant 0 : i32
    return %arg1, %c0_i32, %c0_i32_0 : i32, i32, i32
  }
  func.func @transform_11(%arg0: i32, %arg1: i32) -> (i32, i32, i32) {
    %c0_i32 = arith.constant 0 : i32
    %c0_i32_0 = arith.constant 0 : i32
    %c0_i32_1 = arith.constant 0 : i32
    return %arg1, %c0_i32, %c0_i32_0 : i32, i32, i32
  }
  func.func @transform_12(%arg0: i32, %arg1: i32) -> (i32, i32, i32) {
    %c0_i32 = arith.constant 0 : i32
    %c0_i32_0 = arith.constant 0 : i32
    %c0_i32_1 = arith.constant 0 : i32
    return %arg1, %c0_i32, %c0_i32_0 : i32, i32, i32
  }
  func.func @transform_13(%arg0: i32, %arg1: i32) -> (i32, i32, i32) {
    %c0_i32 = arith.constant 0 : i32
    %c0_i32_0 = arith.constant 0 : i32
    %c0_i32_1 = arith.constant 0 : i32
    return %arg0, %c0_i32, %c0_i32_0 : i32, i32, i32
  }
}

</mosaic_0001>

<llo_original>
// kernel: tpu_custom_call.1
$region0: #{tpu_custom_call.1}
  #allocation0 [shape = 'u32[]', space=smem, size = 0x4, offset = 0x4, fixed_abs, tag = 'smem constant byte address 0x4 - core index']
  #allocation1 [shape = 'u32[144,128]{1,0:T(1,128)}', space=vmem, size = 0x12000, scoped, tag = 'internal scratch']
  %s0 = inlined_call_operand.hbm [shape: f32[2,8,32], index: 0, kind: input, shape index: {}]
  %s1 = inlined_call_operand.hbm [shape: f32[4,2,1,32], index: 1, kind: input, shape index: {}]
  %s2 = inlined_call_operand.hbm [shape: f32[4,2,1,32], index: 2, kind: input, shape index: {}]
  %s3 = inlined_call_operand.vmem [shape: f32[4,1,32], index: 3, kind: input, shape index: {}]
  %s4 = inlined_call_operand.hbm [shape: f32[4,1,32], index: 4, kind: input, shape index: {}]
  %s5 = inlined_call_operand.hbm [shape: f32[4,32,32], index: 5, kind: input, shape index: {}]
  %s6 = inlined_call_operand.vmem [shape: f32[4,1,32], index: 6, kind: input, shape index: {}]
  %s7 = inlined_call_operand.hbm [shape: f32[4,32,32], index: 7, kind: input, shape index: {}]
  %s8 = inlined_call_operand.vmem [shape: f32[4,1,32], index: 8, kind: input, shape index: {}]
  %s9 = inlined_call_operand.hbm [shape: f32[4,32,32], index: 9, kind: input, shape index: {}]
  %s10 = inlined_call_operand.vmem [shape: f32[4,1,32], index: 10, kind: input, shape index: {}]
  %s11 = inlined_call_operand.hbm [shape: f32[4,32,32], index: 11, kind: input, shape index: {}]
  %s12 = inlined_call_operand.vmem [shape: f32[4,1,32], index: 12, kind: input, shape index: {}]
  %s13 = inlined_call_operand.hbm [shape: f32[2,8,32], index: 13, kind: output, shape index: {}]
  %s14 = sld [smem:[#allocation0]]
  $region121: #{tpu_custom_call.1} parent=0
    _
  %s16 = ssub.s32 1, %s14
  %s17 = scalar_select 0, %s16, %s14
  $region1: #{tpu_custom_call.1} parent=0
    #allocation2 [shape = 'u8[8192]{0}', space=vmem, size = 0x2000, scoped, tag = 'input window, operand 0, single buffered']
    #allocation3 [shape = 's32[2]{0}', space=sflag, size = 0x8, scoped, tag = 'scoped memory for tpu_custom_call.1']
    #allocation4 [shape = 's32[2]{0}', space=sflag, size = 0x8, scoped, tag = 'scoped memory for tpu_custom_call.1']
    #allocation5 [shape = 'u8[2048]{0}', space=vmem, size = 0x800, scoped, tag = 'input window, operand 1']
    #allocation6 [shape = 's32[2]{0}', space=sflag, size = 0x8, scoped, tag = 'scoped memory for tpu_custom_call.1']
    #allocation7 [shape = 'u8[2048]{0}', space=vmem, size = 0x800, scoped, tag = 'input window, operand 2']
    #allocation8 [shape = 'u8[1024]{0}', space=vmem, size = 0x400, scoped, tag = 'input window, operand 4']
    #allocation9 [shape = 's32[2]{0}', space=sflag, size = 0x8, scoped, tag = 'scoped memory for tpu_custom_call.1']
    #allocation10 [shape = 'u8[32768]{0}', space=vmem, size = 0x8000, scoped, tag = 'input window, operand 5']
    #allocation11 [shape = 'u8[32768]{0}', space=vmem, size = 0x8000, scoped, tag = 'input window, operand 7']
    #allocation12 [shape = 's32[2]{0}', space=sflag, size = 0x8, scoped, tag = 'scoped memory for tpu_custom_call.1']
    #allocation13 [shape = 'u8[32768]{0}', space=vmem, size = 0x8000, scoped, tag = 'input window, operand 9']
    #allocation14 [shape = 'u8[32768]{0}', space=vmem, size = 0x8000, scoped, tag = 'input window, operand 11']
    #allocation15 [shape = 's32[2]{0}', space=sflag, size = 0x8, scoped, tag = 'scoped memory for tpu_custom_call.1']
    #allocation16 [shape = 'u8[8192]{0}', space=vmem, size = 0x2000, scoped, tag = 'output window, operand 0, single buffered']
    %18 = vsyncpa [#allocation3], 0
    %19 = vsyncpa [#allocation6], 0
    %s20 = scalar_lea.sflag [#allocation6], 1
    %21 = vsyncpa %s20, 0
    %22 = vsyncpa [#allocation9], 0
    %s23 = scalar_lea.sflag [#allocation9], 1
    %24 = vsyncpa %s23, 0
    %25 = vsyncpa [#allocation12], 0
    %s26 = scalar_lea.sflag [#allocation12], 1
    %27 = vsyncpa %s26, 0
    %28 = vsyncpa [#allocation15], 0
    %s29 = scalar_lea.sflag [#allocation15], 1
    %30 = vsyncpa %s29, 0
    %31 = vsyncpa [#allocation4], 0
    loop: start=0, step=1, limit=6
    $region2: #{tpu_custom_call.1} parent=1 // loop_pre_header
      _
    $region3: #{tpu_custom_call.1} parent=1 // loop_header
      %s33 = sphi 0, %s37
      %p34 = scmp.ge.s32.totalorder %s33, 6
      %s40 = sphi 0, %s52
      %s41 = sphi 0, %s48
      %s42 = sphi 0, %s40
      %s43 = sphi 0, %s41
      %s44 = sphi 0, %s42
      %s45 = sphi 0, %s43
      %s55 = sphi 0, %s57
      %s58 = sphi 0, %s55
      %s59 = sphi 0, %s58
      %s75 = sphi 0, %s59
      %s83 = sphi 0, %s85
      %s86 = sphi 0, %s83
      %s87 = sphi 0, %s86
      %s103 = sphi 0, %s87
      %s111 = sphi 0, %s113
      %s114 = sphi 0, %s111
      %s115 = sphi 0, %s114
      %s131 = sphi 0, %s115
      %s137 = sphi 0, %s139
      %s140 = sphi 0, %s137
      %s141 = sphi 0, %s140
      %s157 = sphi 0, %s141
      %s163 = sphi 0, %s165
      %s166 = sphi 0, %s163
      %s167 = sphi 0, %s166
      %s183 = sphi 0, %s167
      %s189 = sphi 0, %s191
      %s192 = sphi 0, %s189
      %s193 = sphi 0, %s192
      %s209 = sphi 0, %s193
      %s215 = sphi 0, %s217
      %s218 = sphi 0, %s215
      %s219 = sphi 0, %s218
      %s235 = sphi 0, %s219
      %s241 = sphi 0, %s243
      %s244 = sphi 0, %s241
      %s245 = sphi 0, %s244
      %s261 = sphi 0, %s245
      %s267 = sphi 0, %s269
      %s270 = sphi 0, %s267
      %s271 = sphi 0, %s270
      %s287 = sphi 0, %s271
      %s293 = sphi 0, %s295
      %s296 = sphi 0, %s293
      %s297 = sphi 0, %s296
      %s313 = sphi 0, %s297
      %s319 = sphi 0, %s321
      %s322 = sphi 0, %s319
      %s323 = sphi 0, %s322
      %s339 = sphi 0, %s323
      %s345 = sphi 0, %s347
      %s348 = sphi 0, %s345
      %s349 = sphi 0, %s348
      %s365 = sphi 0, %s349
      %s371 = sphi 0, %s373
      %s374 = sphi 0, %s371
      %s375 = sphi 0, %s374
      %s391 = sphi 0, %s375
      %s397 = sphi 0, %s399
      %s400 = sphi 0, %s397
      %s401 = sphi 0, %s400
      %s417 = sphi 0, %s401
    $region4: #{tpu_custom_call.1} parent=1 // loop_header_branch
      %36 = sbr.rel (%p34) target = $region8
    $region5: #{tpu_custom_call.1} parent=1 // loop_body
      %s38 = ssub.s32 %s33, 1
      %s39 = ssub.s32 %s33, 2
      %s46 = sadd.s32 1, %s41
      %p47 = scmp.ge.s32.totalorder %s46, 4
      %s48 = scalar_select %p47, 0, %s46
      %s49 = sadd.s32 1, %s40
      %s50 = scalar_select %p47, %s49, %s40
      %p51 = scmp.ge.s32.totalorder %s50, 1
      %s52 = scalar_select %p51, 0, %s50
      %s53 = ssub.s32 %s40, %s52
      %p54 = scmp.eq.s32.totalorder %s53, 0
      %s56 = sadd.s32 %s55, 1
      %s57 = scalar_select %p54, %s55, %s56
      %p60 = pneg %p54
      %p61 = scmp.eq.s32.totalorder %s33, 3
      %p62 = por %p60, %p61
      %p63 = scmp.ne.s32.totalorder %s55, %s58
      %p64 = scmp.eq.s32.totalorder %s33, 0
      %p65 = por %p63, %p64
      %p66 = scmp.ne.s32.totalorder %s55, %s58
      %p67 = scmp.eq.s32.totalorder %s38, 3
      %p68 = por %p66, %p67
      %p69 = scmp.ne.s32.totalorder %s58, %s59
      %p70 = scmp.eq.s32.totalorder %s38, 0
      %p71 = por %p69, %p70
      %p72 = scmp.ne.s32.totalorder %s58, %s59
      %p73 = scmp.eq.s32.totalorder %s39, 3
      %p74 = por %p72, %p73
      %p76 = scmp.ne.s32.totalorder %s59, %s75
      %p77 = scmp.eq.s32.totalorder %s39, 0
      %p78 = por %p76, %p77
      %s79 = ssub.s32 %s41, %s48
      %s80 = ssub.s32 %s40, %s52
      %s81 = sor.u32 %s79, %s80
      %p82 = scmp.eq.s32.totalorder %s81, 0
      %s84 = sadd.s32 %s83, 1
      %s85 = scalar_select %p82, %s83, %s84
      %p88 = pneg %p82
      %p89 = scmp.eq.s32.totalorder %s33, 3
      %p90 = por %p88, %p89
      %p91 = scmp.ne.s32.totalorder %s83, %s86
      %p92 = scmp.eq.s32.totalorder %s33, 0
      %p93 = por %p91, %p92
      %p94 = scmp.ne.s32.totalorder %s83, %s86
      %p95 = scmp.eq.s32.totalorder %s38, 3
      %p96 = por %p94, %p95
      %p97 = scmp.ne.s32.totalorder %s86, %s87
      %p98 = scmp.eq.s32.totalorder %s38, 0
      %p99 = por %p97, %p98
      %p100 = scmp.ne.s32.totalorder %s86, %s87
      %p101 = scmp.eq.s32.totalorder %s39, 3
      %p102 = por %p100, %p101
      %p104 = scmp.ne.s32.totalorder %s87, %s103
      %p105 = scmp.eq.s32.totalorder %s39, 0
      %p106 = por %p104, %p105
      %s107 = ssub.s32 %s41, %s48
      %s108 = ssub.s32 %s40, %s52
      %s109 = sor.u32 %s107, %s108
      %p110 = scmp.eq.s32.totalorder %s109, 0
      %s112 = sadd.s32 %s111, 1
      %s113 = scalar_select %p110, %s111, %s112
      %p116 = pneg %p110
      %p117 = scmp.eq.s32.totalorder %s33, 3
      %p118 = por %p116, %p117
      %p119 = scmp.ne.s32.totalorder %s111, %s114
      %p120 = scmp.eq.s32.totalorder %s33, 0
      %p121 = por %p119, %p120
      %p122 = scmp.ne.s32.totalorder %s111, %s114
      %p123 = scmp.eq.s32.totalorder %s38, 3
      %p124 = por %p122, %p123
      %p125 = scmp.ne.s32.totalorder %s114, %s115
      %p126 = scmp.eq.s32.totalorder %s38, 0
      %p127 = por %p125, %p126
      %p128 = scmp.ne.s32.totalorder %s114, %s115
      %p129 = scmp.eq.s32.totalorder %s39, 3
      %p130 = por %p128, %p129
      %p132 = scmp.ne.s32.totalorder %s115, %s131
      %p133 = scmp.eq.s32.totalorder %s39, 0
      %p134 = por %p132, %p133
      %s135 = ssub.s32 %s41, %s48
      %p136 = scmp.eq.s32.totalorder %s135, 0
      %s138 = sadd.s32 %s137, 1
      %s139 = scalar_select %p136, %s137, %s138
      %p142 = pneg %p136
      %p143 = scmp.eq.s32.totalorder %s33, 3
      %p144 = por %p142, %p143
      %p145 = scmp.ne.s32.totalorder %s137, %s140
      %p146 = scmp.eq.s32.totalorder %s33, 0
      %p147 = por %p145, %p146
      %p148 = scmp.ne.s32.totalorder %s137, %s140
      %p149 = scmp.eq.s32.totalorder %s38, 3
      %p150 = por %p148, %p149
      %p151 = scmp.ne.s32.totalorder %s140, %s141
      %p152 = scmp.eq.s32.totalorder %s38, 0
      %p153 = por %p151, %p152
      %p154 = scmp.ne.s32.totalorder %s140, %s141
      %p155 = scmp.eq.s32.totalorder %s39, 3
      %p156 = por %p154, %p155
      %p158 = scmp.ne.s32.totalorder %s141, %s157
      %p159 = scmp.eq.s32.totalorder %s39, 0
      %p160 = por %p158, %p159
      %s161 = ssub.s32 %s41, %s48
      %p162 = scmp.eq.s32.totalorder %s161, 0
      %s164 = sadd.s32 %s163, 1
      %s165 = scalar_select %p162, %s163, %s164
      %p168 = pneg %p162
      %p169 = scmp.eq.s32.totalorder %s33, 3
      %p170 = por %p168, %p169
      %p171 = scmp.ne.s32.totalorder %s163, %s166
      %p172 = scmp.eq.s32.totalorder %s33, 0
      %p173 = por %p171, %p172
      %p174 = scmp.ne.s32.totalorder %s163, %s166
      %p175 = scmp.eq.s32.totalorder %s38, 3
      %p176 = por %p174, %p175
      %p177 = scmp.ne.s32.totalorder %s166, %s167
      %p178 = scmp.eq.s32.totalorder %s38, 0
      %p179 = por %p177, %p178
      %p180 = scmp.ne.s32.totalorder %s166, %s167
      %p181 = scmp.eq.s32.totalorder %s39, 3
      %p182 = por %p180, %p181
      %p184 = scmp.ne.s32.totalorder %s167, %s183
      %p185 = scmp.eq.s32.totalorder %s39, 0
      %p186 = por %p184, %p185
      %s187 = ssub.s32 %s41, %s48
      %p188 = scmp.eq.s32.totalorder %s187, 0
      %s190 = sadd.s32 %s189, 1
      %s191 = scalar_select %p188, %s189, %s190
      %p194 = pneg %p188
      %p195 = scmp.eq.s32.totalorder %s33, 3
      %p196 = por %p194, %p195
      %p197 = scmp.ne.s32.totalorder %s189, %s192
      %p198 = scmp.eq.s32.totalorder %s33, 0
      %p199 = por %p197, %p198
      %p200 = scmp.ne.s32.totalorder %s189, %s192
      %p201 = scmp.eq.s32.totalorder %s38, 3
      %p202 = por %p200, %p201
      %p203 = scmp.ne.s32.totalorder %s192, %s193
      %p204 = scmp.eq.s32.totalorder %s38, 0
      %p205 = por %p203, %p204
      %p206 = scmp.ne.s32.totalorder %s192, %s193
      %p207 = scmp.eq.s32.totalorder %s39, 3
      %p208 = por %p206, %p207
      %p210 = scmp.ne.s32.totalorder %s193, %s209
      %p211 = scmp.eq.s32.totalorder %s39, 0
      %p212 = por %p210, %p211
      %s213 = ssub.s32 %s41, %s48
      %p214 = scmp.eq.s32.totalorder %s213, 0
      %s216 = sadd.s32 %s215, 1
      %s217 = scalar_select %p214, %s215, %s216
      %p220 = pneg %p214
      %p221 = scmp.eq.s32.totalorder %s33, 3
      %p222 = por %p220, %p221
      %p223 = scmp.ne.s32.totalorder %s215, %s218
      %p224 = scmp.eq.s32.totalorder %s33, 0
      %p225 = por %p223, %p224
      %p226 = scmp.ne.s32.totalorder %s215, %s218
      %p227 = scmp.eq.s32.totalorder %s38, 3
      %p228 = por %p226, %p227
      %p229 = scmp.ne.s32.totalorder %s218, %s219
      %p230 = scmp.eq.s32.totalorder %s38, 0
      %p231 = por %p229, %p230
      %p232 = scmp.ne.s32.totalorder %s218, %s219
      %p233 = scmp.eq.s32.totalorder %s39, 3
      %p234 = por %p232, %p233
      %p236 = scmp.ne.s32.totalorder %s219, %s235
      %p237 = scmp.eq.s32.totalorder %s39, 0
      %p238 = por %p236, %p237
      %s239 = ssub.s32 %s41, %s48
      %p240 = scmp.eq.s32.totalorder %s239, 0
      %s242 = sadd.s32 %s241, 1
      %s243 = scalar_select %p240, %s241, %s242
      %p246 = pneg %p240
      %p247 = scmp.eq.s32.totalorder %s33, 3
      %p248 = por %p246, %p247
      %p249 = scmp.ne.s32.totalorder %s241, %s244
      %p250 = scmp.eq.s32.totalorder %s33, 0
      %p251 = por %p249, %p250
      %p252 = scmp.ne.s32.totalorder %s241, %s244
      %p253 = scmp.eq.s32.totalorder %s38, 3
      %p254 = por %p252, %p253
      %p255 = scmp.ne.s32.totalorder %s244, %s245
      %p256 = scmp.eq.s32.totalorder %s38, 0
      %p257 = por %p255, %p256
      %p258 = scmp.ne.s32.totalorder %s244, %s245
      %p259 = scmp.eq.s32.totalorder %s39, 3
      %p260 = por %p258, %p259
      %p262 = scmp.ne.s32.totalorder %s245, %s261
      %p263 = scmp.eq.s32.totalorder %s39, 0
      %p264 = por %p262, %p263
      %s265 = ssub.s32 %s41, %s48
      %p266 = scmp.eq.s32.totalorder %s265, 0
      %s268 = sadd.s32 %s267, 1
      %s269 = scalar_select %p266, %s267, %s268
      %p272 = pneg %p266
      %p273 = scmp.eq.s32.totalorder %s33, 3
      %p274 = por %p272, %p273
      %p275 = scmp.ne.s32.totalorder %s267, %s270
      %p276 = scmp.eq.s32.totalorder %s33, 0
      %p277 = por %p275, %p276
      %p278 = scmp.ne.s32.totalorder %s267, %s270
      %p279 = scmp.eq.s32.totalorder %s38, 3
      %p280 = por %p278, %p279
      %p281 = scmp.ne.s32.totalorder %s270, %s271
      %p282 = scmp.eq.s32.totalorder %s38, 0
      %p283 = por %p281, %p282
      %p284 = scmp.ne.s32.totalorder %s270, %s271
      %p285 = scmp.eq.s32.totalorder %s39, 3
      %p286 = por %p284, %p285
      %p288 = scmp.ne.s32.totalorder %s271, %s287
      %p289 = scmp.eq.s32.totalorder %s39, 0
      %p290 = por %p288, %p289
      %s291 = ssub.s32 %s41, %s48
      %p292 = scmp.eq.s32.totalorder %s291, 0
      %s294 = sadd.s32 %s293, 1
      %s295 = scalar_select %p292, %s293, %s294
      %p298 = pneg %p292
      %p299 = scmp.eq.s32.totalorder %s33, 3
      %p300 = por %p298, %p299
      %p301 = scmp.ne.s32.totalorder %s293, %s296
      %p302 = scmp.eq.s32.totalorder %s33, 0
      %p303 = por %p301, %p302
      %p304 = scmp.ne.s32.totalorder %s293, %s296
      %p305 = scmp.eq.s32.totalorder %s38, 3
      %p306 = por %p304, %p305
      %p307 = scmp.ne.s32.totalorder %s296, %s297
      %p308 = scmp.eq.s32.totalorder %s38, 0
      %p309 = por %p307, %p308
      %p310 = scmp.ne.s32.totalorder %s296, %s297
      %p311 = scmp.eq.s32.totalorder %s39, 3
      %p312 = por %p310, %p311
      %p314 = scmp.ne.s32.totalorder %s297, %s313
      %p315 = scmp.eq.s32.totalorder %s39, 0
      %p316 = por %p314, %p315
      %s317 = ssub.s32 %s41, %s48
      %p318 = scmp.eq.s32.totalorder %s317, 0
      %s320 = sadd.s32 %s319, 1
      %s321 = scalar_select %p318, %s319, %s320
      %p324 = pneg %p318
      %p325 = scmp.eq.s32.totalorder %s33, 3
      %p326 = por %p324, %p325
      %p327 = scmp.ne.s32.totalorder %s319, %s322
      %p328 = scmp.eq.s32.totalorder %s33, 0
      %p329 = por %p327, %p328
      %p330 = scmp.ne.s32.totalorder %s319, %s322
      %p331 = scmp.eq.s32.totalorder %s38, 3
      %p332 = por %p330, %p331
      %p333 = scmp.ne.s32.totalorder %s322, %s323
      %p334 = scmp.eq.s32.totalorder %s38, 0
      %p335 = por %p333, %p334
      %p336 = scmp.ne.s32.totalorder %s322, %s323
      %p337 = scmp.eq.s32.totalorder %s39, 3
      %p338 = por %p336, %p337
      %p340 = scmp.ne.s32.totalorder %s323, %s339
      %p341 = scmp.eq.s32.totalorder %s39, 0
      %p342 = por %p340, %p341
      %s343 = ssub.s32 %s41, %s48
      %p344 = scmp.eq.s32.totalorder %s343, 0
      %s346 = sadd.s32 %s345, 1
      %s347 = scalar_select %p344, %s345, %s346
      %p350 = pneg %p344
      %p351 = scmp.eq.s32.totalorder %s33, 3
      %p352 = por %p350, %p351
      %p353 = scmp.ne.s32.totalorder %s345, %s348
      %p354 = scmp.eq.s32.totalorder %s33, 0
      %p355 = por %p353, %p354
      %p356 = scmp.ne.s32.totalorder %s345, %s348
      %p357 = scmp.eq.s32.totalorder %s38, 3
      %p358 = por %p356, %p357
      %p359 = scmp.ne.s32.totalorder %s348, %s349
      %p360 = scmp.eq.s32.totalorder %s38, 0
      %p361 = por %p359, %p360
      %p362 = scmp.ne.s32.totalorder %s348, %s349
      %p363 = scmp.eq.s32.totalorder %s39, 3
      %p364 = por %p362, %p363
      %p366 = scmp.ne.s32.totalorder %s349, %s365
      %p367 = scmp.eq.s32.totalorder %s39, 0
      %p368 = por %p366, %p367
      %s369 = ssub.s32 %s41, %s48
      %p370 = scmp.eq.s32.totalorder %s369, 0
      %s372 = sadd.s32 %s371, 1
      %s373 = scalar_select %p370, %s371, %s372
      %p376 = pneg %p370
      %p377 = scmp.eq.s32.totalorder %s33, 3
      %p378 = por %p376, %p377
      %p379 = scmp.ne.s32.totalorder %s371, %s374
      %p380 = scmp.eq.s32.totalorder %s33, 0
      %p381 = por %p379, %p380
      %p382 = scmp.ne.s32.totalorder %s371, %s374
      %p383 = scmp.eq.s32.totalorder %s38, 3
      %p384 = por %p382, %p383
      %p385 = scmp.ne.s32.totalorder %s374, %s375
      %p386 = scmp.eq.s32.totalorder %s38, 0
      %p387 = por %p385, %p386
      %p388 = scmp.ne.s32.totalorder %s374, %s375
      %p389 = scmp.eq.s32.totalorder %s39, 3
      %p390 = por %p388, %p389
      %p392 = scmp.ne.s32.totalorder %s375, %s391
      %p393 = scmp.eq.s32.totalorder %s39, 0
      %p394 = por %p392, %p393
      %s395 = ssub.s32 %s40, %s52
      %p396 = scmp.eq.s32.totalorder %s395, 0
      %s398 = sadd.s32 %s397, 1
      %s399 = scalar_select %p396, %s397, %s398
      %p402 = pneg %p396
      %p403 = scmp.eq.s32.totalorder %s33, 3
      %p404 = por %p402, %p403
      %p405 = scmp.ne.s32.totalorder %s397, %s400
      %p406 = scmp.eq.s32.totalorder %s33, 0
      %p407 = por %p405, %p406
      %p408 = scmp.ne.s32.totalorder %s397, %s400
      %p409 = scmp.eq.s32.totalorder %s38, 3
      %p410 = por %p408, %p409
      %p411 = scmp.ne.s32.totalorder %s400, %s401
      %p412 = scmp.eq.s32.totalorder %s38, 0
      %p413 = por %p411, %p412
      %p414 = scmp.ne.s32.totalorder %s400, %s401
      %p415 = scmp.eq.s32.totalorder %s39, 3
      %p416 = por %p414, %p415
      %p418 = scmp.ne.s32.totalorder %s401, %s417
      %p419 = scmp.eq.s32.totalorder %s39, 0
      %p420 = por %p418, %p419
      %p421 = scmp.le.s32.totalorder 1, %s33
      %p422 = scmp.lt.s32.totalorder %s33, 5
      %p423 = pnand %p421, %p422
      %p424 = pneg %p423
      // Predicated region
      $region9: #{tpu_custom_call.1} parent=5 // pred_check
        _
      $region10: #{tpu_custom_call.1} parent=5 // pred_check_branch
        %426 = sbr.rel (%p423) target = $region12
      $region11: #{tpu_custom_call.1} parent=5 // pred_region
        %s427 = ssub.s32 %s33, 1
        // Predicated region
        $region13: #{tpu_custom_call.1} parent=11 // pred_check
          %p428 = pneg %p71
        $region14: #{tpu_custom_call.1} parent=11 // pred_check_branch
          %430 = sbr.rel (%p428) target = $region16
        $region15: #{tpu_custom_call.1} parent=11 // pred_region
          %s431 = smul.u32 2, %s42
          %s433 = ssub.s32 256, 256
          %434 = vsyncadd [#allocation3], %s433
          %s435 = smul.addr %s431, 128
          %s436 = scalar_lea.hbm %s0, %s435
          %s437 = sshll.u32 [#allocation2], 4
          %s438 = int_to_ptr.vmem [resolvable:$true] %s437
          %443 = dma.hbm_to_vmem [thread:$0]  %s436, 256, %s438, [#allocation3], 128, 128, 8
        $region16: #{tpu_custom_call.1} parent=11 // pred_fallthru
          _
      $region12: #{tpu_custom_call.1} parent=5 // pred_fallthru
        _
      %p444 = scmp.lt.s32.totalorder %s33, 4
      // Predicated region
      $region17: #{tpu_custom_call.1} parent=5 // pred_check
        %p445 = pneg %p444
      $region18: #{tpu_custom_call.1} parent=5 // pred_check_branch
        %447 = sbr.rel (%p445) target = $region20
      $region19: #{tpu_custom_call.1} parent=5 // pred_region
        // Predicated region
        $region21: #{tpu_custom_call.1} parent=19 // pred_check
          %p448 = pneg %p93
        $region22: #{tpu_custom_call.1} parent=19 // pred_check_branch
          %450 = sbr.rel (%p448) target = $region24
        $region23: #{tpu_custom_call.1} parent=19 // pred_region
          %s451 = sand.u32 %s33, 1
          %s452 = scalar_lea.sflag [#allocation6], %s451
          %s453 = sand.u32 %s83, 1
          %s454 = smul.addr %s453, 2
          %s455 = scalar_lea.vmem [#allocation5], %s454
          %s456 = smul.u32 2, %s40
          %s458 = ssub.s32 32, 32
          %459 = vsyncadd %s452, %s458
          %s460 = smul.addr %s41, 2
          %s461 = sadd.s32 %s456, %s460
          %s462 = smul.addr %s461, 16
          %s463 = scalar_lea.hbm %s1, %s462
          %s464 = sshll.u32 %s455, 4
          %s465 = int_to_ptr.vmem [resolvable:$true] %s464
          %470 = dma.hbm_to_vmem [thread:$0]  %s463, 32, %s465, %s452, 16, 16, 1
        $region24: #{tpu_custom_call.1} parent=19 // pred_fallthru
          _
        // Predicated region
        $region25: #{tpu_custom_call.1} parent=19 // pred_check
          %p471 = pneg %p121
        $region26: #{tpu_custom_call.1} parent=19 // pred_check_branch
          %473 = sbr.rel (%p471) target = $region28
        $region27: #{tpu_custom_call.1} parent=19 // pred_region
          %s474 = sand.u32 %s33, 1
          %s475 = scalar_lea.sflag [#allocation6], %s474
          %s476 = sand.u32 %s111, 1
          %s477 = smul.addr %s476, 2
          %s478 = scalar_lea.vmem [#allocation7], %s477
          %s479 = smul.u32 2, %s40
          %s481 = ssub.s32 32, 32
          %482 = vsyncadd %s475, %s481
          %s483 = smul.addr %s41, 2
          %s484 = sadd.s32 %s479, %s483
          %s485 = smul.addr %s484, 16
          %s486 = scalar_lea.hbm %s2, %s485
          %s487 = sshll.u32 %s478, 4
          %s488 = int_to_ptr.vmem [resolvable:$true] %s487
          %493 = dma.hbm_to_vmem [thread:$0]  %s486, 32, %s488, %s475, 16, 16, 1
        $region28: #{tpu_custom_call.1} parent=19 // pred_fallthru
          _
        // Predicated region
        $region29: #{tpu_custom_call.1} parent=19 // pred_check
          %p494 = pneg %p147
        $region30: #{tpu_custom_call.1} parent=19 // pred_check_branch
          %496 = sbr.rel (%p494) target = $region32
        $region31: #{tpu_custom_call.1} parent=19 // pred_region
          %p497 = scmp.lt.s32.totalorder %s41, 3
          %s498 = scalar_select %p497, %s41, 3
          %s499 = scalar_lea.vmem %s3, %s498
        $region32: #{tpu_custom_call.1} parent=19 // pred_fallthru
          _
        // Predicated region
        $region33: #{tpu_custom_call.1} parent=19 // pred_check
          %p500 = pneg %p173
        $region34: #{tpu_custom_call.1} parent=19 // pred_check_branch
          %502 = sbr.rel (%p500) target = $region36
        $region35: #{tpu_custom_call.1} parent=19 // pred_region
          %s503 = sand.u32 %s33, 1
          %s504 = scalar_lea.sflag [#allocation9], %s503
          %s505 = sand.u32 %s163, 1
          %s506 = scalar_lea.vmem [#allocation8], %s505
          %s508 = ssub.s32 16, 16
          %509 = vsyncadd %s504, %s508
          %s510 = smul.addr %s41, 16
          %s511 = scalar_lea.hbm %s4, %s510
          %s513 = sshll.u32 %s506, 4
          %s514 = int_to_ptr.vmem [resolvable:$true] %s513
          %516 = dma.hbm_to_vmem [thread:$0]  %s511, 16, %s514, %s504
        $region36: #{tpu_custom_call.1} parent=19 // pred_fallthru
          _
        // Predicated region
        $region37: #{tpu_custom_call.1} parent=19 // pred_check
          %p517 = pneg %p199
        $region38: #{tpu_custom_call.1} parent=19 // pred_check_branch
          %519 = sbr.rel (%p517) target = $region40
        $region39: #{tpu_custom_call.1} parent=19 // pred_region
          %s520 = sand.u32 %s33, 1
          %s521 = scalar_lea.sflag [#allocation9], %s520
          %s522 = sand.u32 %s189, 1
          %s523 = smul.addr %s522, 32
          %s524 = scalar_lea.vmem [#allocation10], %s523
          %s526 = ssub.s32 512, 512
          %527 = vsyncadd %s521, %s526
          %s528 = smul.addr %s41, 4
          %s529 = smul.addr %s528, 128
          %s530 = scalar_lea.hbm %s5, %s529
          %s531 = sshll.u32 %s524, 4
          %s532 = int_to_ptr.vmem [resolvable:$true] %s531
          %537 = dma.hbm_to_vmem [thread:$0]  %s530, 512, %s532, %s521, 128, 128, 8
        $region40: #{tpu_custom_call.1} parent=19 // pred_fallthru
          _
        // Predicated region
        $region41: #{tpu_custom_call.1} parent=19 // pred_check
          %p538 = pneg %p225
        $region42: #{tpu_custom_call.1} parent=19 // pred_check_branch
          %540 = sbr.rel (%p538) target = $region44
        $region43: #{tpu_custom_call.1} parent=19 // pred_region
          %p541 = scmp.lt.s32.totalorder %s41, 3
          %s542 = scalar_select %p541, %s41, 3
          %s543 = scalar_lea.vmem %s6, %s542
        $region44: #{tpu_custom_call.1} parent=19 // pred_fallthru
          _
        // Predicated region
        $region45: #{tpu_custom_call.1} parent=19 // pred_check
          %p544 = pneg %p251
        $region46: #{tpu_custom_call.1} parent=19 // pred_check_branch
          %546 = sbr.rel (%p544) target = $region48
        $region47: #{tpu_custom_call.1} parent=19 // pred_region
          %s547 = sand.u32 %s33, 1
          %s548 = scalar_lea.sflag [#allocation12], %s547
          %s549 = sand.u32 %s241, 1
          %s550 = smul.addr %s549, 32
          %s551 = scalar_lea.vmem [#allocation11], %s550
          %s553 = ssub.s32 512, 512
          %554 = vsyncadd %s548, %s553
          %s555 = smul.addr %s41, 4
          %s556 = smul.addr %s555, 128
          %s557 = scalar_lea.hbm %s7, %s556
          %s558 = sshll.u32 %s551, 4
          %s559 = int_to_ptr.vmem [resolvable:$true] %s558
          %564 = dma.hbm_to_vmem [thread:$0]  %s557, 512, %s559, %s548, 128, 128, 8
        $region48: #{tpu_custom_call.1} parent=19 // pred_fallthru
          _
        // Predicated region
        $region49: #{tpu_custom_call.1} parent=19 // pred_check
          %p565 = pneg %p277
        $region50: #{tpu_custom_call.1} parent=19 // pred_check_branch
          %567 = sbr.rel (%p565) target = $region52
        $region51: #{tpu_custom_call.1} parent=19 // pred_region
          %p568 = scmp.lt.s32.totalorder %s41, 3
          %s569 = scalar_select %p568, %s41, 3
          %s570 = scalar_lea.vmem %s8, %s569
        $region52: #{tpu_custom_call.1} parent=19 // pred_fallthru
          _
        // Predicated region
        $region53: #{tpu_custom_call.1} parent=19 // pred_check
          %p571 = pneg %p303
        $region54: #{tpu_custom_call.1} parent=19 // pred_check_branch
          %573 = sbr.rel (%p571) target = $region56
        $region55: #{tpu_custom_call.1} parent=19 // pred_region
          %s574 = sand.u32 %s33, 1
          %s575 = scalar_lea.sflag [#allocation12], %s574
          %s576 = sand.u32 %s293, 1
          %s577 = smul.addr %s576, 32
          %s578 = scalar_lea.vmem [#allocation13], %s577
          %s580 = ssub.s32 512, 512
          %581 = vsyncadd %s575, %s580
          %s582 = smul.addr %s41, 4
          %s583 = smul.addr %s582, 128
          %s584 = scalar_lea.hbm %s9, %s583
          %s585 = sshll.u32 %s578, 4
          %s586 = int_to_ptr.vmem [resolvable:$true] %s585
          %591 = dma.hbm_to_vmem [thread:$0]  %s584, 512, %s586, %s575, 128, 128, 8
        $region56: #{tpu_custom_call.1} parent=19 // pred_fallthru
          _
        // Predicated region
        $region57: #{tpu_custom_call.1} parent=19 // pred_check
          %p592 = pneg %p329
        $region58: #{tpu_custom_call.1} parent=19 // pred_check_branch
          %594 = sbr.rel (%p592) target = $region60
        $region59: #{tpu_custom_call.1} parent=19 // pred_region
          %p595 = scmp.lt.s32.totalorder %s41, 3
          %s596 = scalar_select %p595, %s41, 3
          %s597 = scalar_lea.vmem %s10, %s596
        $region60: #{tpu_custom_call.1} parent=19 // pred_fallthru
          _
        // Predicated region
        $region61: #{tpu_custom_call.1} parent=19 // pred_check
          %p598 = pneg %p355
        $region62: #{tpu_custom_call.1} parent=19 // pred_check_branch
          %600 = sbr.rel (%p598) target = $region64
        $region63: #{tpu_custom_call.1} parent=19 // pred_region
          %s601 = sand.u32 %s345, 1
          %s602 = scalar_lea.sflag [#allocation15], %s601
          %s603 = sand.u32 %s345, 1
          %s604 = smul.addr %s603, 32
          %s605 = scalar_lea.vmem [#allocation14], %s604
          %s607 = ssub.s32 512, 512
          %608 = vsyncadd %s602, %s607
          %s609 = smul.addr %s41, 4
          %s610 = smul.addr %s609, 128
          %s611 = scalar_lea.hbm %s11, %s610
          %s612 = sshll.u32 %s605, 4
          %s613 = int_to_ptr.vmem [resolvable:$true] %s612
          %618 = dma.hbm_to_vmem [thread:$0]  %s611, 512, %s613, %s602, 128, 128, 8
        $region64: #{tpu_custom_call.1} parent=19 // pred_fallthru
          _
        // Predicated region
        $region65: #{tpu_custom_call.1} parent=19 // pred_check
          %p619 = pneg %p381
        $region66: #{tpu_custom_call.1} parent=19 // pred_check_branch
          %621 = sbr.rel (%p619) target = $region68
        $region67: #{tpu_custom_call.1} parent=19 // pred_region
          %p622 = scmp.lt.s32.totalorder %s41, 3
          %s623 = scalar_select %p622, %s41, 3
          %s624 = scalar_lea.vmem %s12, %s623
        $region68: #{tpu_custom_call.1} parent=19 // pred_fallthru
          _
      $region20: #{tpu_custom_call.1} parent=5 // pred_fallthru
        _
      %p625 = scmp.le.s32.totalorder 1, %s33
      %p626 = scmp.lt.s32.totalorder %s33, 5
      %p627 = pnand %p625, %p626
      %p628 = pneg %p627
      // Predicated region
      $region69: #{tpu_custom_call.1} parent=5 // pred_check
        _
      $region70: #{tpu_custom_call.1} parent=5 // pred_check_branch
        %630 = sbr.rel (%p627) target = $region72
      $region71: #{tpu_custom_call.1} parent=5 // pred_region
        %s631 = ssub.s32 %s33, 1
        // Predicated region
        $region73: #{tpu_custom_call.1} parent=71 // pred_check
          %p632 = pneg %p71
        $region74: #{tpu_custom_call.1} parent=71 // pred_check_branch
          %634 = sbr.rel (%p632) target = $region76
        $region75: #{tpu_custom_call.1} parent=71 // pred_region
          %635 = dma.done [#allocation3], 256
        $region76: #{tpu_custom_call.1} parent=71 // pred_fallthru
          _
        %s636 = sand.u32 %s38, 1
        %s637 = scalar_lea.sflag [#allocation6], %s636
        %s638 = sand.u32 %s86, 1
        %s639 = smul.addr %s638, 2
        %s640 = scalar_lea.vmem [#allocation5], %s639
        // Predicated region
        $region77: #{tpu_custom_call.1} parent=71 // pred_check
          %p641 = pneg %p99
        $region78: #{tpu_custom_call.1} parent=71 // pred_check_branch
          %643 = sbr.rel (%p641) target = $region80
        $region79: #{tpu_custom_call.1} parent=71 // pred_region
          %644 = dma.done %s637, 32
        $region80: #{tpu_custom_call.1} parent=71 // pred_fallthru
          _
        %s645 = sand.u32 %s38, 1
        %s646 = scalar_lea.sflag [#allocation6], %s645
        %s647 = sand.u32 %s114, 1
        %s648 = smul.addr %s647, 2
        %s649 = scalar_lea.vmem [#allocation7], %s648
        // Predicated region
        $region81: #{tpu_custom_call.1} parent=71 // pred_check
          %p650 = pneg %p127
        $region82: #{tpu_custom_call.1} parent=71 // pred_check_branch
          %652 = sbr.rel (%p650) target = $region84
        $region83: #{tpu_custom_call.1} parent=71 // pred_region
          %653 = dma.done %s646, 32
        $region84: #{tpu_custom_call.1} parent=71 // pred_fallthru
          _
        %s654 = sand.u32 %s38, 1
        %s655 = scalar_lea.sflag [#allocation9], %s654
        %s656 = sand.u32 %s166, 1
        %s657 = scalar_lea.vmem [#allocation8], %s656
        // Predicated region
        $region85: #{tpu_custom_call.1} parent=71 // pred_check
          %p658 = pneg %p179
        $region86: #{tpu_custom_call.1} parent=71 // pred_check_branch
          %660 = sbr.rel (%p658) target = $region88
        $region87: #{tpu_custom_call.1} parent=71 // pred_region
          %661 = dma.done %s655, 16
        $region88: #{tpu_custom_call.1} parent=71 // pred_fallthru
          _
        %s662 = sand.u32 %s38, 1
        %s663 = scalar_lea.sflag [#allocation9], %s662
        %s664 = sand.u32 %s192, 1
        %s665 = smul.addr %s664, 32
        %s666 = scalar_lea.vmem [#allocation10], %s665
        // Predicated region
        $region89: #{tpu_custom_call.1} parent=71 // pred_check
          %p667 = pneg %p205
        $region90: #{tpu_custom_call.1} parent=71 // pred_check_branch
          %669 = sbr.rel (%p667) target = $region92
        $region91: #{tpu_custom_call.1} parent=71 // pred_region
          %670 = dma.done %s663, 512
        $region92: #{tpu_custom_call.1} parent=71 // pred_fallthru
          _
        %s671 = sand.u32 %s38, 1
        %s672 = scalar_lea.sflag [#allocation12], %s671
        %s673 = sand.u32 %s244, 1
        %s674 = smul.addr %s673, 32
        %s675 = scalar_lea.vmem [#allocation11], %s674
        // Predicated region
        $region93: #{tpu_custom_call.1} parent=71 // pred_check
          %p676 = pneg %p257
        $region94: #{tpu_custom_call.1} parent=71 // pred_check_branch
          %678 = sbr.rel (%p676) target = $region96
        $region95: #{tpu_custom_call.1} parent=71 // pred_region
          %679 = dma.done %s672, 512
        $region96: #{tpu_custom_call.1} parent=71 // pred_fallthru
          _
        %s680 = sand.u32 %s38, 1
        %s681 = scalar_lea.sflag [#allocation12], %s680
        %s682 = sand.u32 %s296, 1
        %s683 = smul.addr %s682, 32
        %s684 = scalar_lea.vmem [#allocation13], %s683
        // Predicated region
        $region97: #{tpu_custom_call.1} parent=71 // pred_check
          %p685 = pneg %p309
        $region98: #{tpu_custom_call.1} parent=71 // pred_check_branch
          %687 = sbr.rel (%p685) target = $region100
        $region99: #{tpu_custom_call.1} parent=71 // pred_region
          %688 = dma.done %s681, 512
        $region100: #{tpu_custom_call.1} parent=71 // pred_fallthru
          _
        %s689 = sand.u32 %s348, 1
        %s690 = scalar_lea.sflag [#allocation15], %s689
        %s691 = sand.u32 %s348, 1
        %s692 = smul.addr %s691, 32
        %s693 = scalar_lea.vmem [#allocation14], %s692
        // Predicated region
        $region101: #{tpu_custom_call.1} parent=71 // pred_check
          %p694 = pneg %p361
        $region102: #{tpu_custom_call.1} parent=71 // pred_check_branch
          %696 = sbr.rel (%p694) target = $region104
        $region103: #{tpu_custom_call.1} parent=71 // pred_region
          %697 = dma.done %s690, 512
        $region104: #{tpu_custom_call.1} parent=71 // pred_fallthru
          _
        %p698 = pneg %p71
        %p699 = pneg %p68
        %s700 = sand.u32 %s38, 1
        %s701 = scalar_lea.sflag [#allocation6], %s700
        %s702 = sand.u32 %s86, 1
        %s703 = smul.addr %s702, 2
        %s704 = scalar_lea.vmem [#allocation5], %s703
        %p705 = pneg %p99
        %p706 = pneg %p96
        %s707 = sand.u32 %s38, 1
        %s708 = scalar_lea.sflag [#allocation6], %s707
        %s709 = sand.u32 %s114, 1
        %s710 = smul.addr %s709, 2
        %s711 = scalar_lea.vmem [#allocation7], %s710
        %p712 = pneg %p127
        %p713 = pneg %p124
        %p714 = scmp.lt.s32.totalorder %s43, 3
        %s715 = scalar_select %p714, %s43, 3
        %s716 = scalar_lea.vmem %s3, %s715
        %p717 = pneg %p153
        %p718 = pneg %p150
        %s719 = sand.u32 %s38, 1
        %s720 = scalar_lea.sflag [#allocation9], %s719
        %s721 = sand.u32 %s166, 1
        %s722 = scalar_lea.vmem [#allocation8], %s721
        %p723 = pneg %p179
        %p724 = pneg %p176
        %s725 = sand.u32 %s38, 1
        %s726 = scalar_lea.sflag [#allocation9], %s725
        %s727 = sand.u32 %s192, 1
        %s728 = smul.addr %s727, 32
        %s729 = scalar_lea.vmem [#allocation10], %s728
        %p730 = pneg %p205
        %p731 = pneg %p202
        %p732 = scmp.lt.s32.totalorder %s43, 3
        %s733 = scalar_select %p732, %s43, 3
        %s734 = scalar_lea.vmem %s6, %s733
        %p735 = pneg %p231
        %p736 = pneg %p228
        %s737 = sand.u32 %s38, 1
        %s738 = scalar_lea.sflag [#allocation12], %s737
        %s739 = sand.u32 %s244, 1
        %s740 = smul.addr %s739, 32
        %s741 = scalar_lea.vmem [#allocation11], %s740
        %p742 = pneg %p257
        %p743 = pneg %p254
        %p744 = scmp.lt.s32.totalorder %s43, 3
        %s745 = scalar_select %p744, %s43, 3
        %s746 = scalar_lea.vmem %s8, %s745
        %p747 = pneg %p283
        %p748 = pneg %p280
        %s749 = sand.u32 %s38, 1
        %s750 = scalar_lea.sflag [#allocation12], %s749
        %s751 = sand.u32 %s296, 1
        %s752 = smul.addr %s751, 32
        %s753 = scalar_lea.vmem [#allocation13], %s752
        %p754 = pneg %p309
        %p755 = pneg %p306
        %p756 = scmp.lt.s32.totalorder %s43, 3
        %s757 = scalar_select %p756, %s43, 3
        %s758 = scalar_lea.vmem %s10, %s757
        %p759 = pneg %p335
        %p760 = pneg %p332
        %s761 = sand.u32 %s348, 1
        %s762 = scalar_lea.sflag [#allocation15], %s761
        %s763 = sand.u32 %s348, 1
        %s764 = smul.addr %s763, 32
        %s765 = scalar_lea.vmem [#allocation14], %s764
        %p766 = pneg %p361
        %p767 = pneg %p358
        %p768 = scmp.lt.s32.totalorder %s43, 3
        %s769 = scalar_select %p768, %s43, 3
        %s770 = scalar_lea.vmem %s12, %s769
        %p771 = pneg %p387
        %p772 = pneg %p384
        %p773 = pneg %p413
        %p774 = pneg %p410
        %s775 = smul.u32 2, %s42
        %s776 = smul.u32 2, %s42
        %s777 = smul.u32 2, %s42
        %p778 = scmp.lt.s32.totalorder %s43, 3
        %s779 = scalar_select %p778, %s43, 3
        %s780 = scalar_lea.vmem %s3, %s779
        %p781 = scmp.lt.s32.totalorder %s43, 3
        %s782 = scalar_select %p781, %s43, 3
        %s783 = scalar_lea.vmem %s6, %s782
        %p784 = scmp.lt.s32.totalorder %s43, 3
        %s785 = scalar_select %p784, %s43, 3
        %s786 = scalar_lea.vmem %s8, %s785
        %p787 = scmp.lt.s32.totalorder %s43, 3
        %s788 = scalar_select %p787, %s43, 3
        %s789 = scalar_lea.vmem %s10, %s788
        %p790 = scmp.lt.s32.totalorder %s43, 3
        %s791 = scalar_select %p790, %s43, 3
        %s792 = scalar_lea.vmem %s12, %s791
        %s793 = smul.u32 2, %s42
        %p794 = scmp.eq.s32.totalorder %s43, 0
        // Predicated region
        $region105: #{tpu_custom_call.1} parent=71 // pred_check
          %p795 = pneg %p794
        $region106: #{tpu_custom_call.1} parent=71 // pred_check_branch
          %797 = sbr.rel (%p795) target = $region108
        $region107: #{tpu_custom_call.1} parent=71 // pred_region
          %v798 = vld [vmem:[#allocation2] sm:$0xff]
          %v799 = vld [vmem:[#allocation2 + $0x8] sm:$0xff]
          %vm800 = vcmask 261120
          %801 = vst.msk [vmem:[#allocation16] sm:$0xff] %vm800, %v798
          %802 = vst.msk [vmem:[#allocation16 + $0x8] sm:$0xff] %vm800, %v799
        $region108: #{tpu_custom_call.1} parent=71 // pred_fallthru
          _
        %v803 = vld [vmem:[#allocation16] sm:$0xff]
        %v804 = vld [vmem:[#allocation16 + $0x8] sm:$0xff]
        %v805 = vld [vmem:[%s640] sm:$0x1]
        %v806 = vld [vmem:[%s640 + $0x1] sm:$0x1]
        %v807 = vld [vmem:[%s649] sm:$0x1]
        %v808 = vld [vmem:[%s649 + $0x1] sm:$0x1]
        %v809 = vld [vmem:[%s780] sm:$0x1]
        %v810 = vld [vmem:[%s657] sm:$0x1]
        %vm811 = vcmask 261120
        %v812 = vsel %vm811, %v803, 0.0
        %813 = vadd.xlane.f32.xlu0 %v812
        %v814 = vpop.xlane.xlu0 %813
        %v815 = vsel %vm811, %v804, 0.0
        %816 = vadd.xlane.f32.xlu0 %v815
        %v817 = vpop.xlane.xlu0 %816
        %v818 = vrcp.pop 32.0
        %v819 = vmul.f32 %v814, %v818
        %v820 = vmul.f32 %v817, %v818
        %v821 = vsub.f32 %v803, %v819
        %v822 = vsub.f32 %v804, %v820
        %v823 = vmul.f32 %v821, %v821
        %v824 = vmul.f32 %v822, %v822
        %v825 = vsel %vm811, %v823, 0.0
        %826 = vadd.xlane.f32.xlu0 %v825
        %v827 = vpop.xlane.xlu0 %826
        %v828 = vsel %vm811, %v824, 0.0
        %829 = vadd.xlane.f32.xlu0 %v828
        %v830 = vpop.xlane.xlu0 %829
        %v831 = vmul.f32 %v827, %v818
        %v832 = vmul.f32 %v830, %v818
        %v833 = vadd.f32 %v831, 1e-05
        %v834 = vadd.f32 %v832, 1e-05
        %v835 = vrsqrt.pop %v833
        %v836 = vrsqrt.pop %v834
        %v837 = vmul.f32 %v821, %v835
        %v838 = vmul.f32 %v822, %v836
        %v840 = vlaneseq
        %v841 = vshrl.u32 %v840, 7
        %v842 = vsub.s32 0, %v841
        %v843 = vrot.slane %v809, %v842
        %v845 = vmul.f32 %v837, %v843
        %v846 = vmul.f32 %v838, %v843
        %v848 = vlaneseq
        %v849 = vshrl.u32 %v848, 7
        %v850 = vsub.s32 0, %v849
        %v851 = vrot.slane %v810, %v850
        %v853 = vadd.f32 %v845, %v851
        %v854 = vadd.f32 %v846, %v851
        %v857 = vlaneseq
        %v858 = vshrl.u32 %v857, 7
        %v859 = vsub.s32 0, %v858
        %v860 = vrot.slane %v805, %v859
        %v861 = vlaneseq
        %v862 = vshrl.u32 %v861, 7
        %v863 = vsub.s32 0, %v862
        %v864 = vrot.slane %v806, %v863
        %v867 = vmul.f32 %v860, %v853
        %v868 = vmul.f32 %v864, %v854
        %v871 = vlaneseq
        %v872 = vshrl.u32 %v871, 7
        %v873 = vsub.s32 0, %v872
        %v874 = vrot.slane %v807, %v873
        %v875 = vlaneseq
        %v876 = vshrl.u32 %v875, 7
        %v877 = vsub.s32 0, %v876
        %v878 = vrot.slane %v808, %v877
        %v881 = vadd.f32 %v867, %v874
        %v882 = vadd.f32 %v868, %v878
        %v883 = vld [vmem:[%s666] sm:$0xff]
        %v884 = vld [vmem:[%s666 + $0x8] sm:$0xff]
        %v885 = vld [vmem:[%s666 + $0x10] sm:$0xff]
        %v886 = vld [vmem:[%s666 + $0x18] sm:$0xff]
        %v887 = vld [vmem:[%s783] sm:$0x1]
        %v889 = vlaneseq
        %v890 = vshrl.u32 %v889, 7
        %v891 = vsub.s32 0, %v890
        %v892 = vrot.slane %v887, %v891
        %v895 = vsel %vm811, %v881, 0
        %v898 = vsel %vm811, %v882, 0
        %900 = vmatprep.subr.mxu0 0.0
        %901 = vmatpush1.msra.mxu0 0.0
        %902 = vmatprep.subr.mxu0 0.0
        %903 = vmatpush1.msra.mxu0 0.0
        %904 = vmatprep.subr.mxu0 0.0
        %905 = vmatpush1.msra.mxu0 0.0
        %906 = vmatprep.subr.mxu0 0.0
        %907 = vmatpush1.msra.mxu0 0.0
        %908 = vmatprep.subr.mxu0 0.0
        %909 = vmatpush1.msra.mxu0 0.0
        %910 = vmatprep.subr.mxu0 0.0
        %911 = vmatpush1.msra.mxu0 0.0
        %912 = vmatprep.subr.mxu0 0.0
        %913 = vmatpush1.msra.mxu0 0.0
        %914 = vmatprep.subr.mxu0 0.0
        %915 = vmatpush1.msra.mxu0 0.0
        %916 = vmatprep.subr.mxu0 0.0
        %917 = vmatpush1.msra.mxu0 0.0
        %918 = vmatprep.subr.mxu0 0.0
        %919 = vmatpush1.msra.mxu0 0.0
        %920 = vmatprep.subr.mxu0 0.0
        %921 = vmatpush1.msra.mxu0 0.0
        %922 = vmatprep.subr.mxu0 0.0
        %923 = vmatpush1.msra.mxu0 0.0
        %924 = vmatprep.subr.mxu0 0.0
        %925 = vmatpush1.msra.mxu0 %v886
        %926 = vmatprep.subr.mxu0 0.0
        %927 = vmatpush1.msra.mxu0 %v885
        %928 = vmatprep.subr.mxu0 0.0
        %929 = vmatpush1.msra.mxu0 %v884
        %930 = vmatprep.subr.mxu0 0.0
        %931 = vmatpush1.msra.mxu0 %v883
        %932 = vmatprep.subr.mxu0 0.0
        %933 = vmatpush2.msra.mxu0 0.0
        %934 = vmatprep.subr.mxu0 0.0
        %935 = vmatpush2.msra.mxu0 0.0
        %936 = vmatprep.subr.mxu0 0.0
        %937 = vmatpush2.msra.mxu0 0.0
        %938 = vmatprep.subr.mxu0 0.0
        %939 = vmatpush2.msra.mxu0 0.0
        %940 = vmatprep.subr.mxu0 0.0
        %941 = vmatpush2.msra.mxu0 0.0
        %942 = vmatprep.subr.mxu0 0.0
        %943 = vmatpush2.msra.mxu0 0.0
        %944 = vmatprep.subr.mxu0 0.0
        %945 = vmatpush2.msra.mxu0 0.0
        %946 = vmatprep.subr.mxu0 0.0
        %947 = vmatpush2.msra.mxu0 0.0
        %948 = vmatprep.subr.mxu0 0.0
        %949 = vmatpush2.msra.mxu0 0.0
        %950 = vmatprep.subr.mxu0 0.0
        %951 = vmatpush2.msra.mxu0 0.0
        %952 = vmatprep.subr.mxu0 0.0
        %953 = vmatpush2.msra.mxu0 0.0
        %954 = vmatprep.subr.mxu0 0.0
        %955 = vmatpush2.msra.mxu0 0.0
        %956 = vmatprep.subr.mxu0 0.0
        %957 = vmatpush2.msra.mxu0 0.0
        %958 = vmatprep.subr.mxu0 0.0
        %959 = vmatpush2.msra.mxu0 0.0
        %960 = vmatprep.subr.mxu0 0.0
        %961 = vmatpush2.msra.mxu0 0.0
        %962 = vmatprep.subr.mxu0 0.0
        %963 = vmatpush2.msra.mxu0 0.0
        %964 = vmatprep.mubr.f32.mxu0 0.0
        %965 = vmatmul.mubr.f32.gmra.mxu0 %v895
        %v966 = vpop.f32.mrf.mxu0
        %v967 = vadd.f32 %v892, %v966
        %v968 = vpop.f32.mrf.mxu0
        %969 = vmatprep.mubr.f32.mxu0 0.0
        %970 = vmatmul.mubr.f32.gmra.mxu0 %v898
        %v971 = vpop.f32.mrf.mxu0
        %v972 = vadd.f32 %v892, %v971
        %v973 = vpop.f32.mrf.mxu0
        %974 = vdwg.mxu0
        %v975 = vld [vmem:[%s675] sm:$0xff]
        %v976 = vld [vmem:[%s675 + $0x8] sm:$0xff]
        %v977 = vld [vmem:[%s675 + $0x10] sm:$0xff]
        %v978 = vld [vmem:[%s675 + $0x18] sm:$0xff]
        %v979 = vld [vmem:[%s786] sm:$0x1]
        %v981 = vlaneseq
        %v982 = vshrl.u32 %v981, 7
        %v983 = vsub.s32 0, %v982
        %v984 = vrot.slane %v979, %v983
        %986 = vmatprep.subr.mxu0 0.0
        %987 = vmatpush1.msra.mxu0 0.0
        %988 = vmatprep.subr.mxu0 0.0
        %989 = vmatpush1.msra.mxu0 0.0
        %990 = vmatprep.subr.mxu0 0.0
        %991 = vmatpush1.msra.mxu0 0.0
        %992 = vmatprep.subr.mxu0 0.0
        %993 = vmatpush1.msra.mxu0 0.0
        %994 = vmatprep.subr.mxu0 0.0
        %995 = vmatpush1.msra.mxu0 0.0
        %996 = vmatprep.subr.mxu0 0.0
        %997 = vmatpush1.msra.mxu0 0.0
        %998 = vmatprep.subr.mxu0 0.0
        %999 = vmatpush1.msra.mxu0 0.0
        %1000 = vmatprep.subr.mxu0 0.0
        %1001 = vmatpush1.msra.mxu0 0.0
        %1002 = vmatprep.subr.mxu0 0.0
        %1003 = vmatpush1.msra.mxu0 0.0
        %1004 = vmatprep.subr.mxu0 0.0
        %1005 = vmatpush1.msra.mxu0 0.0
        %1006 = vmatprep.subr.mxu0 0.0
        %1007 = vmatpush1.msra.mxu0 0.0
        %1008 = vmatprep.subr.mxu0 0.0
        %1009 = vmatpush1.msra.mxu0 0.0
        %1010 = vmatprep.subr.mxu0 0.0
        %1011 = vmatpush1.msra.mxu0 %v978
        %1012 = vmatprep.subr.mxu0 0.0
        %1013 = vmatpush1.msra.mxu0 %v977
        %1014 = vmatprep.subr.mxu0 0.0
        %1015 = vmatpush1.msra.mxu0 %v976
        %1016 = vmatprep.subr.mxu0 0.0
        %1017 = vmatpush1.msra.mxu0 %v975
        %1018 = vmatprep.subr.mxu0 0.0
        %1019 = vmatpush2.msra.mxu0 0.0
        %1020 = vmatprep.subr.mxu0 0.0
        %1021 = vmatpush2.msra.mxu0 0.0
        %1022 = vmatprep.subr.mxu0 0.0
        %1023 = vmatpush2.msra.mxu0 0.0
        %1024 = vmatprep.subr.mxu0 0.0
        %1025 = vmatpush2.msra.mxu0 0.0
        %1026 = vmatprep.subr.mxu0 0.0
        %1027 = vmatpush2.msra.mxu0 0.0
        %1028 = vmatprep.subr.mxu0 0.0
        %1029 = vmatpush2.msra.mxu0 0.0
        %1030 = vmatprep.subr.mxu0 0.0
        %1031 = vmatpush2.msra.mxu0 0.0
        %1032 = vmatprep.subr.mxu0 0.0
        %1033 = vmatpush2.msra.mxu0 0.0
        %1034 = vmatprep.subr.mxu0 0.0
        %1035 = vmatpush2.msra.mxu0 0.0
        %1036 = vmatprep.subr.mxu0 0.0
        %1037 = vmatpush2.msra.mxu0 0.0
        %1038 = vmatprep.subr.mxu0 0.0
        %1039 = vmatpush2.msra.mxu0 0.0
        %1040 = vmatprep.subr.mxu0 0.0
        %1041 = vmatpush2.msra.mxu0 0.0
        %1042 = vmatprep.subr.mxu0 0.0
        %1043 = vmatpush2.msra.mxu0 0.0
        %1044 = vmatprep.subr.mxu0 0.0
        %1045 = vmatpush2.msra.mxu0 0.0
        %1046 = vmatprep.subr.mxu0 0.0
        %1047 = vmatpush2.msra.mxu0 0.0
        %1048 = vmatprep.subr.mxu0 0.0
        %1049 = vmatpush2.msra.mxu0 0.0
        %1050 = vmatprep.mubr.f32.mxu0 0.0
        %1051 = vmatmul.mubr.f32.gmra.mxu0 %v895
        %v1052 = vpop.f32.mrf.mxu0
        %v1053 = vadd.f32 %v984, %v1052
        %v1054 = vpop.f32.mrf.mxu0
        %1055 = vmatprep.mubr.f32.mxu0 0.0
        %1056 = vmatmul.mubr.f32.gmra.mxu0 %v898
        %v1057 = vpop.f32.mrf.mxu0
        %v1058 = vadd.f32 %v984, %v1057
        %v1059 = vpop.f32.mrf.mxu0
        %1060 = vdwg.mxu0
        %v1061 = vld [vmem:[%s684] sm:$0xff]
        %v1062 = vld [vmem:[%s684 + $0x8] sm:$0xff]
        %v1063 = vld [vmem:[%s684 + $0x10] sm:$0xff]
        %v1064 = vld [vmem:[%s684 + $0x18] sm:$0xff]
        %v1065 = vld [vmem:[%s789] sm:$0x1]
        %v1067 = vlaneseq
        %v1068 = vshrl.u32 %v1067, 7
        %v1069 = vsub.s32 0, %v1068
        %v1070 = vrot.slane %v1065, %v1069
        %1072 = vmatprep.subr.mxu0 0.0
        %1073 = vmatpush1.msra.mxu0 0.0
        %1074 = vmatprep.subr.mxu0 0.0
        %1075 = vmatpush1.msra.mxu0 0.0
        %1076 = vmatprep.subr.mxu0 0.0
        %1077 = vmatpush1.msra.mxu0 0.0
        %1078 = vmatprep.subr.mxu0 0.0
        %1079 = vmatpush1.msra.mxu0 0.0
        %1080 = vmatprep.subr.mxu0 0.0
        %1081 = vmatpush1.msra.mxu0 0.0
        %1082 = vmatprep.subr.mxu0 0.0
        %1083 = vmatpush1.msra.mxu0 0.0
        %1084 = vmatprep.subr.mxu0 0.0
        %1085 = vmatpush1.msra.mxu0 0.0
        %1086 = vmatprep.subr.mxu0 0.0
        %1087 = vmatpush1.msra.mxu0 0.0
        %1088 = vmatprep.subr.mxu0 0.0
        %1089 = vmatpush1.msra.mxu0 0.0
        %1090 = vmatprep.subr.mxu0 0.0
        %1091 = vmatpush1.msra.mxu0 0.0
        %1092 = vmatprep.subr.mxu0 0.0
        %1093 = vmatpush1.msra.mxu0 0.0
        %1094 = vmatprep.subr.mxu0 0.0
        %1095 = vmatpush1.msra.mxu0 0.0
        %1096 = vmatprep.subr.mxu0 0.0
        %1097 = vmatpush1.msra.mxu0 %v1064
        %1098 = vmatprep.subr.mxu0 0.0
        %1099 = vmatpush1.msra.mxu0 %v1063
        %1100 = vmatprep.subr.mxu0 0.0
        %1101 = vmatpush1.msra.mxu0 %v1062
        %1102 = vmatprep.subr.mxu0 0.0
        %1103 = vmatpush1.msra.mxu0 %v1061
        %1104 = vmatprep.subr.mxu0 0.0
        %1105 = vmatpush2.msra.mxu0 0.0
        %1106 = vmatprep.subr.mxu0 0.0
        %1107 = vmatpush2.msra.mxu0 0.0
        %1108 = vmatprep.subr.mxu0 0.0
        %1109 = vmatpush2.msra.mxu0 0.0
        %1110 = vmatprep.subr.mxu0 0.0
        %1111 = vmatpush2.msra.mxu0 0.0
        %1112 = vmatprep.subr.mxu0 0.0
        %1113 = vmatpush2.msra.mxu0 0.0
        %1114 = vmatprep.subr.mxu0 0.0
        %1115 = vmatpush2.msra.mxu0 0.0
        %1116 = vmatprep.subr.mxu0 0.0
        %1117 = vmatpush2.msra.mxu0 0.0
        %1118 = vmatprep.subr.mxu0 0.0
        %1119 = vmatpush2.msra.mxu0 0.0
        %1120 = vmatprep.subr.mxu0 0.0
        %1121 = vmatpush2.msra.mxu0 0.0
        %1122 = vmatprep.subr.mxu0 0.0
        %1123 = vmatpush2.msra.mxu0 0.0
        %1124 = vmatprep.subr.mxu0 0.0
        %1125 = vmatpush2.msra.mxu0 0.0
        %1126 = vmatprep.subr.mxu0 0.0
        %1127 = vmatpush2.msra.mxu0 0.0
        %1128 = vmatprep.subr.mxu0 0.0
        %1129 = vmatpush2.msra.mxu0 0.0
        %1130 = vmatprep.subr.mxu0 0.0
        %1131 = vmatpush2.msra.mxu0 0.0
        %1132 = vmatprep.subr.mxu0 0.0
        %1133 = vmatpush2.msra.mxu0 0.0
        %1134 = vmatprep.subr.mxu0 0.0
        %1135 = vmatpush2.msra.mxu0 0.0
        %1136 = vmatprep.mubr.f32.mxu0 0.0
        %1137 = vmatmul.mubr.f32.gmra.mxu0 %v895
        %v1138 = vpop.f32.mrf.mxu0
        %v1139 = vadd.f32 %v1070, %v1138
        %v1140 = vpop.f32.mrf.mxu0
        %1141 = vmatprep.mubr.f32.mxu0 0.0
        %1142 = vmatmul.mubr.f32.gmra.mxu0 %v898
        %v1143 = vpop.f32.mrf.mxu0
        %v1144 = vadd.f32 %v1070, %v1143
        %v1145 = vpop.f32.mrf.mxu0
        %1146 = vdwg.mxu0
        %vm1147 = vcmask 64512
        %v1149 = vsel %vm1147, %v967, 0
        %v1152 = vsel %vm1147, %v1053, 0
        %1154 = vmatprep.subr.mxu0 0.0
        %1155 = vmatpush1.xpose.msra.mxu0 0.0
        %1156 = vmatprep.subr.mxu0 0.0
        %1157 = vmatpush1.xpose.msra.mxu0 0.0
        %1158 = vmatprep.subr.mxu0 0.0
        %1159 = vmatpush1.xpose.msra.mxu0 0.0
        %1160 = vmatprep.subr.mxu0 0.0
        %1161 = vmatpush1.xpose.msra.mxu0 0.0
        %1162 = vmatprep.subr.mxu0 0.0
        %1163 = vmatpush1.xpose.msra.mxu0 0.0
        %1164 = vmatprep.subr.mxu0 0.0
        %1165 = vmatpush1.xpose.msra.mxu0 0.0
        %1166 = vmatprep.subr.mxu0 0.0
        %1167 = vmatpush1.xpose.msra.mxu0 0.0
        %1168 = vmatprep.subr.mxu0 0.0
        %1169 = vmatpush1.xpose.msra.mxu0 0.0
        %1170 = vmatprep.subr.mxu0 0.0
        %1171 = vmatpush1.xpose.msra.mxu0 0.0
        %1172 = vmatprep.subr.mxu0 0.0
        %1173 = vmatpush1.xpose.msra.mxu0 0.0
        %1174 = vmatprep.subr.mxu0 0.0
        %1175 = vmatpush1.xpose.msra.mxu0 0.0
        %1176 = vmatprep.subr.mxu0 0.0
        %1177 = vmatpush1.xpose.msra.mxu0 0.0
        %1178 = vmatprep.subr.mxu0 0.0
        %1179 = vmatpush1.xpose.msra.mxu0 0.0
        %1180 = vmatprep.subr.mxu0 0.0
        %1181 = vmatpush1.xpose.msra.mxu0 0.0
        %1182 = vmatprep.subr.mxu0 0.0
        %1183 = vmatpush1.xpose.msra.mxu0 0.0
        %1184 = vmatprep.subr.mxu0 0.0
        %1185 = vmatpush1.xpose.msra.mxu0 %v1152
        %1186 = vmatprep.subr.mxu0 0.0
        %1187 = vmatpush2.xpose.msra.mxu0 0.0
        %1188 = vmatprep.subr.mxu0 0.0
        %1189 = vmatpush2.xpose.msra.mxu0 0.0
        %1190 = vmatprep.subr.mxu0 0.0
        %1191 = vmatpush2.xpose.msra.mxu0 0.0
        %1192 = vmatprep.subr.mxu0 0.0
        %1193 = vmatpush2.xpose.msra.mxu0 0.0
        %1194 = vmatprep.subr.mxu0 0.0
        %1195 = vmatpush2.xpose.msra.mxu0 0.0
        %1196 = vmatprep.subr.mxu0 0.0
        %1197 = vmatpush2.xpose.msra.mxu0 0.0
        %1198 = vmatprep.subr.mxu0 0.0
        %1199 = vmatpush2.xpose.msra.mxu0 0.0
        %1200 = vmatprep.subr.mxu0 0.0
        %1201 = vmatpush2.xpose.msra.mxu0 0.0
        %1202 = vmatprep.subr.mxu0 0.0
        %1203 = vmatpush2.xpose.msra.mxu0 0.0
        %1204 = vmatprep.subr.mxu0 0.0
        %1205 = vmatpush2.xpose.msra.mxu0 0.0
        %1206 = vmatprep.subr.mxu0 0.0
        %1207 = vmatpush2.xpose.msra.mxu0 0.0
        %1208 = vmatprep.subr.mxu0 0.0
        %1209 = vmatpush2.xpose.msra.mxu0 0.0
        %1210 = vmatprep.subr.mxu0 0.0
        %1211 = vmatpush2.xpose.msra.mxu0 0.0
        %1212 = vmatprep.subr.mxu0 0.0
        %1213 = vmatpush2.xpose.msra.mxu0 0.0
        %1214 = vmatprep.subr.mxu0 0.0
        %1215 = vmatpush2.xpose.msra.mxu0 0.0
        %1216 = vmatprep.subr.mxu0 0.0
        %1217 = vmatpush2.xpose.msra.mxu0 0.0
        %1218 = vmatprep.mubr.f32.mxu0 0.0
        %1219 = vmatmul.mubr.f32.gmra.mxu0 %v1149
        %v1220 = vpop.f32.mrf.mxu0
        %v1221 = vadd.f32 0.0, %v1220
        %v1222 = vpop.f32.mrf.mxu0
        %1223 = vdwg.mxu0
        %v1225 = vsel %vm1147, %v972, 0
        %v1228 = vsel %vm1147, %v1058, 0
        %1230 = vmatprep.subr.mxu0 0.0
        %1231 = vmatpush1.xpose.msra.mxu0 0.0
        %1232 = vmatprep.subr.mxu0 0.0
        %1233 = vmatpush1.xpose.msra.mxu0 0.0
        %1234 = vmatprep.subr.mxu0 0.0
        %1235 = vmatpush1.xpose.msra.mxu0 0.0
        %1236 = vmatprep.subr.mxu0 0.0
        %1237 = vmatpush1.xpose.msra.mxu0 0.0
        %1238 = vmatprep.subr.mxu0 0.0
        %1239 = vmatpush1.xpose.msra.mxu0 0.0
        %1240 = vmatprep.subr.mxu0 0.0
        %1241 = vmatpush1.xpose.msra.mxu0 0.0
        %1242 = vmatprep.subr.mxu0 0.0
        %1243 = vmatpush1.xpose.msra.mxu0 0.0
        %1244 = vmatprep.subr.mxu0 0.0
        %1245 = vmatpush1.xpose.msra.mxu0 0.0
        %1246 = vmatprep.subr.mxu0 0.0
        %1247 = vmatpush1.xpose.msra.mxu0 0.0
        %1248 = vmatprep.subr.mxu0 0.0
        %1249 = vmatpush1.xpose.msra.mxu0 0.0
        %1250 = vmatprep.subr.mxu0 0.0
        %1251 = vmatpush1.xpose.msra.mxu0 0.0
        %1252 = vmatprep.subr.mxu0 0.0
        %1253 = vmatpush1.xpose.msra.mxu0 0.0
        %1254 = vmatprep.subr.mxu0 0.0
        %1255 = vmatpush1.xpose.msra.mxu0 0.0
        %1256 = vmatprep.subr.mxu0 0.0
        %1257 = vmatpush1.xpose.msra.mxu0 0.0
        %1258 = vmatprep.subr.mxu0 0.0
        %1259 = vmatpush1.xpose.msra.mxu0 0.0
        %1260 = vmatprep.subr.mxu0 0.0
        %1261 = vmatpush1.xpose.msra.mxu0 %v1228
        %1262 = vmatprep.subr.mxu0 0.0
        %1263 = vmatpush2.xpose.msra.mxu0 0.0
        %1264 = vmatprep.subr.mxu0 0.0
        %1265 = vmatpush2.xpose.msra.mxu0 0.0
        %1266 = vmatprep.subr.mxu0 0.0
        %1267 = vmatpush2.xpose.msra.mxu0 0.0
        %1268 = vmatprep.subr.mxu0 0.0
        %1269 = vmatpush2.xpose.msra.mxu0 0.0
        %1270 = vmatprep.subr.mxu0 0.0
        %1271 = vmatpush2.xpose.msra.mxu0 0.0
        %1272 = vmatprep.subr.mxu0 0.0
        %1273 = vmatpush2.xpose.msra.mxu0 0.0
        %1274 = vmatprep.subr.mxu0 0.0
        %1275 = vmatpush2.xpose.msra.mxu0 0.0
        %1276 = vmatprep.subr.mxu0 0.0
        %1277 = vmatpush2.xpose.msra.mxu0 0.0
        %1278 = vmatprep.subr.mxu0 0.0
        %1279 = vmatpush2.xpose.msra.mxu0 0.0
        %1280 = vmatprep.subr.mxu0 0.0
        %1281 = vmatpush2.xpose.msra.mxu0 0.0
        %1282 = vmatprep.subr.mxu0 0.0
        %1283 = vmatpush2.xpose.msra.mxu0 0.0
        %1284 = vmatprep.subr.mxu0 0.0
        %1285 = vmatpush2.xpose.msra.mxu0 0.0
        %1286 = vmatprep.subr.mxu0 0.0
        %1287 = vmatpush2.xpose.msra.mxu0 0.0
        %1288 = vmatprep.subr.mxu0 0.0
        %1289 = vmatpush2.xpose.msra.mxu0 0.0
        %1290 = vmatprep.subr.mxu0 0.0
        %1291 = vmatpush2.xpose.msra.mxu0 0.0
        %1292 = vmatprep.subr.mxu0 0.0
        %1293 = vmatpush2.xpose.msra.mxu0 0.0
        %1294 = vmatprep.mubr.f32.mxu0 0.0
        %1295 = vmatmul.mubr.f32.gmra.mxu0 %v1225
        %v1296 = vpop.f32.mrf.mxu0
        %v1297 = vadd.f32 0.0, %v1296
        %v1298 = vpop.f32.mrf.mxu0
        %1299 = vdwg.mxu0
        %v1300 = vsel %vm1147, %v1221, -inf
        %1301 = vmax.xlane.f32.xlu0 %v1300
        %v1302 = vpop.xlane.xlu0 %1301
        %v1303 = vsel %vm1147, %v1297, -inf
        %1304 = vmax.xlane.f32.xlu0 %v1303
        %v1305 = vpop.xlane.xlu0 %1304
        %v1306 = vsub.f32 %v1221, %v1302
        %v1307 = vsub.f32 %v1297, %v1305
        %v1308 = vmul.f32 %v1306, 1.442695
        %v1309 = vpow.pop %v1308
        %v1310 = vmul.f32 %v1307, 1.442695
        %v1311 = vpow.pop %v1310
        %v1312 = vsel %vm1147, %v1309, 0.0
        %1313 = vadd.xlane.f32.xlu0 %v1312
        %v1314 = vpop.xlane.xlu0 %1313
        %v1315 = vsel %vm1147, %v1311, 0.0
        %1316 = vadd.xlane.f32.xlu0 %v1315
        %v1317 = vpop.xlane.xlu0 %1316
        %v1318 = vrcp.pop %v1314
        %v1319 = vmul.f32 %v1309, %v1318
        %v1320 = vrcp.pop %v1317
        %v1321 = vmul.f32 %v1311, %v1320
        %v1323 = vsel %vm1147, %v1319, 0
        %1325 = vmatprep.subr.mxu0 0.0
        %1326 = vmatpush1.msra.mxu0 0.0
        %1327 = vmatprep.subr.mxu0 0.0
        %1328 = vmatpush1.msra.mxu0 0.0
        %1329 = vmatprep.subr.mxu0 0.0
        %1330 = vmatpush1.msra.mxu0 0.0
        %1331 = vmatprep.subr.mxu0 0.0
        %1332 = vmatpush1.msra.mxu0 0.0
        %1333 = vmatprep.subr.mxu0 0.0
        %1334 = vmatpush1.msra.mxu0 0.0
        %1335 = vmatprep.subr.mxu0 0.0
        %1336 = vmatpush1.msra.mxu0 0.0
        %1337 = vmatprep.subr.mxu0 0.0
        %1338 = vmatpush1.msra.mxu0 0.0
        %1339 = vmatprep.subr.mxu0 0.0
        %1340 = vmatpush1.msra.mxu0 0.0
        %1341 = vmatprep.subr.mxu0 0.0
        %1342 = vmatpush1.msra.mxu0 0.0
        %1343 = vmatprep.subr.mxu0 0.0
        %1344 = vmatpush1.msra.mxu0 0.0
        %1345 = vmatprep.subr.mxu0 0.0
        %1346 = vmatpush1.msra.mxu0 0.0
        %1347 = vmatprep.subr.mxu0 0.0
        %1348 = vmatpush1.msra.mxu0 0.0
        %1349 = vmatprep.subr.mxu0 0.0
        %1350 = vmatpush1.msra.mxu0 0.0
        %1351 = vmatprep.subr.mxu0 0.0
        %1352 = vmatpush1.msra.mxu0 0.0
        %1353 = vmatprep.subr.mxu0 0.0
        %1354 = vmatpush1.msra.mxu0 0.0
        %1355 = vmatprep.subr.mxu0 0.0
        %1356 = vmatpush1.msra.mxu0 %v1139
        %1357 = vmatprep.subr.mxu0 0.0
        %1358 = vmatpush2.msra.mxu0 0.0
        %1359 = vmatprep.subr.mxu0 0.0
        %1360 = vmatpush2.msra.mxu0 0.0
        %1361 = vmatprep.subr.mxu0 0.0
        %1362 = vmatpush2.msra.mxu0 0.0
        %1363 = vmatprep.subr.mxu0 0.0
        %1364 = vmatpush2.msra.mxu0 0.0
        %1365 = vmatprep.subr.mxu0 0.0
        %1366 = vmatpush2.msra.mxu0 0.0
        %1367 = vmatprep.subr.mxu0 0.0
        %1368 = vmatpush2.msra.mxu0 0.0
        %1369 = vmatprep.subr.mxu0 0.0
        %1370 = vmatpush2.msra.mxu0 0.0
        %1371 = vmatprep.subr.mxu0 0.0
        %1372 = vmatpush2.msra.mxu0 0.0
        %1373 = vmatprep.subr.mxu0 0.0
        %1374 = vmatpush2.msra.mxu0 0.0
        %1375 = vmatprep.subr.mxu0 0.0
        %1376 = vmatpush2.msra.mxu0 0.0
        %1377 = vmatprep.subr.mxu0 0.0
        %1378 = vmatpush2.msra.mxu0 0.0
        %1379 = vmatprep.subr.mxu0 0.0
        %1380 = vmatpush2.msra.mxu0 0.0
        %1381 = vmatprep.subr.mxu0 0.0
        %1382 = vmatpush2.msra.mxu0 0.0
        %1383 = vmatprep.subr.mxu0 0.0
        %1384 = vmatpush2.msra.mxu0 0.0
        %1385 = vmatprep.subr.mxu0 0.0
        %1386 = vmatpush2.msra.mxu0 0.0
        %1387 = vmatprep.subr.mxu0 0.0
        %1388 = vmatpush2.msra.mxu0 0.0
        %1389 = vmatprep.mubr.f32.mxu0 0.0
        %1390 = vmatmul.mubr.f32.gmra.mxu0 %v1323
        %v1391 = vpop.f32.mrf.mxu0
        %v1392 = vadd.f32 0.0, %v1391
        %v1393 = vpop.f32.mrf.mxu0
        %1394 = vdwg.mxu0
        %v1396 = vsel %vm1147, %v1321, 0
        %1398 = vmatprep.subr.mxu0 0.0
        %1399 = vmatpush1.msra.mxu0 0.0
        %1400 = vmatprep.subr.mxu0 0.0
        %1401 = vmatpush1.msra.mxu0 0.0
        %1402 = vmatprep.subr.mxu0 0.0
        %1403 = vmatpush1.msra.mxu0 0.0
        %1404 = vmatprep.subr.mxu0 0.0
        %1405 = vmatpush1.msra.mxu0 0.0
        %1406 = vmatprep.subr.mxu0 0.0
        %1407 = vmatpush1.msra.mxu0 0.0
        %1408 = vmatprep.subr.mxu0 0.0
        %1409 = vmatpush1.msra.mxu0 0.0
        %1410 = vmatprep.subr.mxu0 0.0
        %1411 = vmatpush1.msra.mxu0 0.0
        %1412 = vmatprep.subr.mxu0 0.0
        %1413 = vmatpush1.msra.mxu0 0.0
        %1414 = vmatprep.subr.mxu0 0.0
        %1415 = vmatpush1.msra.mxu0 0.0
        %1416 = vmatprep.subr.mxu0 0.0
        %1417 = vmatpush1.msra.mxu0 0.0
        %1418 = vmatprep.subr.mxu0 0.0
        %1419 = vmatpush1.msra.mxu0 0.0
        %1420 = vmatprep.subr.mxu0 0.0
        %1421 = vmatpush1.msra.mxu0 0.0
        %1422 = vmatprep.subr.mxu0 0.0
        %1423 = vmatpush1.msra.mxu0 0.0
        %1424 = vmatprep.subr.mxu0 0.0
        %1425 = vmatpush1.msra.mxu0 0.0
        %1426 = vmatprep.subr.mxu0 0.0
        %1427 = vmatpush1.msra.mxu0 0.0
        %1428 = vmatprep.subr.mxu0 0.0
        %1429 = vmatpush1.msra.mxu0 %v1144
        %1430 = vmatprep.subr.mxu0 0.0
        %1431 = vmatpush2.msra.mxu0 0.0
        %1432 = vmatprep.subr.mxu0 0.0
        %1433 = vmatpush2.msra.mxu0 0.0
        %1434 = vmatprep.subr.mxu0 0.0
        %1435 = vmatpush2.msra.mxu0 0.0
        %1436 = vmatprep.subr.mxu0 0.0
        %1437 = vmatpush2.msra.mxu0 0.0
        %1438 = vmatprep.subr.mxu0 0.0
        %1439 = vmatpush2.msra.mxu0 0.0
        %1440 = vmatprep.subr.mxu0 0.0
        %1441 = vmatpush2.msra.mxu0 0.0
        %1442 = vmatprep.subr.mxu0 0.0
        %1443 = vmatpush2.msra.mxu0 0.0
        %1444 = vmatprep.subr.mxu0 0.0
        %1445 = vmatpush2.msra.mxu0 0.0
        %1446 = vmatprep.subr.mxu0 0.0
        %1447 = vmatpush2.msra.mxu0 0.0
        %1448 = vmatprep.subr.mxu0 0.0
        %1449 = vmatpush2.msra.mxu0 0.0
        %1450 = vmatprep.subr.mxu0 0.0
        %1451 = vmatpush2.msra.mxu0 0.0
        %1452 = vmatprep.subr.mxu0 0.0
        %1453 = vmatpush2.msra.mxu0 0.0
        %1454 = vmatprep.subr.mxu0 0.0
        %1455 = vmatpush2.msra.mxu0 0.0
        %1456 = vmatprep.subr.mxu0 0.0
        %1457 = vmatpush2.msra.mxu0 0.0
        %1458 = vmatprep.subr.mxu0 0.0
        %1459 = vmatpush2.msra.mxu0 0.0
        %1460 = vmatprep.subr.mxu0 0.0
        %1461 = vmatpush2.msra.mxu0 0.0
        %1462 = vmatprep.mubr.f32.mxu0 0.0
        %1463 = vmatmul.mubr.f32.gmra.mxu0 %v1396
        %v1464 = vpop.f32.mrf.mxu0
        %v1465 = vadd.f32 0.0, %v1464
        %v1466 = vpop.f32.mrf.mxu0
        %1467 = vdwg.mxu0
        %v1468 = vld [vmem:[%s693] sm:$0xff]
        %1469 = vrot.lane.b32.xlu0 %v967, 120
        %v1470 = vpop.permute.xlu0 %1469
        %1471 = vrot.lane.b32.xlu0 %v1053, 120
        %v1472 = vpop.permute.xlu0 %1471
        %v1473 = vsel %vm1147, %v1470, 0
        %v1475 = vsel %vm1147, %v1472, 0
        %1477 = vmatprep.subr.mxu0 0.0
        %1478 = vmatpush1.xpose.msra.mxu0 0.0
        %1479 = vmatprep.subr.mxu0 0.0
        %1480 = vmatpush1.xpose.msra.mxu0 0.0
        %1481 = vmatprep.subr.mxu0 0.0
        %1482 = vmatpush1.xpose.msra.mxu0 0.0
        %1483 = vmatprep.subr.mxu0 0.0
        %1484 = vmatpush1.xpose.msra.mxu0 0.0
        %1485 = vmatprep.subr.mxu0 0.0
        %1486 = vmatpush1.xpose.msra.mxu0 0.0
        %1487 = vmatprep.subr.mxu0 0.0
        %1488 = vmatpush1.xpose.msra.mxu0 0.0
        %1489 = vmatprep.subr.mxu0 0.0
        %1490 = vmatpush1.xpose.msra.mxu0 0.0
        %1491 = vmatprep.subr.mxu0 0.0
        %1492 = vmatpush1.xpose.msra.mxu0 0.0
        %1493 = vmatprep.subr.mxu0 0.0
        %1494 = vmatpush1.xpose.msra.mxu0 0.0
        %1495 = vmatprep.subr.mxu0 0.0
        %1496 = vmatpush1.xpose.msra.mxu0 0.0
        %1497 = vmatprep.subr.mxu0 0.0
        %1498 = vmatpush1.xpose.msra.mxu0 0.0
        %1499 = vmatprep.subr.mxu0 0.0
        %1500 = vmatpush1.xpose.msra.mxu0 0.0
        %1501 = vmatprep.subr.mxu0 0.0
        %1502 = vmatpush1.xpose.msra.mxu0 0.0
        %1503 = vmatprep.subr.mxu0 0.0
        %1504 = vmatpush1.xpose.msra.mxu0 0.0
        %1505 = vmatprep.subr.mxu0 0.0
        %1506 = vmatpush1.xpose.msra.mxu0 0.0
        %1507 = vmatprep.subr.mxu0 0.0
        %1508 = vmatpush1.xpose.msra.mxu0 %v1475
        %1509 = vmatprep.subr.mxu0 0.0
        %1510 = vmatpush2.xpose.msra.mxu0 0.0
        %1511 = vmatprep.subr.mxu0 0.0
        %1512 = vmatpush2.xpose.msra.mxu0 0.0
        %1513 = vmatprep.subr.mxu0 0.0
        %1514 = vmatpush2.xpose.msra.mxu0 0.0
        %1515 = vmatprep.subr.mxu0 0.0
        %1516 = vmatpush2.xpose.msra.mxu0 0.0
        %1517 = vmatprep.subr.mxu0 0.0
        %1518 = vmatpush2.xpose.msra.mxu0 0.0
        %1519 = vmatprep.subr.mxu0 0.0
        %1520 = vmatpush2.xpose.msra.mxu0 0.0
        %1521 = vmatprep.subr.mxu0 0.0
        %1522 = vmatpush2.xpose.msra.mxu0 0.0
        %1523 = vmatprep.subr.mxu0 0.0
        %1524 = vmatpush2.xpose.msra.mxu0 0.0
        %1525 = vmatprep.subr.mxu0 0.0
        %1526 = vmatpush2.xpose.msra.mxu0 0.0
        %1527 = vmatprep.subr.mxu0 0.0
        %1528 = vmatpush2.xpose.msra.mxu0 0.0
        %1529 = vmatprep.subr.mxu0 0.0
        %1530 = vmatpush2.xpose.msra.mxu0 0.0
        %1531 = vmatprep.subr.mxu0 0.0
        %1532 = vmatpush2.xpose.msra.mxu0 0.0
        %1533 = vmatprep.subr.mxu0 0.0
        %1534 = vmatpush2.xpose.msra.mxu0 0.0
        %1535 = vmatprep.subr.mxu0 0.0
        %1536 = vmatpush2.xpose.msra.mxu0 0.0
        %1537 = vmatprep.subr.mxu0 0.0
        %1538 = vmatpush2.xpose.msra.mxu0 0.0
        %1539 = vmatprep.subr.mxu0 0.0
        %1540 = vmatpush2.xpose.msra.mxu0 0.0
        %1541 = vmatprep.mubr.f32.mxu0 0.0
        %1542 = vmatmul.mubr.f32.gmra.mxu0 %v1473
        %v1543 = vpop.f32.mrf.mxu0
        %v1544 = vadd.f32 0.0, %v1543
        %v1545 = vpop.f32.mrf.mxu0
        %1546 = vdwg.mxu0
        %1547 = vrot.lane.b32.xlu0 %v972, 120
        %v1548 = vpop.permute.xlu0 %1547
        %1549 = vrot.lane.b32.xlu0 %v1058, 120
        %v1550 = vpop.permute.xlu0 %1549
        %v1551 = vsel %vm1147, %v1548, 0
        %v1553 = vsel %vm1147, %v1550, 0
        %1555 = vmatprep.subr.mxu0 0.0
        %1556 = vmatpush1.xpose.msra.mxu0 0.0
        %1557 = vmatprep.subr.mxu0 0.0
        %1558 = vmatpush1.xpose.msra.mxu0 0.0
        %1559 = vmatprep.subr.mxu0 0.0
        %1560 = vmatpush1.xpose.msra.mxu0 0.0
        %1561 = vmatprep.subr.mxu0 0.0
        %1562 = vmatpush1.xpose.msra.mxu0 0.0
        %1563 = vmatprep.subr.mxu0 0.0
        %1564 = vmatpush1.xpose.msra.mxu0 0.0
        %1565 = vmatprep.subr.mxu0 0.0
        %1566 = vmatpush1.xpose.msra.mxu0 0.0
        %1567 = vmatprep.subr.mxu0 0.0
        %1568 = vmatpush1.xpose.msra.mxu0 0.0
        %1569 = vmatprep.subr.mxu0 0.0
        %1570 = vmatpush1.xpose.msra.mxu0 0.0
        %1571 = vmatprep.subr.mxu0 0.0
        %1572 = vmatpush1.xpose.msra.mxu0 0.0
        %1573 = vmatprep.subr.mxu0 0.0
        %1574 = vmatpush1.xpose.msra.mxu0 0.0
        %1575 = vmatprep.subr.mxu0 0.0
        %1576 = vmatpush1.xpose.msra.mxu0 0.0
        %1577 = vmatprep.subr.mxu0 0.0
        %1578 = vmatpush1.xpose.msra.mxu0 0.0
        %1579 = vmatprep.subr.mxu0 0.0
        %1580 = vmatpush1.xpose.msra.mxu0 0.0
        %1581 = vmatprep.subr.mxu0 0.0
        %1582 = vmatpush1.xpose.msra.mxu0 0.0
        %1583 = vmatprep.subr.mxu0 0.0
        %1584 = vmatpush1.xpose.msra.mxu0 0.0
        %1585 = vmatprep.subr.mxu0 0.0
        %1586 = vmatpush1.xpose.msra.mxu0 %v1553
        %1587 = vmatprep.subr.mxu0 0.0
        %1588 = vmatpush2.xpose.msra.mxu0 0.0
        %1589 = vmatprep.subr.mxu0 0.0
        %1590 = vmatpush2.xpose.msra.mxu0 0.0
        %1591 = vmatprep.subr.mxu0 0.0
        %1592 = vmatpush2.xpose.msra.mxu0 0.0
        %1593 = vmatprep.subr.mxu0 0.0
        %1594 = vmatpush2.xpose.msra.mxu0 0.0
        %1595 = vmatprep.subr.mxu0 0.0
        %1596 = vmatpush2.xpose.msra.mxu0 0.0
        %1597 = vmatprep.subr.mxu0 0.0
        %1598 = vmatpush2.xpose.msra.mxu0 0.0
        %1599 = vmatprep.subr.mxu0 0.0
        %1600 = vmatpush2.xpose.msra.mxu0 0.0
        %1601 = vmatprep.subr.mxu0 0.0
        %1602 = vmatpush2.xpose.msra.mxu0 0.0
        %1603 = vmatprep.subr.mxu0 0.0
        %1604 = vmatpush2.xpose.msra.mxu0 0.0
        %1605 = vmatprep.subr.mxu0 0.0
        %1606 = vmatpush2.xpose.msra.mxu0 0.0
        %1607 = vmatprep.subr.mxu0 0.0
        %1608 = vmatpush2.xpose.msra.mxu0 0.0
        %1609 = vmatprep.subr.mxu0 0.0
        %1610 = vmatpush2.xpose.msra.mxu0 0.0
        %1611 = vmatprep.subr.mxu0 0.0
        %1612 = vmatpush2.xpose.msra.mxu0 0.0
        %1613 = vmatprep.subr.mxu0 0.0
        %1614 = vmatpush2.xpose.msra.mxu0 0.0
        %1615 = vmatprep.subr.mxu0 0.0
        %1616 = vmatpush2.xpose.msra.mxu0 0.0
        %1617 = vmatprep.subr.mxu0 0.0
        %1618 = vmatpush2.xpose.msra.mxu0 0.0
        %1619 = vmatprep.mubr.f32.mxu0 0.0
        %1620 = vmatmul.mubr.f32.gmra.mxu0 %v1551
        %v1621 = vpop.f32.mrf.mxu0
        %v1622 = vadd.f32 0.0, %v1621
        %v1623 = vpop.f32.mrf.mxu0
        %1624 = vdwg.mxu0
        %v1625 = vsel %vm1147, %v1544, -inf
        %1626 = vmax.xlane.f32.xlu0 %v1625
        %v1627 = vpop.xlane.xlu0 %1626
        %v1628 = vsel %vm1147, %v1622, -inf
        %1629 = vmax.xlane.f32.xlu0 %v1628
        %v1630 = vpop.xlane.xlu0 %1629
        %v1631 = vsub.f32 %v1544, %v1627
        %v1632 = vsub.f32 %v1622, %v1630
        %v1633 = vmul.f32 %v1631, 1.442695
        %v1634 = vpow.pop %v1633
        %v1635 = vmul.f32 %v1632, 1.442695
        %v1636 = vpow.pop %v1635
        %v1637 = vsel %vm1147, %v1634, 0.0
        %1638 = vadd.xlane.f32.xlu0 %v1637
        %v1639 = vpop.xlane.xlu0 %1638
        %v1640 = vsel %vm1147, %v1636, 0.0
        %1641 = vadd.xlane.f32.xlu0 %v1640
        %v1642 = vpop.xlane.xlu0 %1641
        %v1643 = vrcp.pop %v1639
        %v1644 = vmul.f32 %v1634, %v1643
        %v1645 = vrcp.pop %v1642
        %v1646 = vmul.f32 %v1636, %v1645
        %1648 = vrot.lane.b32.xlu0 %v1139, 120
        %v1649 = vpop.permute.xlu0 %1648
        %v1652 = vsel %vm1147, %v1644, 0
        %1654 = vmatprep.subr.mxu0 0.0
        %1655 = vmatpush1.msra.mxu0 0.0
        %1656 = vmatprep.subr.mxu0 0.0
        %1657 = vmatpush1.msra.mxu0 0.0
        %1658 = vmatprep.subr.mxu0 0.0
        %1659 = vmatpush1.msra.mxu0 0.0
        %1660 = vmatprep.subr.mxu0 0.0
        %1661 = vmatpush1.msra.mxu0 0.0
        %1662 = vmatprep.subr.mxu0 0.0
        %1663 = vmatpush1.msra.mxu0 0.0
        %1664 = vmatprep.subr.mxu0 0.0
        %1665 = vmatpush1.msra.mxu0 0.0
        %1666 = vmatprep.subr.mxu0 0.0
        %1667 = vmatpush1.msra.mxu0 0.0
        %1668 = vmatprep.subr.mxu0 0.0
        %1669 = vmatpush1.msra.mxu0 0.0
        %1670 = vmatprep.subr.mxu0 0.0
        %1671 = vmatpush1.msra.mxu0 0.0
        %1672 = vmatprep.subr.mxu0 0.0
        %1673 = vmatpush1.msra.mxu0 0.0
        %1674 = vmatprep.subr.mxu0 0.0
        %1675 = vmatpush1.msra.mxu0 0.0
        %1676 = vmatprep.subr.mxu0 0.0
        %1677 = vmatpush1.msra.mxu0 0.0
        %1678 = vmatprep.subr.mxu0 0.0
        %1679 = vmatpush1.msra.mxu0 0.0
        %1680 = vmatprep.subr.mxu0 0.0
        %1681 = vmatpush1.msra.mxu0 0.0
        %1682 = vmatprep.subr.mxu0 0.0
        %1683 = vmatpush1.msra.mxu0 0.0
        %1684 = vmatprep.subr.mxu0 0.0
        %1685 = vmatpush1.msra.mxu0 %v1649
        %1686 = vmatprep.subr.mxu0 0.0
        %1687 = vmatpush2.msra.mxu0 0.0
        %1688 = vmatprep.subr.mxu0 0.0
        %1689 = vmatpush2.msra.mxu0 0.0
        %1690 = vmatprep.subr.mxu0 0.0
        %1691 = vmatpush2.msra.mxu0 0.0
        %1692 = vmatprep.subr.mxu0 0.0
        %1693 = vmatpush2.msra.mxu0 0.0
        %1694 = vmatprep.subr.mxu0 0.0
        %1695 = vmatpush2.msra.mxu0 0.0
        %1696 = vmatprep.subr.mxu0 0.0
        %1697 = vmatpush2.msra.mxu0 0.0
        %1698 = vmatprep.subr.mxu0 0.0
        %1699 = vmatpush2.msra.mxu0 0.0
        %1700 = vmatprep.subr.mxu0 0.0
        %1701 = vmatpush2.msra.mxu0 0.0
        %1702 = vmatprep.subr.mxu0 0.0
        %1703 = vmatpush2.msra.mxu0 0.0
        %1704 = vmatprep.subr.mxu0 0.0
        %1705 = vmatpush2.msra.mxu0 0.0
        %1706 = vmatprep.subr.mxu0 0.0
        %1707 = vmatpush2.msra.mxu0 0.0
        %1708 = vmatprep.subr.mxu0 0.0
        %1709 = vmatpush2.msra.mxu0 0.0
        %1710 = vmatprep.subr.mxu0 0.0
        %1711 = vmatpush2.msra.mxu0 0.0
        %1712 = vmatprep.subr.mxu0 0.0
        %1713 = vmatpush2.msra.mxu0 0.0
        %1714 = vmatprep.subr.mxu0 0.0
        %1715 = vmatpush2.msra.mxu0 0.0
        %1716 = vmatprep.subr.mxu0 0.0
        %1717 = vmatpush2.msra.mxu0 0.0
        %1718 = vmatprep.mubr.f32.mxu0 0.0
        %1719 = vmatmul.mubr.f32.gmra.mxu0 %v1652
        %v1720 = vpop.f32.mrf.mxu0
        %v1721 = vadd.f32 0.0, %v1720
        %v1722 = vpop.f32.mrf.mxu0
        %1723 = vdwg.mxu0
        %1725 = vrot.lane.b32.xlu0 %v1144, 120
        %v1726 = vpop.permute.xlu0 %1725
        %v1729 = vsel %vm1147, %v1646, 0
        %1731 = vmatprep.subr.mxu0 0.0
        %1732 = vmatpush1.msra.mxu0 0.0
        %1733 = vmatprep.subr.mxu0 0.0
        %1734 = vmatpush1.msra.mxu0 0.0
        %1735 = vmatprep.subr.mxu0 0.0
        %1736 = vmatpush1.msra.mxu0 0.0
        %1737 = vmatprep.subr.mxu0 0.0
        %1738 = vmatpush1.msra.mxu0 0.0
        %1739 = vmatprep.subr.mxu0 0.0
        %1740 = vmatpush1.msra.mxu0 0.0
        %1741 = vmatprep.subr.mxu0 0.0
        %1742 = vmatpush1.msra.mxu0 0.0
        %1743 = vmatprep.subr.mxu0 0.0
        %1744 = vmatpush1.msra.mxu0 0.0
        %1745 = vmatprep.subr.mxu0 0.0
        %1746 = vmatpush1.msra.mxu0 0.0
        %1747 = vmatprep.subr.mxu0 0.0
        %1748 = vmatpush1.msra.mxu0 0.0
        %1749 = vmatprep.subr.mxu0 0.0
        %1750 = vmatpush1.msra.mxu0 0.0
        %1751 = vmatprep.subr.mxu0 0.0
        %1752 = vmatpush1.msra.mxu0 0.0
        %1753 = vmatprep.subr.mxu0 0.0
        %1754 = vmatpush1.msra.mxu0 0.0
        %1755 = vmatprep.subr.mxu0 0.0
        %1756 = vmatpush1.msra.mxu0 0.0
        %1757 = vmatprep.subr.mxu0 0.0
        %1758 = vmatpush1.msra.mxu0 0.0
        %1759 = vmatprep.subr.mxu0 0.0
        %1760 = vmatpush1.msra.mxu0 0.0
        %1761 = vmatprep.subr.mxu0 0.0
        %1762 = vmatpush1.msra.mxu0 %v1726
        %1763 = vmatprep.subr.mxu0 0.0
        %1764 = vmatpush2.msra.mxu0 0.0
        %1765 = vmatprep.subr.mxu0 0.0
        %1766 = vmatpush2.msra.mxu0 0.0
        %1767 = vmatprep.subr.mxu0 0.0
        %1768 = vmatpush2.msra.mxu0 0.0
        %1769 = vmatprep.subr.mxu0 0.0
        %1770 = vmatpush2.msra.mxu0 0.0
        %1771 = vmatprep.subr.mxu0 0.0
        %1772 = vmatpush2.msra.mxu0 0.0
        %1773 = vmatprep.subr.mxu0 0.0
        %1774 = vmatpush2.msra.mxu0 0.0
        %1775 = vmatprep.subr.mxu0 0.0
        %1776 = vmatpush2.msra.mxu0 0.0
        %1777 = vmatprep.subr.mxu0 0.0
        %1778 = vmatpush2.msra.mxu0 0.0
        %1779 = vmatprep.subr.mxu0 0.0
        %1780 = vmatpush2.msra.mxu0 0.0
        %1781 = vmatprep.subr.mxu0 0.0
        %1782 = vmatpush2.msra.mxu0 0.0
        %1783 = vmatprep.subr.mxu0 0.0
        %1784 = vmatpush2.msra.mxu0 0.0
        %1785 = vmatprep.subr.mxu0 0.0
        %1786 = vmatpush2.msra.mxu0 0.0
        %1787 = vmatprep.subr.mxu0 0.0
        %1788 = vmatpush2.msra.mxu0 0.0
        %1789 = vmatprep.subr.mxu0 0.0
        %1790 = vmatpush2.msra.mxu0 0.0
        %1791 = vmatprep.subr.mxu0 0.0
        %1792 = vmatpush2.msra.mxu0 0.0
        %1793 = vmatprep.subr.mxu0 0.0
        %1794 = vmatpush2.msra.mxu0 0.0
        %1795 = vmatprep.mubr.f32.mxu0 0.0
        %1796 = vmatmul.mubr.f32.gmra.mxu0 %v1729
        %v1797 = vpop.f32.mrf.mxu0
        %v1798 = vadd.f32 0.0, %v1797
        %v1799 = vpop.f32.mrf.mxu0
        %1800 = vdwg.mxu0
        %v1801 = vld [vmem:[%s693 + $0x8] sm:$0xff]
        %v1803 = vsel %vm1147, %v1721, 0
        %v1806 = vsel %vm1147, %v1798, 0
        %1808 = vmatprep.subr.mxu0 0.0
        %1809 = vmatpush1.msra.mxu0 0.0
        %1810 = vmatprep.subr.mxu0 0.0
        %1811 = vmatpush1.msra.mxu0 0.0
        %1812 = vmatprep.subr.mxu0 0.0
        %1813 = vmatpush1.msra.mxu0 0.0
        %1814 = vmatprep.subr.mxu0 0.0
        %1815 = vmatpush1.msra.mxu0 0.0
        %1816 = vmatprep.subr.mxu0 0.0
        %1817 = vmatpush1.msra.mxu0 0.0
        %1818 = vmatprep.subr.mxu0 0.0
        %1819 = vmatpush1.msra.mxu0 0.0
        %1820 = vmatprep.subr.mxu0 0.0
        %1821 = vmatpush1.msra.mxu0 0.0
        %1822 = vmatprep.subr.mxu0 0.0
        %1823 = vmatpush1.msra.mxu0 0.0
        %1824 = vmatprep.subr.mxu0 0.0
        %1825 = vmatpush1.msra.mxu0 0.0
        %1826 = vmatprep.subr.mxu0 0.0
        %1827 = vmatpush1.msra.mxu0 0.0
        %1828 = vmatprep.subr.mxu0 0.0
        %1829 = vmatpush1.msra.mxu0 0.0
        %1830 = vmatprep.subr.mxu0 0.0
        %1831 = vmatpush1.msra.mxu0 0.0
        %1832 = vmatprep.subr.mxu0 0.0
        %1833 = vmatpush1.msra.mxu0 0.0
        %1834 = vmatprep.subr.mxu0 0.0
        %1835 = vmatpush1.msra.mxu0 0.0
        %1836 = vmatprep.subr.mxu0 0.0
        %1837 = vmatpush1.msra.mxu0 0.0
        %1838 = vmatprep.subr.mxu0 0.0
        %1839 = vmatpush1.msra.mxu0 %v1801
        %1840 = vmatprep.subr.mxu0 0.0
        %1841 = vmatpush2.msra.mxu0 0.0
        %1842 = vmatprep.subr.mxu0 0.0
        %1843 = vmatpush2.msra.mxu0 0.0
        %1844 = vmatprep.subr.mxu0 0.0
        %1845 = vmatpush2.msra.mxu0 0.0
        %1846 = vmatprep.subr.mxu0 0.0
        %1847 = vmatpush2.msra.mxu0 0.0
        %1848 = vmatprep.subr.mxu0 0.0
        %1849 = vmatpush2.msra.mxu0 0.0
        %1850 = vmatprep.subr.mxu0 0.0
        %1851 = vmatpush2.msra.mxu0 0.0
        %1852 = vmatprep.subr.mxu0 0.0
        %1853 = vmatpush2.msra.mxu0 0.0
        %1854 = vmatprep.subr.mxu0 0.0
        %1855 = vmatpush2.msra.mxu0 0.0
        %1856 = vmatprep.subr.mxu0 0.0
        %1857 = vmatpush2.msra.mxu0 0.0
        %1858 = vmatprep.subr.mxu0 0.0
        %1859 = vmatpush2.msra.mxu0 0.0
        %1860 = vmatprep.subr.mxu0 0.0
        %1861 = vmatpush2.msra.mxu0 0.0
        %1862 = vmatprep.subr.mxu0 0.0
        %1863 = vmatpush2.msra.mxu0 0.0
        %1864 = vmatprep.subr.mxu0 0.0
        %1865 = vmatpush2.msra.mxu0 0.0
        %1866 = vmatprep.subr.mxu0 0.0
        %1867 = vmatpush2.msra.mxu0 0.0
        %1868 = vmatprep.subr.mxu0 0.0
        %1869 = vmatpush2.msra.mxu0 0.0
        %1870 = vmatprep.subr.mxu0 0.0
        %1871 = vmatpush2.msra.mxu0 0.0
        %1872 = vmatprep.mubr.f32.mxu0 0.0
        %1873 = vmatmul.mubr.f32.gmra.mxu0 %v1803
        %v1874 = vpop.f32.mrf.mxu0
        %v1875 = vadd.f32 0.0, %v1874
        %v1876 = vpop.f32.mrf.mxu0
        %1877 = vmatprep.mubr.f32.mxu0 0.0
        %1878 = vmatmul.mubr.f32.gmra.mxu0 %v1806
        %v1879 = vpop.f32.mrf.mxu0
        %v1880 = vadd.f32 0.0, %v1879
        %v1881 = vpop.f32.mrf.mxu0
        %1882 = vdwg.mxu0
        %v1884 = vsel %vm1147, %v1392, 0
        %v1887 = vsel %vm1147, %v1465, 0
        %1889 = vmatprep.subr.mxu0 0.0
        %1890 = vmatpush1.msra.mxu0 0.0
        %1891 = vmatprep.subr.mxu0 0.0
        %1892 = vmatpush1.msra.mxu0 0.0
        %1893 = vmatprep.subr.mxu0 0.0
        %1894 = vmatpush1.msra.mxu0 0.0
        %1895 = vmatprep.subr.mxu0 0.0
        %1896 = vmatpush1.msra.mxu0 0.0
        %1897 = vmatprep.subr.mxu0 0.0
        %1898 = vmatpush1.msra.mxu0 0.0
        %1899 = vmatprep.subr.mxu0 0.0
        %1900 = vmatpush1.msra.mxu0 0.0
        %1901 = vmatprep.subr.mxu0 0.0
        %1902 = vmatpush1.msra.mxu0 0.0
        %1903 = vmatprep.subr.mxu0 0.0
        %1904 = vmatpush1.msra.mxu0 0.0
        %1905 = vmatprep.subr.mxu0 0.0
        %1906 = vmatpush1.msra.mxu0 0.0
        %1907 = vmatprep.subr.mxu0 0.0
        %1908 = vmatpush1.msra.mxu0 0.0
        %1909 = vmatprep.subr.mxu0 0.0
        %1910 = vmatpush1.msra.mxu0 0.0
        %1911 = vmatprep.subr.mxu0 0.0
        %1912 = vmatpush1.msra.mxu0 0.0
        %1913 = vmatprep.subr.mxu0 0.0
        %1914 = vmatpush1.msra.mxu0 0.0
        %1915 = vmatprep.subr.mxu0 0.0
        %1916 = vmatpush1.msra.mxu0 0.0
        %1917 = vmatprep.subr.mxu0 0.0
        %1918 = vmatpush1.msra.mxu0 0.0
        %1919 = vmatprep.subr.mxu0 0.0
        %1920 = vmatpush1.msra.mxu0 %v1468
        %1921 = vmatprep.subr.mxu0 0.0
        %1922 = vmatpush2.msra.mxu0 0.0
        %1923 = vmatprep.subr.mxu0 0.0
        %1924 = vmatpush2.msra.mxu0 0.0
        %1925 = vmatprep.subr.mxu0 0.0
        %1926 = vmatpush2.msra.mxu0 0.0
        %1927 = vmatprep.subr.mxu0 0.0
        %1928 = vmatpush2.msra.mxu0 0.0
        %1929 = vmatprep.subr.mxu0 0.0
        %1930 = vmatpush2.msra.mxu0 0.0
        %1931 = vmatprep.subr.mxu0 0.0
        %1932 = vmatpush2.msra.mxu0 0.0
        %1933 = vmatprep.subr.mxu0 0.0
        %1934 = vmatpush2.msra.mxu0 0.0
        %1935 = vmatprep.subr.mxu0 0.0
        %1936 = vmatpush2.msra.mxu0 0.0
        %1937 = vmatprep.subr.mxu0 0.0
        %1938 = vmatpush2.msra.mxu0 0.0
        %1939 = vmatprep.subr.mxu0 0.0
        %1940 = vmatpush2.msra.mxu0 0.0
        %1941 = vmatprep.subr.mxu0 0.0
        %1942 = vmatpush2.msra.mxu0 0.0
        %1943 = vmatprep.subr.mxu0 0.0
        %1944 = vmatpush2.msra.mxu0 0.0
        %1945 = vmatprep.subr.mxu0 0.0
        %1946 = vmatpush2.msra.mxu0 0.0
        %1947 = vmatprep.subr.mxu0 0.0
        %1948 = vmatpush2.msra.mxu0 0.0
        %1949 = vmatprep.subr.mxu0 0.0
        %1950 = vmatpush2.msra.mxu0 0.0
        %1951 = vmatprep.subr.mxu0 0.0
        %1952 = vmatpush2.msra.mxu0 0.0
        %1953 = vmatprep.mubr.f32.mxu0 0.0
        %1954 = vmatmul.mubr.f32.gmra.mxu0 %v1884
        %v1955 = vpop.f32.mrf.mxu0
        %v1956 = vadd.f32 %v1875, %v1955
        %v1957 = vpop.f32.mrf.mxu0
        %1958 = vmatprep.mubr.f32.mxu0 0.0
        %1959 = vmatmul.mubr.f32.gmra.mxu0 %v1887
        %v1960 = vpop.f32.mrf.mxu0
        %v1961 = vadd.f32 %v1880, %v1960
        %v1962 = vpop.f32.mrf.mxu0
        %1963 = vdwg.mxu0
        %1964 = vrot.lane.b32.xlu0 %v967, 112
        %v1965 = vpop.permute.xlu0 %1964
        %1966 = vrot.lane.b32.xlu0 %v1053, 112
        %v1967 = vpop.permute.xlu0 %1966
        %v1968 = vsel %vm1147, %v1965, 0
        %v1970 = vsel %vm1147, %v1967, 0
        %1972 = vmatprep.subr.mxu0 0.0
        %1973 = vmatpush1.xpose.msra.mxu0 0.0
        %1974 = vmatprep.subr.mxu0 0.0
        %1975 = vmatpush1.xpose.msra.mxu0 0.0
        %1976 = vmatprep.subr.mxu0 0.0
        %1977 = vmatpush1.xpose.msra.mxu0 0.0
        %1978 = vmatprep.subr.mxu0 0.0
        %1979 = vmatpush1.xpose.msra.mxu0 0.0
        %1980 = vmatprep.subr.mxu0 0.0
        %1981 = vmatpush1.xpose.msra.mxu0 0.0
        %1982 = vmatprep.subr.mxu0 0.0
        %1983 = vmatpush1.xpose.msra.mxu0 0.0
        %1984 = vmatprep.subr.mxu0 0.0
        %1985 = vmatpush1.xpose.msra.mxu0 0.0
        %1986 = vmatprep.subr.mxu0 0.0
        %1987 = vmatpush1.xpose.msra.mxu0 0.0
        %1988 = vmatprep.subr.mxu0 0.0
        %1989 = vmatpush1.xpose.msra.mxu0 0.0
        %1990 = vmatprep.subr.mxu0 0.0
        %1991 = vmatpush1.xpose.msra.mxu0 0.0
        %1992 = vmatprep.subr.mxu0 0.0
        %1993 = vmatpush1.xpose.msra.mxu0 0.0
        %1994 = vmatprep.subr.mxu0 0.0
        %1995 = vmatpush1.xpose.msra.mxu0 0.0
        %1996 = vmatprep.subr.mxu0 0.0
        %1997 = vmatpush1.xpose.msra.mxu0 0.0
        %1998 = vmatprep.subr.mxu0 0.0
        %1999 = vmatpush1.xpose.msra.mxu0 0.0
        %2000 = vmatprep.subr.mxu0 0.0
        %2001 = vmatpush1.xpose.msra.mxu0 0.0
        %2002 = vmatprep.subr.mxu0 0.0
        %2003 = vmatpush1.xpose.msra.mxu0 %v1970
        %2004 = vmatprep.subr.mxu0 0.0
        %2005 = vmatpush2.xpose.msra.mxu0 0.0
        %2006 = vmatprep.subr.mxu0 0.0
        %2007 = vmatpush2.xpose.msra.mxu0 0.0
        %2008 = vmatprep.subr.mxu0 0.0
        %2009 = vmatpush2.xpose.msra.mxu0 0.0
        %2010 = vmatprep.subr.mxu0 0.0
        %2011 = vmatpush2.xpose.msra.mxu0 0.0
        %2012 = vmatprep.subr.mxu0 0.0
        %2013 = vmatpush2.xpose.msra.mxu0 0.0
        %2014 = vmatprep.subr.mxu0 0.0
        %2015 = vmatpush2.xpose.msra.mxu0 0.0
        %2016 = vmatprep.subr.mxu0 0.0
        %2017 = vmatpush2.xpose.msra.mxu0 0.0
        %2018 = vmatprep.subr.mxu0 0.0
        %2019 = vmatpush2.xpose.msra.mxu0 0.0
        %2020 = vmatprep.subr.mxu0 0.0
        %2021 = vmatpush2.xpose.msra.mxu0 0.0
        %2022 = vmatprep.subr.mxu0 0.0
        %2023 = vmatpush2.xpose.msra.mxu0 0.0
        %2024 = vmatprep.subr.mxu0 0.0
        %2025 = vmatpush2.xpose.msra.mxu0 0.0
        %2026 = vmatprep.subr.mxu0 0.0
        %2027 = vmatpush2.xpose.msra.mxu0 0.0
        %2028 = vmatprep.subr.mxu0 0.0
        %2029 = vmatpush2.xpose.msra.mxu0 0.0
        %2030 = vmatprep.subr.mxu0 0.0
        %2031 = vmatpush2.xpose.msra.mxu0 0.0
        %2032 = vmatprep.subr.mxu0 0.0
        %2033 = vmatpush2.xpose.msra.mxu0 0.0
        %2034 = vmatprep.subr.mxu0 0.0
        %2035 = vmatpush2.xpose.msra.mxu0 0.0
        %2036 = vmatprep.mubr.f32.mxu0 0.0
        %2037 = vmatmul.mubr.f32.gmra.mxu0 %v1968
        %v2038 = vpop.f32.mrf.mxu0
        %v2039 = vadd.f32 0.0, %v2038
        %v2040 = vpop.f32.mrf.mxu0
        %2041 = vdwg.mxu0
        %2042 = vrot.lane.b32.xlu0 %v972, 112
        %v2043 = vpop.permute.xlu0 %2042
        %2044 = vrot.lane.b32.xlu0 %v1058, 112
        %v2045 = vpop.permute.xlu0 %2044
        %v2046 = vsel %vm1147, %v2043, 0
        %v2048 = vsel %vm1147, %v2045, 0
        %2050 = vmatprep.subr.mxu0 0.0
        %2051 = vmatpush1.xpose.msra.mxu0 0.0
        %2052 = vmatprep.subr.mxu0 0.0
        %2053 = vmatpush1.xpose.msra.mxu0 0.0
        %2054 = vmatprep.subr.mxu0 0.0
        %2055 = vmatpush1.xpose.msra.mxu0 0.0
        %2056 = vmatprep.subr.mxu0 0.0
        %2057 = vmatpush1.xpose.msra.mxu0 0.0
        %2058 = vmatprep.subr.mxu0 0.0
        %2059 = vmatpush1.xpose.msra.mxu0 0.0
        %2060 = vmatprep.subr.mxu0 0.0
        %2061 = vmatpush1.xpose.msra.mxu0 0.0
        %2062 = vmatprep.subr.mxu0 0.0
        %2063 = vmatpush1.xpose.msra.mxu0 0.0
        %2064 = vmatprep.subr.mxu0 0.0
        %2065 = vmatpush1.xpose.msra.mxu0 0.0
        %2066 = vmatprep.subr.mxu0 0.0
        %2067 = vmatpush1.xpose.msra.mxu0 0.0
        %2068 = vmatprep.subr.mxu0 0.0
        %2069 = vmatpush1.xpose.msra.mxu0 0.0
        %2070 = vmatprep.subr.mxu0 0.0
        %2071 = vmatpush1.xpose.msra.mxu0 0.0
        %2072 = vmatprep.subr.mxu0 0.0
        %2073 = vmatpush1.xpose.msra.mxu0 0.0
        %2074 = vmatprep.subr.mxu0 0.0
        %2075 = vmatpush1.xpose.msra.mxu0 0.0
        %2076 = vmatprep.subr.mxu0 0.0
        %2077 = vmatpush1.xpose.msra.mxu0 0.0
        %2078 = vmatprep.subr.mxu0 0.0
        %2079 = vmatpush1.xpose.msra.mxu0 0.0
        %2080 = vmatprep.subr.mxu0 0.0
        %2081 = vmatpush1.xpose.msra.mxu0 %v2048
        %2082 = vmatprep.subr.mxu0 0.0
        %2083 = vmatpush2.xpose.msra.mxu0 0.0
        %2084 = vmatprep.subr.mxu0 0.0
        %2085 = vmatpush2.xpose.msra.mxu0 0.0
        %2086 = vmatprep.subr.mxu0 0.0
        %2087 = vmatpush2.xpose.msra.mxu0 0.0
        %2088 = vmatprep.subr.mxu0 0.0
        %2089 = vmatpush2.xpose.msra.mxu0 0.0
        %2090 = vmatprep.subr.mxu0 0.0
        %2091 = vmatpush2.xpose.msra.mxu0 0.0
        %2092 = vmatprep.subr.mxu0 0.0
        %2093 = vmatpush2.xpose.msra.mxu0 0.0
        %2094 = vmatprep.subr.mxu0 0.0
        %2095 = vmatpush2.xpose.msra.mxu0 0.0
        %2096 = vmatprep.subr.mxu0 0.0
        %2097 = vmatpush2.xpose.msra.mxu0 0.0
        %2098 = vmatprep.subr.mxu0 0.0
        %2099 = vmatpush2.xpose.msra.mxu0 0.0
        %2100 = vmatprep.subr.mxu0 0.0
        %2101 = vmatpush2.xpose.msra.mxu0 0.0
        %2102 = vmatprep.subr.mxu0 0.0
        %2103 = vmatpush2.xpose.msra.mxu0 0.0
        %2104 = vmatprep.subr.mxu0 0.0
        %2105 = vmatpush2.xpose.msra.mxu0 0.0
        %2106 = vmatprep.subr.mxu0 0.0
        %2107 = vmatpush2.xpose.msra.mxu0 0.0
        %2108 = vmatprep.subr.mxu0 0.0
        %2109 = vmatpush2.xpose.msra.mxu0 0.0
        %2110 = vmatprep.subr.mxu0 0.0
        %2111 = vmatpush2.xpose.msra.mxu0 0.0
        %2112 = vmatprep.subr.mxu0 0.0
        %2113 = vmatpush2.xpose.msra.mxu0 0.0
        %2114 = vmatprep.mubr.f32.mxu0 0.0
        %2115 = vmatmul.mubr.f32.gmra.mxu0 %v2046
        %v2116 = vpop.f32.mrf.mxu0
        %v2117 = vadd.f32 0.0, %v2116
        %v2118 = vpop.f32.mrf.mxu0
        %2119 = vdwg.mxu0
        %v2120 = vsel %vm1147, %v2039, -inf
        %2121 = vmax.xlane.f32.xlu0 %v2120
        %v2122 = vpop.xlane.xlu0 %2121
        %v2123 = vsel %vm1147, %v2117, -inf
        %2124 = vmax.xlane.f32.xlu0 %v2123
        %v2125 = vpop.xlane.xlu0 %2124
        %v2126 = vsub.f32 %v2039, %v2122
        %v2127 = vsub.f32 %v2117, %v2125
        %v2128 = vmul.f32 %v2126, 1.442695
        %v2129 = vpow.pop %v2128
        %v2130 = vmul.f32 %v2127, 1.442695
        %v2131 = vpow.pop %v2130
        %v2132 = vsel %vm1147, %v2129, 0.0
        %2133 = vadd.xlane.f32.xlu0 %v2132
        %v2134 = vpop.xlane.xlu0 %2133
        %v2135 = vsel %vm1147, %v2131, 0.0
        %2136 = vadd.xlane.f32.xlu0 %v2135
        %v2137 = vpop.xlane.xlu0 %2136
        %v2138 = vrcp.pop %v2134
        %v2139 = vmul.f32 %v2129, %v2138
        %v2140 = vrcp.pop %v2137
        %v2141 = vmul.f32 %v2131, %v2140
        %2142 = vrot.lane.b32.xlu0 %v1139, 112
        %v2143 = vpop.permute.xlu0 %2142
        %v2146 = vsel %vm1147, %v2139, 0
        %2148 = vmatprep.subr.mxu0 0.0
        %2149 = vmatpush1.msra.mxu0 0.0
        %2150 = vmatprep.subr.mxu0 0.0
        %2151 = vmatpush1.msra.mxu0 0.0
        %2152 = vmatprep.subr.mxu0 0.0
        %2153 = vmatpush1.msra.mxu0 0.0
        %2154 = vmatprep.subr.mxu0 0.0
        %2155 = vmatpush1.msra.mxu0 0.0
        %2156 = vmatprep.subr.mxu0 0.0
        %2157 = vmatpush1.msra.mxu0 0.0
        %2158 = vmatprep.subr.mxu0 0.0
        %2159 = vmatpush1.msra.mxu0 0.0
        %2160 = vmatprep.subr.mxu0 0.0
        %2161 = vmatpush1.msra.mxu0 0.0
        %2162 = vmatprep.subr.mxu0 0.0
        %2163 = vmatpush1.msra.mxu0 0.0
        %2164 = vmatprep.subr.mxu0 0.0
        %2165 = vmatpush1.msra.mxu0 0.0
        %2166 = vmatprep.subr.mxu0 0.0
        %2167 = vmatpush1.msra.mxu0 0.0
        %2168 = vmatprep.subr.mxu0 0.0
        %2169 = vmatpush1.msra.mxu0 0.0
        %2170 = vmatprep.subr.mxu0 0.0
        %2171 = vmatpush1.msra.mxu0 0.0
        %2172 = vmatprep.subr.mxu0 0.0
        %2173 = vmatpush1.msra.mxu0 0.0
        %2174 = vmatprep.subr.mxu0 0.0
        %2175 = vmatpush1.msra.mxu0 0.0
        %2176 = vmatprep.subr.mxu0 0.0
        %2177 = vmatpush1.msra.mxu0 0.0
        %2178 = vmatprep.subr.mxu0 0.0
        %2179 = vmatpush1.msra.mxu0 %v2143
        %2180 = vmatprep.subr.mxu0 0.0
        %2181 = vmatpush2.msra.mxu0 0.0
        %2182 = vmatprep.subr.mxu0 0.0
        %2183 = vmatpush2.msra.mxu0 0.0
        %2184 = vmatprep.subr.mxu0 0.0
        %2185 = vmatpush2.msra.mxu0 0.0
        %2186 = vmatprep.subr.mxu0 0.0
        %2187 = vmatpush2.msra.mxu0 0.0
        %2188 = vmatprep.subr.mxu0 0.0
        %2189 = vmatpush2.msra.mxu0 0.0
        %2190 = vmatprep.subr.mxu0 0.0
        %2191 = vmatpush2.msra.mxu0 0.0
        %2192 = vmatprep.subr.mxu0 0.0
        %2193 = vmatpush2.msra.mxu0 0.0
        %2194 = vmatprep.subr.mxu0 0.0
        %2195 = vmatpush2.msra.mxu0 0.0
        %2196 = vmatprep.subr.mxu0 0.0
        %2197 = vmatpush2.msra.mxu0 0.0
        %2198 = vmatprep.subr.mxu0 0.0
        %2199 = vmatpush2.msra.mxu0 0.0
        %2200 = vmatprep.subr.mxu0 0.0
        %2201 = vmatpush2.msra.mxu0 0.0
        %2202 = vmatprep.subr.mxu0 0.0
        %2203 = vmatpush2.msra.mxu0 0.0
        %2204 = vmatprep.subr.mxu0 0.0
        %2205 = vmatpush2.msra.mxu0 0.0
        %2206 = vmatprep.subr.mxu0 0.0
        %2207 = vmatpush2.msra.mxu0 0.0
        %2208 = vmatprep.subr.mxu0 0.0
        %2209 = vmatpush2.msra.mxu0 0.0
        %2210 = vmatprep.subr.mxu0 0.0
        %2211 = vmatpush2.msra.mxu0 0.0
        %2212 = vmatprep.mubr.f32.mxu0 0.0
        %2213 = vmatmul.mubr.f32.gmra.mxu0 %v2146
        %v2214 = vpop.f32.mrf.mxu0
        %v2215 = vadd.f32 0.0, %v2214
        %v2216 = vpop.f32.mrf.mxu0
        %2217 = vdwg.mxu0
        %2218 = vrot.lane.b32.xlu0 %v1144, 112
        %v2219 = vpop.permute.xlu0 %2218
        %v2222 = vsel %vm1147, %v2141, 0
        %2224 = vmatprep.subr.mxu0 0.0
        %2225 = vmatpush1.msra.mxu0 0.0
        %2226 = vmatprep.subr.mxu0 0.0
        %2227 = vmatpush1.msra.mxu0 0.0
        %2228 = vmatprep.subr.mxu0 0.0
        %2229 = vmatpush1.msra.mxu0 0.0
        %2230 = vmatprep.subr.mxu0 0.0
        %2231 = vmatpush1.msra.mxu0 0.0
        %2232 = vmatprep.subr.mxu0 0.0
        %2233 = vmatpush1.msra.mxu0 0.0
        %2234 = vmatprep.subr.mxu0 0.0
        %2235 = vmatpush1.msra.mxu0 0.0
        %2236 = vmatprep.subr.mxu0 0.0
        %2237 = vmatpush1.msra.mxu0 0.0
        %2238 = vmatprep.subr.mxu0 0.0
        %2239 = vmatpush1.msra.mxu0 0.0
        %2240 = vmatprep.subr.mxu0 0.0
        %2241 = vmatpush1.msra.mxu0 0.0
        %2242 = vmatprep.subr.mxu0 0.0
        %2243 = vmatpush1.msra.mxu0 0.0
        %2244 = vmatprep.subr.mxu0 0.0
        %2245 = vmatpush1.msra.mxu0 0.0
        %2246 = vmatprep.subr.mxu0 0.0
        %2247 = vmatpush1.msra.mxu0 0.0
        %2248 = vmatprep.subr.mxu0 0.0
        %2249 = vmatpush1.msra.mxu0 0.0
        %2250 = vmatprep.subr.mxu0 0.0
        %2251 = vmatpush1.msra.mxu0 0.0
        %2252 = vmatprep.subr.mxu0 0.0
        %2253 = vmatpush1.msra.mxu0 0.0
        %2254 = vmatprep.subr.mxu0 0.0
        %2255 = vmatpush1.msra.mxu0 %v2219
        %2256 = vmatprep.subr.mxu0 0.0
        %2257 = vmatpush2.msra.mxu0 0.0
        %2258 = vmatprep.subr.mxu0 0.0
        %2259 = vmatpush2.msra.mxu0 0.0
        %2260 = vmatprep.subr.mxu0 0.0
        %2261 = vmatpush2.msra.mxu0 0.0
        %2262 = vmatprep.subr.mxu0 0.0
        %2263 = vmatpush2.msra.mxu0 0.0
        %2264 = vmatprep.subr.mxu0 0.0
        %2265 = vmatpush2.msra.mxu0 0.0
        %2266 = vmatprep.subr.mxu0 0.0
        %2267 = vmatpush2.msra.mxu0 0.0
        %2268 = vmatprep.subr.mxu0 0.0
        %2269 = vmatpush2.msra.mxu0 0.0
        %2270 = vmatprep.subr.mxu0 0.0
        %2271 = vmatpush2.msra.mxu0 0.0
        %2272 = vmatprep.subr.mxu0 0.0
        %2273 = vmatpush2.msra.mxu0 0.0
        %2274 = vmatprep.subr.mxu0 0.0
        %2275 = vmatpush2.msra.mxu0 0.0
        %2276 = vmatprep.subr.mxu0 0.0
        %2277 = vmatpush2.msra.mxu0 0.0
        %2278 = vmatprep.subr.mxu0 0.0
        %2279 = vmatpush2.msra.mxu0 0.0
        %2280 = vmatprep.subr.mxu0 0.0
        %2281 = vmatpush2.msra.mxu0 0.0
        %2282 = vmatprep.subr.mxu0 0.0
        %2283 = vmatpush2.msra.mxu0 0.0
        %2284 = vmatprep.subr.mxu0 0.0
        %2285 = vmatpush2.msra.mxu0 0.0
        %2286 = vmatprep.subr.mxu0 0.0
        %2287 = vmatpush2.msra.mxu0 0.0
        %2288 = vmatprep.mubr.f32.mxu0 0.0
        %2289 = vmatmul.mubr.f32.gmra.mxu0 %v2222
        %v2290 = vpop.f32.mrf.mxu0
        %v2291 = vadd.f32 0.0, %v2290
        %v2292 = vpop.f32.mrf.mxu0
        %2293 = vdwg.mxu0
        %v2294 = vld [vmem:[%s693 + $0x10] sm:$0xff]
        %v2296 = vsel %vm1147, %v2215, 0
        %v2299 = vsel %vm1147, %v2291, 0
        %2301 = vmatprep.subr.mxu0 0.0
        %2302 = vmatpush1.msra.mxu0 0.0
        %2303 = vmatprep.subr.mxu0 0.0
        %2304 = vmatpush1.msra.mxu0 0.0
        %2305 = vmatprep.subr.mxu0 0.0
        %2306 = vmatpush1.msra.mxu0 0.0
        %2307 = vmatprep.subr.mxu0 0.0
        %2308 = vmatpush1.msra.mxu0 0.0
        %2309 = vmatprep.subr.mxu0 0.0
        %2310 = vmatpush1.msra.mxu0 0.0
        %2311 = vmatprep.subr.mxu0 0.0
        %2312 = vmatpush1.msra.mxu0 0.0
        %2313 = vmatprep.subr.mxu0 0.0
        %2314 = vmatpush1.msra.mxu0 0.0
        %2315 = vmatprep.subr.mxu0 0.0
        %2316 = vmatpush1.msra.mxu0 0.0
        %2317 = vmatprep.subr.mxu0 0.0
        %2318 = vmatpush1.msra.mxu0 0.0
        %2319 = vmatprep.subr.mxu0 0.0
        %2320 = vmatpush1.msra.mxu0 0.0
        %2321 = vmatprep.subr.mxu0 0.0
        %2322 = vmatpush1.msra.mxu0 0.0
        %2323 = vmatprep.subr.mxu0 0.0
        %2324 = vmatpush1.msra.mxu0 0.0
        %2325 = vmatprep.subr.mxu0 0.0
        %2326 = vmatpush1.msra.mxu0 0.0
        %2327 = vmatprep.subr.mxu0 0.0
        %2328 = vmatpush1.msra.mxu0 0.0
        %2329 = vmatprep.subr.mxu0 0.0
        %2330 = vmatpush1.msra.mxu0 0.0
        %2331 = vmatprep.subr.mxu0 0.0
        %2332 = vmatpush1.msra.mxu0 %v2294
        %2333 = vmatprep.subr.mxu0 0.0
        %2334 = vmatpush2.msra.mxu0 0.0
        %2335 = vmatprep.subr.mxu0 0.0
        %2336 = vmatpush2.msra.mxu0 0.0
        %2337 = vmatprep.subr.mxu0 0.0
        %2338 = vmatpush2.msra.mxu0 0.0
        %2339 = vmatprep.subr.mxu0 0.0
        %2340 = vmatpush2.msra.mxu0 0.0
        %2341 = vmatprep.subr.mxu0 0.0
        %2342 = vmatpush2.msra.mxu0 0.0
        %2343 = vmatprep.subr.mxu0 0.0
        %2344 = vmatpush2.msra.mxu0 0.0
        %2345 = vmatprep.subr.mxu0 0.0
        %2346 = vmatpush2.msra.mxu0 0.0
        %2347 = vmatprep.subr.mxu0 0.0
        %2348 = vmatpush2.msra.mxu0 0.0
        %2349 = vmatprep.subr.mxu0 0.0
        %2350 = vmatpush2.msra.mxu0 0.0
        %2351 = vmatprep.subr.mxu0 0.0
        %2352 = vmatpush2.msra.mxu0 0.0
        %2353 = vmatprep.subr.mxu0 0.0
        %2354 = vmatpush2.msra.mxu0 0.0
        %2355 = vmatprep.subr.mxu0 0.0
        %2356 = vmatpush2.msra.mxu0 0.0
        %2357 = vmatprep.subr.mxu0 0.0
        %2358 = vmatpush2.msra.mxu0 0.0
        %2359 = vmatprep.subr.mxu0 0.0
        %2360 = vmatpush2.msra.mxu0 0.0
        %2361 = vmatprep.subr.mxu0 0.0
        %2362 = vmatpush2.msra.mxu0 0.0
        %2363 = vmatprep.subr.mxu0 0.0
        %2364 = vmatpush2.msra.mxu0 0.0
        %2365 = vmatprep.mubr.f32.mxu0 0.0
        %2366 = vmatmul.mubr.f32.gmra.mxu0 %v2296
        %v2367 = vpop.f32.mrf.mxu0
        %v2368 = vadd.f32 0.0, %v2367
        %v2369 = vpop.f32.mrf.mxu0
        %2370 = vmatprep.mubr.f32.mxu0 0.0
        %2371 = vmatmul.mubr.f32.gmra.mxu0 %v2299
        %v2372 = vpop.f32.mrf.mxu0
        %v2373 = vadd.f32 0.0, %v2372
        %v2374 = vpop.f32.mrf.mxu0
        %2375 = vdwg.mxu0
        %v2376 = vadd.f32 %v1956, %v2368
        %v2377 = vadd.f32 %v1961, %v2373
        %2378 = vrot.lane.b32.xlu0 %v967, 104
        %v2379 = vpop.permute.xlu0 %2378
        %2380 = vrot.lane.b32.xlu0 %v1053, 104
        %v2381 = vpop.permute.xlu0 %2380
        %v2382 = vsel %vm1147, %v2379, 0
        %v2384 = vsel %vm1147, %v2381, 0
        %2386 = vmatprep.subr.mxu0 0.0
        %2387 = vmatpush1.xpose.msra.mxu0 0.0
        %2388 = vmatprep.subr.mxu0 0.0
        %2389 = vmatpush1.xpose.msra.mxu0 0.0
        %2390 = vmatprep.subr.mxu0 0.0
        %2391 = vmatpush1.xpose.msra.mxu0 0.0
        %2392 = vmatprep.subr.mxu0 0.0
        %2393 = vmatpush1.xpose.msra.mxu0 0.0
        %2394 = vmatprep.subr.mxu0 0.0
        %2395 = vmatpush1.xpose.msra.mxu0 0.0
        %2396 = vmatprep.subr.mxu0 0.0
        %2397 = vmatpush1.xpose.msra.mxu0 0.0
        %2398 = vmatprep.subr.mxu0 0.0
        %2399 = vmatpush1.xpose.msra.mxu0 0.0
        %2400 = vmatprep.subr.mxu0 0.0
        %2401 = vmatpush1.xpose.msra.mxu0 0.0
        %2402 = vmatprep.subr.mxu0 0.0
        %2403 = vmatpush1.xpose.msra.mxu0 0.0
        %2404 = vmatprep.subr.mxu0 0.0
        %2405 = vmatpush1.xpose.msra.mxu0 0.0
        %2406 = vmatprep.subr.mxu0 0.0
        %2407 = vmatpush1.xpose.msra.mxu0 0.0
        %2408 = vmatprep.subr.mxu0 0.0
        %2409 = vmatpush1.xpose.msra.mxu0 0.0
        %2410 = vmatprep.subr.mxu0 0.0
        %2411 = vmatpush1.xpose.msra.mxu0 0.0
        %2412 = vmatprep.subr.mxu0 0.0
        %2413 = vmatpush1.xpose.msra.mxu0 0.0
        %2414 = vmatprep.subr.mxu0 0.0
        %2415 = vmatpush1.xpose.msra.mxu0 0.0
        %2416 = vmatprep.subr.mxu0 0.0
        %2417 = vmatpush1.xpose.msra.mxu0 %v2384
        %2418 = vmatprep.subr.mxu0 0.0
        %2419 = vmatpush2.xpose.msra.mxu0 0.0
        %2420 = vmatprep.subr.mxu0 0.0
        %2421 = vmatpush2.xpose.msra.mxu0 0.0
        %2422 = vmatprep.subr.mxu0 0.0
        %2423 = vmatpush2.xpose.msra.mxu0 0.0
        %2424 = vmatprep.subr.mxu0 0.0
        %2425 = vmatpush2.xpose.msra.mxu0 0.0
        %2426 = vmatprep.subr.mxu0 0.0
        %2427 = vmatpush2.xpose.msra.mxu0 0.0
        %2428 = vmatprep.subr.mxu0 0.0
        %2429 = vmatpush2.xpose.msra.mxu0 0.0
        %2430 = vmatprep.subr.mxu0 0.0
        %2431 = vmatpush2.xpose.msra.mxu0 0.0
        %2432 = vmatprep.subr.mxu0 0.0
        %2433 = vmatpush2.xpose.msra.mxu0 0.0
        %2434 = vmatprep.subr.mxu0 0.0
        %2435 = vmatpush2.xpose.msra.mxu0 0.0
        %2436 = vmatprep.subr.mxu0 0.0
        %2437 = vmatpush2.xpose.msra.mxu0 0.0
        %2438 = vmatprep.subr.mxu0 0.0
        %2439 = vmatpush2.xpose.msra.mxu0 0.0
        %2440 = vmatprep.subr.mxu0 0.0
        %2441 = vmatpush2.xpose.msra.mxu0 0.0
        %2442 = vmatprep.subr.mxu0 0.0
        %2443 = vmatpush2.xpose.msra.mxu0 0.0
        %2444 = vmatprep.subr.mxu0 0.0
        %2445 = vmatpush2.xpose.msra.mxu0 0.0
        %2446 = vmatprep.subr.mxu0 0.0
        %2447 = vmatpush2.xpose.msra.mxu0 0.0
        %2448 = vmatprep.subr.mxu0 0.0
        %2449 = vmatpush2.xpose.msra.mxu0 0.0
        %2450 = vmatprep.mubr.f32.mxu0 0.0
        %2451 = vmatmul.mubr.f32.gmra.mxu0 %v2382
        %v2452 = vpop.f32.mrf.mxu0
        %v2453 = vadd.f32 0.0, %v2452
        %v2454 = vpop.f32.mrf.mxu0
        %2455 = vdwg.mxu0
        %2456 = vrot.lane.b32.xlu0 %v972, 104
        %v2457 = vpop.permute.xlu0 %2456
        %2458 = vrot.lane.b32.xlu0 %v1058, 104
        %v2459 = vpop.permute.xlu0 %2458
        %v2460 = vsel %vm1147, %v2457, 0
        %v2462 = vsel %vm1147, %v2459, 0
        %2464 = vmatprep.subr.mxu0 0.0
        %2465 = vmatpush1.xpose.msra.mxu0 0.0
        %2466 = vmatprep.subr.mxu0 0.0
        %2467 = vmatpush1.xpose.msra.mxu0 0.0
        %2468 = vmatprep.subr.mxu0 0.0
        %2469 = vmatpush1.xpose.msra.mxu0 0.0
        %2470 = vmatprep.subr.mxu0 0.0
        %2471 = vmatpush1.xpose.msra.mxu0 0.0
        %2472 = vmatprep.subr.mxu0 0.0
        %2473 = vmatpush1.xpose.msra.mxu0 0.0
        %2474 = vmatprep.subr.mxu0 0.0
        %2475 = vmatpush1.xpose.msra.mxu0 0.0
        %2476 = vmatprep.subr.mxu0 0.0
        %2477 = vmatpush1.xpose.msra.mxu0 0.0
        %2478 = vmatprep.subr.mxu0 0.0
        %2479 = vmatpush1.xpose.msra.mxu0 0.0
        %2480 = vmatprep.subr.mxu0 0.0
        %2481 = vmatpush1.xpose.msra.mxu0 0.0
        %2482 = vmatprep.subr.mxu0 0.0
        %2483 = vmatpush1.xpose.msra.mxu0 0.0
        %2484 = vmatprep.subr.mxu0 0.0
        %2485 = vmatpush1.xpose.msra.mxu0 0.0
        %2486 = vmatprep.subr.mxu0 0.0
        %2487 = vmatpush1.xpose.msra.mxu0 0.0
        %2488 = vmatprep.subr.mxu0 0.0
        %2489 = vmatpush1.xpose.msra.mxu0 0.0
        %2490 = vmatprep.subr.mxu0 0.0
        %2491 = vmatpush1.xpose.msra.mxu0 0.0
        %2492 = vmatprep.subr.mxu0 0.0
        %2493 = vmatpush1.xpose.msra.mxu0 0.0
        %2494 = vmatprep.subr.mxu0 0.0
        %2495 = vmatpush1.xpose.msra.mxu0 %v2462
        %2496 = vmatprep.subr.mxu0 0.0
        %2497 = vmatpush2.xpose.msra.mxu0 0.0
        %2498 = vmatprep.subr.mxu0 0.0
        %2499 = vmatpush2.xpose.msra.mxu0 0.0
        %2500 = vmatprep.subr.mxu0 0.0
        %2501 = vmatpush2.xpose.msra.mxu0 0.0
        %2502 = vmatprep.subr.mxu0 0.0
        %2503 = vmatpush2.xpose.msra.mxu0 0.0
        %2504 = vmatprep.subr.mxu0 0.0
        %2505 = vmatpush2.xpose.msra.mxu0 0.0
        %2506 = vmatprep.subr.mxu0 0.0
        %2507 = vmatpush2.xpose.msra.mxu0 0.0
        %2508 = vmatprep.subr.mxu0 0.0
        %2509 = vmatpush2.xpose.msra.mxu0 0.0
        %2510 = vmatprep.subr.mxu0 0.0
        %2511 = vmatpush2.xpose.msra.mxu0 0.0
        %2512 = vmatprep.subr.mxu0 0.0
        %2513 = vmatpush2.xpose.msra.mxu0 0.0
        %2514 = vmatprep.subr.mxu0 0.0
        %2515 = vmatpush2.xpose.msra.mxu0 0.0
        %2516 = vmatprep.subr.mxu0 0.0
        %2517 = vmatpush2.xpose.msra.mxu0 0.0
        %2518 = vmatprep.subr.mxu0 0.0
        %2519 = vmatpush2.xpose.msra.mxu0 0.0
        %2520 = vmatprep.subr.mxu0 0.0
        %2521 = vmatpush2.xpose.msra.mxu0 0.0
        %2522 = vmatprep.subr.mxu0 0.0
        %2523 = vmatpush2.xpose.msra.mxu0 0.0
        %2524 = vmatprep.subr.mxu0 0.0
        %2525 = vmatpush2.xpose.msra.mxu0 0.0
        %2526 = vmatprep.subr.mxu0 0.0
        %2527 = vmatpush2.xpose.msra.mxu0 0.0
        %2528 = vmatprep.mubr.f32.mxu0 0.0
        %2529 = vmatmul.mubr.f32.gmra.mxu0 %v2460
        %v2530 = vpop.f32.mrf.mxu0
        %v2531 = vadd.f32 0.0, %v2530
        %v2532 = vpop.f32.mrf.mxu0
        %2533 = vdwg.mxu0
        %v2534 = vsel %vm1147, %v2453, -inf
        %2535 = vmax.xlane.f32.xlu0 %v2534
        %v2536 = vpop.xlane.xlu0 %2535
        %v2537 = vsel %vm1147, %v2531, -inf
        %2538 = vmax.xlane.f32.xlu0 %v2537
        %v2539 = vpop.xlane.xlu0 %2538
        %v2540 = vsub.f32 %v2453, %v2536
        %v2541 = vsub.f32 %v2531, %v2539
        %v2542 = vmul.f32 %v2540, 1.442695
        %v2543 = vpow.pop %v2542
        %v2544 = vmul.f32 %v2541, 1.442695
        %v2545 = vpow.pop %v2544
        %v2546 = vsel %vm1147, %v2543, 0.0
        %2547 = vadd.xlane.f32.xlu0 %v2546
        %v2548 = vpop.xlane.xlu0 %2547
        %v2549 = vsel %vm1147, %v2545, 0.0
        %2550 = vadd.xlane.f32.xlu0 %v2549
        %v2551 = vpop.xlane.xlu0 %2550
        %v2552 = vrcp.pop %v2548
        %v2553 = vmul.f32 %v2543, %v2552
        %v2554 = vrcp.pop %v2551
        %v2555 = vmul.f32 %v2545, %v2554
        %2556 = vrot.lane.b32.xlu0 %v1139, 104
        %v2557 = vpop.permute.xlu0 %2556
        %v2560 = vsel %vm1147, %v2553, 0
        %2562 = vmatprep.subr.mxu0 0.0
        %2563 = vmatpush1.msra.mxu0 0.0
        %2564 = vmatprep.subr.mxu0 0.0
        %2565 = vmatpush1.msra.mxu0 0.0
        %2566 = vmatprep.subr.mxu0 0.0
        %2567 = vmatpush1.msra.mxu0 0.0
        %2568 = vmatprep.subr.mxu0 0.0
        %2569 = vmatpush1.msra.mxu0 0.0
        %2570 = vmatprep.subr.mxu0 0.0
        %2571 = vmatpush1.msra.mxu0 0.0
        %2572 = vmatprep.subr.mxu0 0.0
        %2573 = vmatpush1.msra.mxu0 0.0
        %2574 = vmatprep.subr.mxu0 0.0
        %2575 = vmatpush1.msra.mxu0 0.0
        %2576 = vmatprep.subr.mxu0 0.0
        %2577 = vmatpush1.msra.mxu0 0.0
        %2578 = vmatprep.subr.mxu0 0.0
        %2579 = vmatpush1.msra.mxu0 0.0
        %2580 = vmatprep.subr.mxu0 0.0
        %2581 = vmatpush1.msra.mxu0 0.0
        %2582 = vmatprep.subr.mxu0 0.0
        %2583 = vmatpush1.msra.mxu0 0.0
        %2584 = vmatprep.subr.mxu0 0.0
        %2585 = vmatpush1.msra.mxu0 0.0
        %2586 = vmatprep.subr.mxu0 0.0
        %2587 = vmatpush1.msra.mxu0 0.0
        %2588 = vmatprep.subr.mxu0 0.0
        %2589 = vmatpush1.msra.mxu0 0.0
        %2590 = vmatprep.subr.mxu0 0.0
        %2591 = vmatpush1.msra.mxu0 0.0
        %2592 = vmatprep.subr.mxu0 0.0
        %2593 = vmatpush1.msra.mxu0 %v2557
        %2594 = vmatprep.subr.mxu0 0.0
        %2595 = vmatpush2.msra.mxu0 0.0
        %2596 = vmatprep.subr.mxu0 0.0
        %2597 = vmatpush2.msra.mxu0 0.0
        %2598 = vmatprep.subr.mxu0 0.0
        %2599 = vmatpush2.msra.mxu0 0.0
        %2600 = vmatprep.subr.mxu0 0.0
        %2601 = vmatpush2.msra.mxu0 0.0
        %2602 = vmatprep.subr.mxu0 0.0
        %2603 = vmatpush2.msra.mxu0 0.0
        %2604 = vmatprep.subr.mxu0 0.0
        %2605 = vmatpush2.msra.mxu0 0.0
        %2606 = vmatprep.subr.mxu0 0.0
        %2607 = vmatpush2.msra.mxu0 0.0
        %2608 = vmatprep.subr.mxu0 0.0
        %2609 = vmatpush2.msra.mxu0 0.0
        %2610 = vmatprep.subr.mxu0 0.0
        %2611 = vmatpush2.msra.mxu0 0.0
        %2612 = vmatprep.subr.mxu0 0.0
        %2613 = vmatpush2.msra.mxu0 0.0
        %2614 = vmatprep.subr.mxu0 0.0
        %2615 = vmatpush2.msra.mxu0 0.0
        %2616 = vmatprep.subr.mxu0 0.0
        %2617 = vmatpush2.msra.mxu0 0.0
        %2618 = vmatprep.subr.mxu0 0.0
        %2619 = vmatpush2.msra.mxu0 0.0
        %2620 = vmatprep.subr.mxu0 0.0
        %2621 = vmatpush2.msra.mxu0 0.0
        %2622 = vmatprep.subr.mxu0 0.0
        %2623 = vmatpush2.msra.mxu0 0.0
        %2624 = vmatprep.subr.mxu0 0.0
        %2625 = vmatpush2.msra.mxu0 0.0
        %2626 = vmatprep.mubr.f32.mxu0 0.0
        %2627 = vmatmul.mubr.f32.gmra.mxu0 %v2560
        %v2628 = vpop.f32.mrf.mxu0
        %v2629 = vadd.f32 0.0, %v2628
        %v2630 = vpop.f32.mrf.mxu0
        %2631 = vdwg.mxu0
        %2632 = vrot.lane.b32.xlu0 %v1144, 104
        %v2633 = vpop.permute.xlu0 %2632
        %v2636 = vsel %vm1147, %v2555, 0
        %2638 = vmatprep.subr.mxu0 0.0
        %2639 = vmatpush1.msra.mxu0 0.0
        %2640 = vmatprep.subr.mxu0 0.0
        %2641 = vmatpush1.msra.mxu0 0.0
        %2642 = vmatprep.subr.mxu0 0.0
        %2643 = vmatpush1.msra.mxu0 0.0
        %2644 = vmatprep.subr.mxu0 0.0
        %2645 = vmatpush1.msra.mxu0 0.0
        %2646 = vmatprep.subr.mxu0 0.0
        %2647 = vmatpush1.msra.mxu0 0.0
        %2648 = vmatprep.subr.mxu0 0.0
        %2649 = vmatpush1.msra.mxu0 0.0
        %2650 = vmatprep.subr.mxu0 0.0
        %2651 = vmatpush1.msra.mxu0 0.0
        %2652 = vmatprep.subr.mxu0 0.0
        %2653 = vmatpush1.msra.mxu0 0.0
        %2654 = vmatprep.subr.mxu0 0.0
        %2655 = vmatpush1.msra.mxu0 0.0
        %2656 = vmatprep.subr.mxu0 0.0
        %2657 = vmatpush1.msra.mxu0 0.0
        %2658 = vmatprep.subr.mxu0 0.0
        %2659 = vmatpush1.msra.mxu0 0.0
        %2660 = vmatprep.subr.mxu0 0.0
        %2661 = vmatpush1.msra.mxu0 0.0
        %2662 = vmatprep.subr.mxu0 0.0
        %2663 = vmatpush1.msra.mxu0 0.0
        %2664 = vmatprep.subr.mxu0 0.0
        %2665 = vmatpush1.msra.mxu0 0.0
        %2666 = vmatprep.subr.mxu0 0.0
        %2667 = vmatpush1.msra.mxu0 0.0
        %2668 = vmatprep.subr.mxu0 0.0
        %2669 = vmatpush1.msra.mxu0 %v2633
        %2670 = vmatprep.subr.mxu0 0.0
        %2671 = vmatpush2.msra.mxu0 0.0
        %2672 = vmatprep.subr.mxu0 0.0
        %2673 = vmatpush2.msra.mxu0 0.0
        %2674 = vmatprep.subr.mxu0 0.0
        %2675 = vmatpush2.msra.mxu0 0.0
        %2676 = vmatprep.subr.mxu0 0.0
        %2677 = vmatpush2.msra.mxu0 0.0
        %2678 = vmatprep.subr.mxu0 0.0
        %2679 = vmatpush2.msra.mxu0 0.0
        %2680 = vmatprep.subr.mxu0 0.0
        %2681 = vmatpush2.msra.mxu0 0.0
        %2682 = vmatprep.subr.mxu0 0.0
        %2683 = vmatpush2.msra.mxu0 0.0
        %2684 = vmatprep.subr.mxu0 0.0
        %2685 = vmatpush2.msra.mxu0 0.0
        %2686 = vmatprep.subr.mxu0 0.0
        %2687 = vmatpush2.msra.mxu0 0.0
        %2688 = vmatprep.subr.mxu0 0.0
        %2689 = vmatpush2.msra.mxu0 0.0
        %2690 = vmatprep.subr.mxu0 0.0
        %2691 = vmatpush2.msra.mxu0 0.0
        %2692 = vmatprep.subr.mxu0 0.0
        %2693 = vmatpush2.msra.mxu0 0.0
        %2694 = vmatprep.subr.mxu0 0.0
        %2695 = vmatpush2.msra.mxu0 0.0
        %2696 = vmatprep.subr.mxu0 0.0
        %2697 = vmatpush2.msra.mxu0 0.0
        %2698 = vmatprep.subr.mxu0 0.0
        %2699 = vmatpush2.msra.mxu0 0.0
        %2700 = vmatprep.subr.mxu0 0.0
        %2701 = vmatpush2.msra.mxu0 0.0
        %2702 = vmatprep.mubr.f32.mxu0 0.0
        %2703 = vmatmul.mubr.f32.gmra.mxu0 %v2636
        %v2704 = vpop.f32.mrf.mxu0
        %v2705 = vadd.f32 0.0, %v2704
        %v2706 = vpop.f32.mrf.mxu0
        %2707 = vdwg.mxu0
        %v2708 = vld [vmem:[%s693 + $0x18] sm:$0xff]
        %v2710 = vsel %vm1147, %v2629, 0
        %v2713 = vsel %vm1147, %v2705, 0
        %2715 = vmatprep.subr.mxu0 0.0
        %2716 = vmatpush1.msra.mxu0 0.0
        %2717 = vmatprep.subr.mxu0 0.0
        %2718 = vmatpush1.msra.mxu0 0.0
        %2719 = vmatprep.subr.mxu0 0.0
        %2720 = vmatpush1.msra.mxu0 0.0
        %2721 = vmatprep.subr.mxu0 0.0
        %2722 = vmatpush1.msra.mxu0 0.0
        %2723 = vmatprep.subr.mxu0 0.0
        %2724 = vmatpush1.msra.mxu0 0.0
        %2725 = vmatprep.subr.mxu0 0.0
        %2726 = vmatpush1.msra.mxu0 0.0
        %2727 = vmatprep.subr.mxu0 0.0
        %2728 = vmatpush1.msra.mxu0 0.0
        %2729 = vmatprep.subr.mxu0 0.0
        %2730 = vmatpush1.msra.mxu0 0.0
        %2731 = vmatprep.subr.mxu0 0.0
        %2732 = vmatpush1.msra.mxu0 0.0
        %2733 = vmatprep.subr.mxu0 0.0
        %2734 = vmatpush1.msra.mxu0 0.0
        %2735 = vmatprep.subr.mxu0 0.0
        %2736 = vmatpush1.msra.mxu0 0.0
        %2737 = vmatprep.subr.mxu0 0.0
        %2738 = vmatpush1.msra.mxu0 0.0
        %2739 = vmatprep.subr.mxu0 0.0
        %2740 = vmatpush1.msra.mxu0 0.0
        %2741 = vmatprep.subr.mxu0 0.0
        %2742 = vmatpush1.msra.mxu0 0.0
        %2743 = vmatprep.subr.mxu0 0.0
        %2744 = vmatpush1.msra.mxu0 0.0
        %2745 = vmatprep.subr.mxu0 0.0
        %2746 = vmatpush1.msra.mxu0 %v2708
        %2747 = vmatprep.subr.mxu0 0.0
        %2748 = vmatpush2.msra.mxu0 0.0
        %2749 = vmatprep.subr.mxu0 0.0
        %2750 = vmatpush2.msra.mxu0 0.0
        %2751 = vmatprep.subr.mxu0 0.0
        %2752 = vmatpush2.msra.mxu0 0.0
        %2753 = vmatprep.subr.mxu0 0.0
        %2754 = vmatpush2.msra.mxu0 0.0
        %2755 = vmatprep.subr.mxu0 0.0
        %2756 = vmatpush2.msra.mxu0 0.0
        %2757 = vmatprep.subr.mxu0 0.0
        %2758 = vmatpush2.msra.mxu0 0.0
        %2759 = vmatprep.subr.mxu0 0.0
        %2760 = vmatpush2.msra.mxu0 0.0
        %2761 = vmatprep.subr.mxu0 0.0
        %2762 = vmatpush2.msra.mxu0 0.0
        %2763 = vmatprep.subr.mxu0 0.0
        %2764 = vmatpush2.msra.mxu0 0.0
        %2765 = vmatprep.subr.mxu0 0.0
        %2766 = vmatpush2.msra.mxu0 0.0
        %2767 = vmatprep.subr.mxu0 0.0
        %2768 = vmatpush2.msra.mxu0 0.0
        %2769 = vmatprep.subr.mxu0 0.0
        %2770 = vmatpush2.msra.mxu0 0.0
        %2771 = vmatprep.subr.mxu0 0.0
        %2772 = vmatpush2.msra.mxu0 0.0
        %2773 = vmatprep.subr.mxu0 0.0
        %2774 = vmatpush2.msra.mxu0 0.0
        %2775 = vmatprep.subr.mxu0 0.0
        %2776 = vmatpush2.msra.mxu0 0.0
        %2777 = vmatprep.subr.mxu0 0.0
        %2778 = vmatpush2.msra.mxu0 0.0
        %2779 = vmatprep.mubr.f32.mxu0 0.0
        %2780 = vmatmul.mubr.f32.gmra.mxu0 %v2710
        %v2781 = vpop.f32.mrf.mxu0
        %v2782 = vadd.f32 0.0, %v2781
        %v2783 = vpop.f32.mrf.mxu0
        %2784 = vmatprep.mubr.f32.mxu0 0.0
        %2785 = vmatmul.mubr.f32.gmra.mxu0 %v2713
        %v2786 = vpop.f32.mrf.mxu0
        %v2787 = vadd.f32 0.0, %v2786
        %v2788 = vpop.f32.mrf.mxu0
        %2789 = vdwg.mxu0
        %v2790 = vadd.f32 %v2376, %v2782
        %v2791 = vadd.f32 %v2377, %v2787
        %v2792 = vld [vmem:[%s792] sm:$0x1]
        %v2794 = vlaneseq
        %v2795 = vshrl.u32 %v2794, 7
        %v2796 = vsub.s32 0, %v2795
        %v2797 = vrot.slane %v2792, %v2796
        %v2799 = vadd.f32 %v2790, %v2797
        %v2800 = vadd.f32 %v2791, %v2797
        %v2801 = vadd.f32 %v2799, %v803
        %v2802 = vadd.f32 %v2800, %v804
        %v2803 = vsel %vm811, %v2801, 0.0
        %2804 = vadd.xlane.f32.xlu0 %v2803
        %v2805 = vpop.xlane.xlu0 %2804
        %v2806 = vsel %vm811, %v2802, 0.0
        %2807 = vadd.xlane.f32.xlu0 %v2806
        %v2808 = vpop.xlane.xlu0 %2807
        %v2809 = vmul.f32 %v2805, %v818
        %v2810 = vmul.f32 %v2808, %v818
        %v2811 = vsub.f32 %v2801, %v2809
        %v2812 = vsub.f32 %v2802, %v2810
        %v2813 = vmul.f32 %v2811, %v2811
        %v2814 = vmul.f32 %v2812, %v2812
        %v2815 = vsel %vm811, %v2813, 0.0
        %2816 = vadd.xlane.f32.xlu0 %v2815
        %v2817 = vpop.xlane.xlu0 %2816
        %v2818 = vsel %vm811, %v2814, 0.0
        %2819 = vadd.xlane.f32.xlu0 %v2818
        %v2820 = vpop.xlane.xlu0 %2819
        %v2821 = vmul.f32 %v2817, %v818
        %v2822 = vmul.f32 %v2820, %v818
        %v2823 = vadd.f32 %v2821, 1e-05
        %v2824 = vadd.f32 %v2822, 1e-05
        %v2825 = vrsqrt.pop %v2823
        %v2826 = vrsqrt.pop %v2824
        %v2827 = vmul.f32 %v2811, %v2825
        %v2828 = vmul.f32 %v2812, %v2826
        %v2829 = vmul.f32 %v2827, %v843
        %v2830 = vmul.f32 %v2828, %v843
        %v2831 = vadd.f32 %v2829, %v851
        %v2832 = vadd.f32 %v2830, %v851
        %v2833 = vmul.f32 %v860, %v2831
        %v2834 = vmul.f32 %v864, %v2832
        %v2835 = vadd.f32 %v2833, %v874
        %v2836 = vadd.f32 %v2834, %v878
        %v2837 = vadd.f32 %v2835, %v2801
        %v2838 = vadd.f32 %v2836, %v2802
        %2839 = vst.msk [vmem:[#allocation16] sm:$0xff] %vm811, %v2837
        %2840 = vst.msk [vmem:[#allocation16 + $0x8] sm:$0xff] %vm811, %v2838
        // Predicated region
        $region109: #{tpu_custom_call.1} parent=71 // pred_check
          %p2841 = pneg %p410
        $region110: #{tpu_custom_call.1} parent=71 // pred_check_branch
          %2843 = sbr.rel (%p2841) target = $region112
        $region111: #{tpu_custom_call.1} parent=71 // pred_region
          %s2844 = smul.u32 2, %s42
          %s2846 = ssub.s32 256, 256
          %2847 = vsyncadd [#allocation4], %s2846
          %s2848 = smul.addr %s2844, 128
          %s2849 = scalar_lea.hbm %s13, %s2848
          %s2850 = sshll.u32 [#allocation16], 4
          %s2851 = int_to_ptr.vmem [resolvable:$true] %s2850
          %2856 = dma.vmem_to_hbm [thread:$0]  %s2851, 256, %s2849, [#allocation4], 128, 128, 8
        $region112: #{tpu_custom_call.1} parent=71 // pred_fallthru
          _
        // Predicated region
        $region113: #{tpu_custom_call.1} parent=71 // pred_check
          %p2857 = pneg %p410
        $region114: #{tpu_custom_call.1} parent=71 // pred_check_branch
          %2859 = sbr.rel (%p2857) target = $region116
        $region115: #{tpu_custom_call.1} parent=71 // pred_region
          %2860 = dma.done [#allocation4], 256
        $region116: #{tpu_custom_call.1} parent=71 // pred_fallthru
          _
      $region72: #{tpu_custom_call.1} parent=5 // pred_fallthru
        _
      %p2861 = scmp.le.s32.totalorder 2, %s33
      // Predicated region
      $region117: #{tpu_custom_call.1} parent=5 // pred_check
        %p2862 = pneg %p2861
      $region118: #{tpu_custom_call.1} parent=5 // pred_check_branch
        %2864 = sbr.rel (%p2862) target = $region120
      $region119: #{tpu_custom_call.1} parent=5 // pred_region
        %s2865 = ssub.s32 %s33, 2
      $region120: #{tpu_custom_call.1} parent=5 // pred_fallthru
        _
    $region6: #{tpu_custom_call.1} parent=1 // loop_footer
      %s37 = sadd.s32 1, %s33
    $region7: #{tpu_custom_call.1} parent=1 // loop_footer_branch
      %32 = sbr.rel target = $region3
    $region8: #{tpu_custom_call.1} parent=1 // loop_exit
      _
    %2866 = vsyncpa [#allocation3], 1
    %s2867 = scalar_lea.sflag [#allocation3], 1
    %2868 = vsyncpa %s2867, 1
    %2869 = vsyncpa [#allocation6], 1
    %s2870 = scalar_lea.sflag [#allocation6], 1
    %2871 = vsyncpa %s2870, 1
    %2872 = vsyncpa [#allocation9], 1
    %s2873 = scalar_lea.sflag [#allocation9], 1
    %2874 = vsyncpa %s2873, 1
    %2875 = vsyncpa [#allocation12], 1
    %s2876 = scalar_lea.sflag [#allocation12], 1
    %2877 = vsyncpa %s2876, 1
    %2878 = vsyncpa [#allocation15], 1
    %s2879 = scalar_lea.sflag [#allocation15], 1
    %2880 = vsyncpa %s2879, 1
    %2881 = vsyncpa [#allocation4], 1
    %s2882 = scalar_lea.sflag [#allocation4], 1
    %2883 = vsyncpa %s2882, 1

</llo_original>
